<compile_context>
chip_gen: v6e
topology: v6e:2x2x1
jax: 0.10.0
libtpu: 0.0.40
codegen_flags: <defaults>
</compile_context>

<pallas_src>
import math

import numpy as np
import jax
import jax.numpy as jnp
from jax.experimental import pallas as pl
from jax.experimental.pallas import tpu as pltpu


# ---------------------------------------------------------------------------
# Architecture of BasicRFB_a (every conv has stride 1 in this configuration).
#   k = (kh, kw), pad = (ph, pw), dil = (dh, dw)
# ---------------------------------------------------------------------------
_RFB_A_CONVS = {
    'b0_0': dict(k=(1, 1), pad=(0, 0), dil=(1, 1), relu=True),
    'b0_1': dict(k=(3, 3), pad=(1, 1), dil=(1, 1), relu=False),
    'b1_0': dict(k=(1, 1), pad=(0, 0), dil=(1, 1), relu=True),
    'b1_1': dict(k=(3, 1), pad=(1, 0), dil=(1, 1), relu=True),
    'b1_2': dict(k=(3, 3), pad=(3, 3), dil=(3, 3), relu=False),
    'b2_0': dict(k=(1, 1), pad=(0, 0), dil=(1, 1), relu=True),
    'b2_1': dict(k=(1, 3), pad=(0, 1), dil=(1, 1), relu=True),
    'b2_2': dict(k=(3, 3), pad=(3, 3), dil=(3, 3), relu=False),
    'b3_0': dict(k=(1, 1), pad=(0, 0), dil=(1, 1), relu=True),
    'b3_1': dict(k=(1, 3), pad=(0, 1), dil=(1, 1), relu=True),
    'b3_2': dict(k=(3, 1), pad=(1, 0), dil=(1, 1), relu=True),
    'b3_3': dict(k=(3, 3), pad=(5, 5), dil=(5, 5), relu=False),
    'lin':  dict(k=(1, 1), pad=(0, 0), dil=(1, 1), relu=False),
    'short': dict(k=(1, 1), pad=(0, 0), dil=(1, 1), relu=False),
}
_BRANCH_CHAINS = [['b0_0', 'b0_1'],
                  ['b1_0', 'b1_1', 'b1_2'],
                  ['b2_0', 'b2_1', 'b2_2'],
                  ['b3_0', 'b3_1', 'b3_2', 'b3_3']]

# Height-tap row offsets that appear in this block (dilation 1 / 3 / 5).
_MASK_OFFSETS = (-5, -3, -1, 1, 3, 5)


# ---------------------------------------------------------------------------
# Fused Pallas kernel: whole BasicRFB_a block for B_blk batch images.
# ---------------------------------------------------------------------------
def _rfb_a_kernel(x_ref, masks_ref,
                  w00, b00, w01, b01,
                  w10, b10, w11, b11, w12, b12,
                  w20, b20, w21, b21, w22, b22,
                  w30, b30, w31, b31, w32, b32, w33, b33,
                  wl0, wl1, wl2, wl3, bl,
                  wsc, bsc,
                  o_ref):
    f32 = jnp.float32
    x2d = x_ref[...]          # (M, W*Cin) f32, M = B_blk*H, batch-major rows
    M = x2d.shape[0]

    def conv(x, w_ref, b_ref, dh, relu):
        # w_ref: (kh, W*cin_pad, W*cout_pad) banded matrices — width taps,
        # width zero-pad, width dilation, channel padding and BN scale are
        # folded ONCE on the host.  Height "same" padding is an XLU sublane
        # roll + precomputed row mask (no VMEM pad-copy, no odd-offset
        # slices); the mask also zeroes rows that would cross image
        # boundaries introduced by batch packing.
        kh = w_ref.shape[0]
        ph = (kh - 1) * dh // 2
        wdt = w_ref.dtype
        acc = None
        for i in range(kh):
            o = i * dh - ph
            if o == 0:
                xt = x
            else:
                xt = (pltpu.roll(x, shift=(-o) % M, axis=0)
                      * masks_ref[_MASK_OFFSETS.index(o)])
            d = jnp.dot(xt.astype(wdt), w_ref[i], preferred_element_type=f32)
            acc = d if acc is None else acc + d
        acc = acc + b_ref[...]          # folded BN shift (kept in f32)
        return jnp.maximum(acc, 0.0) if relu else acc

    # branch0: 1x1 -> 3x3 pad1
    br0 = conv(conv(x2d, w00, b00, 1, True), w01, b01, 1, False)
    # branch1: 1x1 -> (3,1) pad(1,0) -> 3x3 pad3 dil3
    t = conv(x2d, w10, b10, 1, True)
    t = conv(t, w11, b11, 1, True)
    br1 = conv(t, w12, b12, 3, False)
    # branch2: 1x1 -> (1,3) pad(0,1) -> 3x3 pad3 dil3
    t = conv(x2d, w20, b20, 1, True)
    t = conv(t, w21, b21, 1, True)
    br2 = conv(t, w22, b22, 3, False)
    # branch3: 1x1 -> (1,3) pad(0,1) -> (3,1) pad(1,0) -> 3x3 pad5 dil5
    t = conv(x2d, w30, b30, 1, True)
    t = conv(t, w31, b31, 1, True)
    t = conv(t, w32, b32, 1, True)
    br3 = conv(t, w33, b33, 5, False)

    # Tail: ConvLinear over the channel concat == sum of per-branch 1x1
    # partial matmuls (residual scale + BN already folded into wl*/bl, so the
    # bf16 error on this path is damped by 0.1), plus the f32 shortcut,
    # then ReLU.  No concat / shortcut / fuse kernels are materialized.
    ldt = wl0.dtype
    net = jnp.dot(br0.astype(ldt), wl0[0], preferred_element_type=f32)
    net = net + jnp.dot(br1.astype(ldt), wl1[0], preferred_element_type=f32)
    net = net + jnp.dot(br2.astype(ldt), wl2[0], preferred_element_type=f32)
    net = net + jnp.dot(br3.astype(ldt), wl3[0], preferred_element_type=f32)
    net = net + bl[...]
    short = conv(x2d, wsc, bsc, 1, False)   # f32 weights: full-strength residual
    o_ref[...] = jnp.maximum(net + short, 0.0)


# ---------------------------------------------------------------------------
# Host-side weight packing (done once, outside the kernel).
# ---------------------------------------------------------------------------
def _lane_pad(c, width):
    """Smallest c' >= c such that width*c' is a multiple of 128 (lane-dense)."""
    g = 128 // math.gcd(width, 128)
    return -(-c // g) * g


def _banded_weight(w, pw, dw, width):
    """Fold the kw width taps (+ width zero padding + dilation) of a conv
    weight (kh, kw, cin, cout) into kh banded matrices acting on the packed
    (rows, width*cin) layout."""
    kh, kw_, cin, cout = w.shape
    wm = np.zeros((kh, width * cin, width * cout), np.float32)
    for i in range(kh):
        for j in range(kw_):
            for x in range(width):
                xi = x - pw + j * dw
                if 0 <= xi < width:
                    wm[i, xi * cin:(xi + 1) * cin,
                       x * cout:(x + 1) * cout] += w[i, j]
    return wm


def _pack_conv(p, cfg, width, cin_pad, cout_pad, wdtype):
    """Fold eval-mode BatchNorm into the conv weights / bias, zero-pad the
    channels to a lane-dense width, and band-pack."""
    w = np.asarray(p['w'], np.float32)
    kh, kw_, cin, cout = w.shape
    scale = np.asarray(p['bn_scale'], np.float32)
    shift = np.asarray(p['bn_shift'], np.float32)
    wf = np.zeros((kh, kw_, cin_pad, cout_pad), np.float32)
    wf[:, :, :cin, :cout] = w * scale[None, None, None, :]
    wm = _banded_weight(wf, cfg['pad'][1], cfg['dil'][1], width)
    bias = np.zeros((cout_pad,), np.float32)
    bias[:cout] = shift
    bias = np.tile(bias, width)[None, :]            # (1, width*cout_pad)
    return jnp.asarray(wm, wdtype), jnp.asarray(bias, jnp.float32)


def _pack_lin(p, width, branch_pads, res_scale, wdtype):
    """ConvLinear packed as 4 per-branch partial 1x1 matmuls; the block's
    residual scale and the BN fold are burnt into the weights / bias."""
    w = np.asarray(p['w'], np.float32)               # (1, 1, 4*inter, cout)
    cout = w.shape[-1]
    inter = w.shape[2] // 4
    scale = np.asarray(p['bn_scale'], np.float32) * res_scale
    shift = np.asarray(p['bn_shift'], np.float32) * res_scale
    wf = w * scale[None, None, None, :]
    parts = []
    for k, cpad in enumerate(branch_pads):
        chunk = np.zeros((1, 1, cpad, cout), np.float32)
        chunk[:, :, :inter, :] = wf[:, :, k * inter:(k + 1) * inter, :]
        parts.append(jnp.asarray(_banded_weight(chunk, 0, 1, width), wdtype))
    bias = jnp.asarray(np.tile(shift, width)[None, :], jnp.float32)
    return parts, bias


def _pack_operands(params, width, res_scale, wdtype):
    ops = []
    branch_out_pads = []
    for chain in _BRANCH_CHAINS:
        cin_pad = int(params[chain[0]]['w'].shape[2])   # x itself is not padded
        for name in chain:
            cout = int(params[name]['w'].shape[3])
            cout_pad = _lane_pad(cout, width)
            wm, bias = _pack_conv(params[name], _RFB_A_CONVS[name], width,
                                  cin_pad, cout_pad, wdtype)
            ops += [wm, bias]
            cin_pad = cout_pad
        branch_out_pads.append(cin_pad)
    lin_parts, lin_bias = _pack_lin(params['lin'], width, branch_out_pads,
                                    res_scale, wdtype)
    ops += lin_parts + [lin_bias]
    # shortcut kept in f32 (its contribution is not damped by the 0.1 scale)
    wsc, bsc = _pack_conv(params['short'], _RFB_A_CONVS['short'], width,
                          int(params['short']['w'].shape[2]),
                          int(params['short']['w'].shape[3]), jnp.float32)
    ops += [wsc, bsc]
    return ops


def _make_masks(b_blk, h):
    """Row-validity masks, one per height-tap offset: zero outside the 'same'
    padding range AND across image boundaries of the batch-packed rows."""
    m = b_blk * h
    hs = np.arange(m) % h
    rows = [(((hs + o) >= 0) & ((hs + o) < h)).astype(np.float32)
            for o in _MASK_OFFSETS]
    return jnp.asarray(np.stack(rows)[:, :, None])   # (n_offsets, M, 1)


def _pick_batch_block(n, h, target_rows=256):
    """Largest divisor of n whose block has <= target_rows rows (fatten M)."""
    # TODO(synk): on v7x keep >= 2 'parallel' grid steps (2 TensorCores) once
    # n*h is large enough; at toy sizes M-fattening wins.
    best = 1
    for d in range(1, n + 1):
        if n % d == 0 and d * h <= max(target_rows, h):
            best = d
    return best


# ---------------------------------------------------------------------------
# Wrapper
# ---------------------------------------------------------------------------
def basic_rfb_a(x_nchw, params, scale=0.1):
    """BasicRFB_a forward (eval-mode BN), NCHW in / NCHW out."""
    n, c, h, w = x_nchw.shape
    cout = int(params['short']['w'].shape[-1])
    b_blk = _pick_batch_block(n, h)
    grid_n = n // b_blk
    m_rows = b_blk * h

    # NCHW -> batch-major packed lane-dense (N*H, W*C)
    x_pk = (jnp.transpose(x_nchw, (0, 2, 3, 1))
            .reshape(n * h, w * c).astype(jnp.float32))
    masks = _make_masks(b_blk, h)
    operands = _pack_operands(params, w, scale, jnp.bfloat16)

    # Grid-invariant operands: whole-array VMEM residency, not pipelined
    # (no pointless double-buffering of ~constant weights).
    const_specs = [pl.BlockSpec(memory_space=pltpu.MemorySpace.VMEM)
                   for _ in range(1 + len(operands))]     # masks + weights

    est_bytes = (sum(int(np.prod(a.shape)) * a.dtype.itemsize for a in operands)
                 + int(np.prod(masks.shape)) * 4
                 + 2 * (m_rows * w * c * 4 + m_rows * w * cout * 4)
                 + 16 * m_rows * w * max(c, cout) * 4)     # activation slack
    vmem_limit = int(min(64 * 1024 * 1024, max(32 * 1024 * 1024, 2 * est_bytes)))

    out = pl.pallas_call(
        _rfb_a_kernel,
        out_shape=jax.ShapeDtypeStruct((n * h, w * cout), jnp.float32),
        grid=(grid_n,),
        in_specs=([pl.BlockSpec((m_rows, w * c), lambda b: (b, 0))]
                  + const_specs),
        out_specs=pl.BlockSpec((m_rows, w * cout), lambda b: (b, 0)),
        compiler_params=pltpu.CompilerParams(
            dimension_semantics=("parallel",),
            vmem_limit_bytes=vmem_limit),
    )(x_pk, masks, *operands)
    return jnp.transpose(out.reshape(n, h, w, cout), (0, 3, 1, 2))


# ---------------------------------------------------------------------------
# Deterministic synthetic parameters
# ---------------------------------------------------------------------------
def _make_conv_params(key, ci, co, kh, kw):
    kw1, kg, kb, km, kv = jax.random.split(key, 5)
    fan_in = ci * kh * kw
    w = jax.random.normal(kw1, (kh, kw, ci, co), jnp.float32) * (fan_in ** -0.5)
    gamma = 1.0 + 0.1 * jax.random.normal(kg, (co,), jnp.float32)
    beta = 0.1 * jax.random.normal(kb, (co,), jnp.float32)
    mean = 0.05 * jax.random.normal(km, (co,), jnp.float32)
    var = 1.0 + 0.1 * jnp.abs(jax.random.normal(kv, (co,), jnp.float32))
    scale = gamma / jnp.sqrt(var + 1e-5)          # BN eps = 1e-5, eval mode
    shift = beta - mean * scale
    return dict(w=w, bn_scale=scale, bn_shift=shift)


def init_rfb_params(key, in_channels, out_channels):
    inter = in_channels // 4
    specs = {
        'b0_0': (in_channels, inter, 1, 1),
        'b0_1': (inter, inter, 3, 3),
        'b1_0': (in_channels, inter, 1, 1),
        'b1_1': (inter, inter, 3, 1),
        'b1_2': (inter, inter, 3, 3),
        'b2_0': (in_channels, inter, 1, 1),
        'b2_1': (inter, inter, 1, 3),
        'b2_2': (inter, inter, 3, 3),
        'b3_0': (in_channels, inter // 2, 1, 1),
        'b3_1': (inter // 2, inter // 4 * 3, 1, 3),
        'b3_2': (inter // 4 * 3, inter, 3, 1),
        'b3_3': (inter, inter, 3, 3),
        'lin':  (4 * inter, out_channels, 1, 1),
        'short': (in_channels, out_channels, 1, 1),
    }
    keys = jax.random.split(key, len(specs))
    return {name: _make_conv_params(k, *cfg)
            for k, (name, cfg) in zip(keys, specs.items())}


# ---------------------------------------------------------------------------
# Pure-JAX reference (XLA convs) for a numerical self-check
# ---------------------------------------------------------------------------
def _conv_bn_ref(x, p, cfg, relu):
    y = jax.lax.conv_general_dilated(
        x, p['w'], window_strides=(1, 1),
        padding=[(cfg['pad'][0], cfg['pad'][0]),
                 (cfg['pad'][1], cfg['pad'][1])],
        rhs_dilation=cfg['dil'],
        dimension_numbers=('NHWC', 'HWIO', 'NHWC'),
        precision=jax.lax.Precision.HIGHEST)
    y = y * p['bn_scale'] + p['bn_shift']
    return jnp.maximum(y, 0.0) if relu else y


def basic_rfb_a_reference(x_nchw, params, scale=0.1):
    c = _RFB_A_CONVS
    x = jnp.transpose(x_nchw, (0, 2, 3, 1)).astype(jnp.float32)
    b0 = _conv_bn_ref(x, params['b0_0'], c['b0_0'], True)
    b0 = _conv_bn_ref(b0, params['b0_1'], c['b0_1'], False)
    b1 = _conv_bn_ref(x, params['b1_0'], c['b1_0'], True)
    b1 = _conv_bn_ref(b1, params['b1_1'], c['b1_1'], True)
    b1 = _conv_bn_ref(b1, params['b1_2'], c['b1_2'], False)
    b2 = _conv_bn_ref(x, params['b2_0'], c['b2_0'], True)
    b2 = _conv_bn_ref(b2, params['b2_1'], c['b2_1'], True)
    b2 = _conv_bn_ref(b2, params['b2_2'], c['b2_2'], False)
    b3 = _conv_bn_ref(x, params['b3_0'], c['b3_0'], True)
    b3 = _conv_bn_ref(b3, params['b3_1'], c['b3_1'], True)
    b3 = _conv_bn_ref(b3, params['b3_2'], c['b3_2'], True)
    b3 = _conv_bn_ref(b3, params['b3_3'], c['b3_3'], False)
    net = jnp.concatenate([b0, b1, b2, b3], axis=-1)
    net = _conv_bn_ref(net, params['lin'], c['lin'], False)
    short = _conv_bn_ref(x, params['short'], c['short'], False)
    out = jnp.maximum(net * scale + short, 0.0)
    return jnp.transpose(out, (0, 3, 1, 2))


if __name__ == "__main__":
    key = jax.random.PRNGKey(0)
    k_params, k_x = jax.random.split(key)

    in_channels, out_channels = 16, 16   # inter=4, inter//2=2, inter//4*3=3
    batch, H, W = 2, 16, 16

    x = jax.random.normal(k_x, (batch, in_channels, H, W), jnp.float32)  # NCHW
    params = init_rfb_params(k_params, in_channels, out_channels)

    out = jax.block_until_ready(basic_rfb_a(x, params, scale=0.1))
    assert out.shape == (batch, out_channels, H, W)

    # numerical self-check against the pure-JAX (f32 HIGHEST) reference.
    # Tolerance documents bf16 MXU feeds on the 0.1-scaled branch path; the
    # shortcut path stays in f32.
    ref = jax.block_until_ready(basic_rfb_a_reference(x, params, scale=0.1))
    err = float(jnp.max(jnp.abs(out - ref)))
    assert err < 5e-2, f"mismatch vs reference: max abs err = {err}"

    print("KERNEL_OK")
</pallas_src>

<mosaic_0001>
module attributes {stable_mosaic.version = 11 : i64} {
  func.func @_rfb_a_kernel(%arg0: i32, %arg1: memref<32x256xf32, #tpu.memory_space<vmem>>, %arg2: memref<6x32x1xf32, #tpu.memory_space<vmem>>, %arg3: memref<1x256x128xbf16, #tpu.memory_space<vmem>>, %arg4: memref<1x128xf32, #tpu.memory_space<vmem>>, %arg5: memref<3x128x128xbf16, #tpu.memory_space<vmem>>, %arg6: memref<1x128xf32, #tpu.memory_space<vmem>>, %arg7: memref<1x256x128xbf16, #tpu.memory_space<vmem>>, %arg8: memref<1x128xf32, #tpu.memory_space<vmem>>, %arg9: memref<3x128x128xbf16, #tpu.memory_space<vmem>>, %arg10: memref<1x128xf32, #tpu.memory_space<vmem>>, %arg11: memref<3x128x128xbf16, #tpu.memory_space<vmem>>, %arg12: memref<1x128xf32, #tpu.memory_space<vmem>>, %arg13: memref<1x256x128xbf16, #tpu.memory_space<vmem>>, %arg14: memref<1x128xf32, #tpu.memory_space<vmem>>, %arg15: memref<1x128x128xbf16, #tpu.memory_space<vmem>>, %arg16: memref<1x128xf32, #tpu.memory_space<vmem>>, %arg17: memref<3x128x128xbf16, #tpu.memory_space<vmem>>, %arg18: memref<1x128xf32, #tpu.memory_space<vmem>>, %arg19: memref<1x256x128xbf16, #tpu.memory_space<vmem>>, %arg20: memref<1x128xf32, #tpu.memory_space<vmem>>, %arg21: memref<1x128x128xbf16, #tpu.memory_space<vmem>>, %arg22: memref<1x128xf32, #tpu.memory_space<vmem>>, %arg23: memref<3x128x128xbf16, #tpu.memory_space<vmem>>, %arg24: memref<1x128xf32, #tpu.memory_space<vmem>>, %arg25: memref<3x128x128xbf16, #tpu.memory_space<vmem>>, %arg26: memref<1x128xf32, #tpu.memory_space<vmem>>, %arg27: memref<1x128x256xbf16, #tpu.memory_space<vmem>>, %arg28: memref<1x128x256xbf16, #tpu.memory_space<vmem>>, %arg29: memref<1x128x256xbf16, #tpu.memory_space<vmem>>, %arg30: memref<1x128x256xbf16, #tpu.memory_space<vmem>>, %arg31: memref<1x256xf32, #tpu.memory_space<vmem>>, %arg32: memref<1x256x256xf32, #tpu.memory_space<vmem>>, %arg33: memref<1x256xf32, #tpu.memory_space<vmem>>, %arg34: memref<32x256xf32, #tpu.memory_space<vmem>>) attributes {dimension_semantics = [#tpu.dimension_semantics<parallel>], iteration_bounds = array<i64: 1>, scalar_prefetch = 0 : i64, scratch_operands = 0 : i64, tpu.core_type = #tpu.core_type<tc>, window_params = [{transform_indices = @transform_0, window_bounds = array<i64: 32, 256>}, {pipeline_mode = #tpu.pipeline_mode<synchronous>, transform_indices = @transform_1, window_bounds = array<i64: 6, 32, 1>}, {pipeline_mode = #tpu.pipeline_mode<synchronous>, transform_indices = @transform_2, window_bounds = array<i64: 1, 256, 128>}, {pipeline_mode = #tpu.pipeline_mode<synchronous>, transform_indices = @transform_3, window_bounds = array<i64: 1, 128>}, {pipeline_mode = #tpu.pipeline_mode<synchronous>, transform_indices = @transform_4, window_bounds = array<i64: 3, 128, 128>}, {pipeline_mode = #tpu.pipeline_mode<synchronous>, transform_indices = @transform_5, window_bounds = array<i64: 1, 128>}, {pipeline_mode = #tpu.pipeline_mode<synchronous>, transform_indices = @transform_6, window_bounds = array<i64: 1, 256, 128>}, {pipeline_mode = #tpu.pipeline_mode<synchronous>, transform_indices = @transform_7, window_bounds = array<i64: 1, 128>}, {pipeline_mode = #tpu.pipeline_mode<synchronous>, transform_indices = @transform_8, window_bounds = array<i64: 3, 128, 128>}, {pipeline_mode = #tpu.pipeline_mode<synchronous>, transform_indices = @transform_9, window_bounds = array<i64: 1, 128>}, {pipeline_mode = #tpu.pipeline_mode<synchronous>, transform_indices = @transform_10, window_bounds = array<i64: 3, 128, 128>}, {pipeline_mode = #tpu.pipeline_mode<synchronous>, transform_indices = @transform_11, window_bounds = array<i64: 1, 128>}, {pipeline_mode = #tpu.pipeline_mode<synchronous>, transform_indices = @transform_12, window_bounds = array<i64: 1, 256, 128>}, {pipeline_mode = #tpu.pipeline_mode<synchronous>, transform_indices = @transform_13, window_bounds = array<i64: 1, 128>}, {pipeline_mode = #tpu.pipeline_mode<synchronous>, transform_indices = @transform_14, window_bounds = array<i64: 1, 128, 128>}, {pipeline_mode = #tpu.pipeline_mode<synchronous>, transform_indices = @transform_15, window_bounds = array<i64: 1, 128>}, {pipeline_mode = #tpu.pipeline_mode<synchronous>, transform_indices = @transform_16, window_bounds = array<i64: 3, 128, 128>}, {pipeline_mode = #tpu.pipeline_mode<synchronous>, transform_indices = @transform_17, window_bounds = array<i64: 1, 128>}, {pipeline_mode = #tpu.pipeline_mode<synchronous>, transform_indices = @transform_18, window_bounds = array<i64: 1, 256, 128>}, {pipeline_mode = #tpu.pipeline_mode<synchronous>, transform_indices = @transform_19, window_bounds = array<i64: 1, 128>}, {pipeline_mode = #tpu.pipeline_mode<synchronous>, transform_indices = @transform_20, window_bounds = array<i64: 1, 128, 128>}, {pipeline_mode = #tpu.pipeline_mode<synchronous>, transform_indices = @transform_21, window_bounds = array<i64: 1, 128>}, {pipeline_mode = #tpu.pipeline_mode<synchronous>, transform_indices = @transform_22, window_bounds = array<i64: 3, 128, 128>}, {pipeline_mode = #tpu.pipeline_mode<synchronous>, transform_indices = @transform_23, window_bounds = array<i64: 1, 128>}, {pipeline_mode = #tpu.pipeline_mode<synchronous>, transform_indices = @transform_24, window_bounds = array<i64: 3, 128, 128>}, {pipeline_mode = #tpu.pipeline_mode<synchronous>, transform_indices = @transform_25, window_bounds = array<i64: 1, 128>}, {pipeline_mode = #tpu.pipeline_mode<synchronous>, transform_indices = @transform_26, window_bounds = array<i64: 1, 128, 256>}, {pipeline_mode = #tpu.pipeline_mode<synchronous>, transform_indices = @transform_27, window_bounds = array<i64: 1, 128, 256>}, {pipeline_mode = #tpu.pipeline_mode<synchronous>, transform_indices = @transform_28, window_bounds = array<i64: 1, 128, 256>}, {pipeline_mode = #tpu.pipeline_mode<synchronous>, transform_indices = @transform_29, window_bounds = array<i64: 1, 128, 256>}, {pipeline_mode = #tpu.pipeline_mode<synchronous>, transform_indices = @transform_30, window_bounds = array<i64: 1, 256>}, {pipeline_mode = #tpu.pipeline_mode<synchronous>, transform_indices = @transform_31, window_bounds = array<i64: 1, 256, 256>}, {pipeline_mode = #tpu.pipeline_mode<synchronous>, transform_indices = @transform_32, window_bounds = array<i64: 1, 256>}, {transform_indices = @transform_33, window_bounds = array<i64: 32, 256>}]} {
    %c0 = arith.constant 0 : index
    %c0_0 = arith.constant 0 : index
    %0 = vector.load %arg1[%c0, %c0_0] : memref<32x256xf32, #tpu.memory_space<vmem>>, vector<32x256xf32>
    %1 = arith.truncf %0 : vector<32x256xf32> to vector<32x256xbf16>
    %c0_1 = arith.constant 0 : index
    %c0_2 = arith.constant 0 : index
    %c0_3 = arith.constant 0 : index
    %2 = vector.load %arg3[%c0_1, %c0_2, %c0_3] : memref<1x256x128xbf16, #tpu.memory_space<vmem>>, vector<1x256x128xbf16>
    %3 = vector.shape_cast %2 : vector<1x256x128xbf16> to vector<256x128xbf16>
    %cst = arith.constant dense<0.000000e+00> : vector<32x128xf32>
    %4 = tpu.matmul %1, %3, %cst {dimension_numbers = #tpu.dot_dimension_numbers<[1], [0], [0], [1], [0, 0, 1, 1], [], []>} : vector<32x256xbf16>, vector<256x128xbf16>, vector<32x128xf32> -> vector<32x128xf32>
    %c0_4 = arith.constant 0 : index
    %c0_5 = arith.constant 0 : index
    %5 = vector.load %arg4[%c0_4, %c0_5] : memref<1x128xf32, #tpu.memory_space<vmem>>, vector<1x128xf32>
    %6 = vector.broadcast %5 : vector<1x128xf32> to vector<32x128xf32>
    %7 = arith.addf %4, %6 : vector<32x128xf32>
    %cst_6 = arith.constant 0.000000e+00 : f32
    %8 = vector.broadcast %cst_6 : f32 to vector<32x128xf32>
    %9 = arith.maximumf %7, %8 : vector<32x128xf32>
    %c1_i32 = arith.constant 1 : i32
    %10 = tpu.dynamic_rotate %9 by %c1_i32 dim 0 : vector<32x128xf32>, i32 -> vector<32x128xf32>
    %c2 = arith.constant 2 : index
    %c0_7 = arith.constant 0 : index
    %c0_8 = arith.constant 0 : index
    %11 = vector.load %arg2[%c2, %c0_7, %c0_8] : memref<6x32x1xf32, #tpu.memory_space<vmem>>, vector<1x32x1xf32>
    %12 = vector.shape_cast %11 : vector<1x32x1xf32> to vector<32x1xf32>
    %13 = vector.broadcast %12 : vector<32x1xf32> to vector<32x128xf32>
    %14 = arith.mulf %10, %13 : vector<32x128xf32>
    %15 = arith.truncf %14 : vector<32x128xf32> to vector<32x128xbf16>
    %c0_9 = arith.constant 0 : index
    %c0_10 = arith.constant 0 : index
    %c0_11 = arith.constant 0 : index
    %16 = vector.load %arg5[%c0_9, %c0_10, %c0_11] : memref<3x128x128xbf16, #tpu.memory_space<vmem>>, vector<1x128x128xbf16>
    %17 = vector.shape_cast %16 : vector<1x128x128xbf16> to vector<128x128xbf16>
    %cst_12 = arith.constant dense<0.000000e+00> : vector<32x128xf32>
    %18 = tpu.matmul %15, %17, %cst_12 {dimension_numbers = #tpu.dot_dimension_numbers<[1], [0], [0], [1], [0, 0, 1, 1], [], []>} : vector<32x128xbf16>, vector<128x128xbf16>, vector<32x128xf32> -> vector<32x128xf32>
    %19 = arith.truncf %9 : vector<32x128xf32> to vector<32x128xbf16>
    %c1 = arith.constant 1 : index
    %c0_13 = arith.constant 0 : index
    %c0_14 = arith.constant 0 : index
    %20 = vector.load %arg5[%c1, %c0_13, %c0_14] : memref<3x128x128xbf16, #tpu.memory_space<vmem>>, vector<1x128x128xbf16>
    %21 = vector.shape_cast %20 : vector<1x128x128xbf16> to vector<128x128xbf16>
    %cst_15 = arith.constant dense<0.000000e+00> : vector<32x128xf32>
    %22 = tpu.matmul %19, %21, %cst_15 {dimension_numbers = #tpu.dot_dimension_numbers<[1], [0], [0], [1], [0, 0, 1, 1], [], []>} : vector<32x128xbf16>, vector<128x128xbf16>, vector<32x128xf32> -> vector<32x128xf32>
    %23 = arith.addf %18, %22 : vector<32x128xf32>
    %c31_i32 = arith.constant 31 : i32
    %24 = tpu.dynamic_rotate %9 by %c31_i32 dim 0 : vector<32x128xf32>, i32 -> vector<32x128xf32>
    %c3 = arith.constant 3 : index
    %c0_16 = arith.constant 0 : index
    %c0_17 = arith.constant 0 : index
    %25 = vector.load %arg2[%c3, %c0_16, %c0_17] : memref<6x32x1xf32, #tpu.memory_space<vmem>>, vector<1x32x1xf32>
    %26 = vector.shape_cast %25 : vector<1x32x1xf32> to vector<32x1xf32>
    %27 = vector.broadcast %26 : vector<32x1xf32> to vector<32x128xf32>
    %28 = arith.mulf %24, %27 : vector<32x128xf32>
    %29 = arith.truncf %28 : vector<32x128xf32> to vector<32x128xbf16>
    %c2_18 = arith.constant 2 : index
    %c0_19 = arith.constant 0 : index
    %c0_20 = arith.constant 0 : index
    %30 = vector.load %arg5[%c2_18, %c0_19, %c0_20] : memref<3x128x128xbf16, #tpu.memory_space<vmem>>, vector<1x128x128xbf16>
    %31 = vector.shape_cast %30 : vector<1x128x128xbf16> to vector<128x128xbf16>
    %cst_21 = arith.constant dense<0.000000e+00> : vector<32x128xf32>
    %32 = tpu.matmul %29, %31, %cst_21 {dimension_numbers = #tpu.dot_dimension_numbers<[1], [0], [0], [1], [0, 0, 1, 1], [], []>} : vector<32x128xbf16>, vector<128x128xbf16>, vector<32x128xf32> -> vector<32x128xf32>
    %33 = arith.addf %23, %32 : vector<32x128xf32>
    %c0_22 = arith.constant 0 : index
    %c0_23 = arith.constant 0 : index
    %34 = vector.load %arg6[%c0_22, %c0_23] : memref<1x128xf32, #tpu.memory_space<vmem>>, vector<1x128xf32>
    %35 = vector.broadcast %34 : vector<1x128xf32> to vector<32x128xf32>
    %36 = arith.addf %33, %35 : vector<32x128xf32>
    %37 = arith.truncf %0 : vector<32x256xf32> to vector<32x256xbf16>
    %c0_24 = arith.constant 0 : index
    %c0_25 = arith.constant 0 : index
    %c0_26 = arith.constant 0 : index
    %38 = vector.load %arg7[%c0_24, %c0_25, %c0_26] : memref<1x256x128xbf16, #tpu.memory_space<vmem>>, vector<1x256x128xbf16>
    %39 = vector.shape_cast %38 : vector<1x256x128xbf16> to vector<256x128xbf16>
    %cst_27 = arith.constant dense<0.000000e+00> : vector<32x128xf32>
    %40 = tpu.matmul %37, %39, %cst_27 {dimension_numbers = #tpu.dot_dimension_numbers<[1], [0], [0], [1], [0, 0, 1, 1], [], []>} : vector<32x256xbf16>, vector<256x128xbf16>, vector<32x128xf32> -> vector<32x128xf32>
    %c0_28 = arith.constant 0 : index
    %c0_29 = arith.constant 0 : index
    %41 = vector.load %arg8[%c0_28, %c0_29] : memref<1x128xf32, #tpu.memory_space<vmem>>, vector<1x128xf32>
    %42 = vector.broadcast %41 : vector<1x128xf32> to vector<32x128xf32>
    %43 = arith.addf %40, %42 : vector<32x128xf32>
    %cst_30 = arith.constant 0.000000e+00 : f32
    %44 = vector.broadcast %cst_30 : f32 to vector<32x128xf32>
    %45 = arith.maximumf %43, %44 : vector<32x128xf32>
    %c1_i32_31 = arith.constant 1 : i32
    %46 = tpu.dynamic_rotate %45 by %c1_i32_31 dim 0 : vector<32x128xf32>, i32 -> vector<32x128xf32>
    %c2_32 = arith.constant 2 : index
    %c0_33 = arith.constant 0 : index
    %c0_34 = arith.constant 0 : index
    %47 = vector.load %arg2[%c2_32, %c0_33, %c0_34] : memref<6x32x1xf32, #tpu.memory_space<vmem>>, vector<1x32x1xf32>
    %48 = vector.shape_cast %47 : vector<1x32x1xf32> to vector<32x1xf32>
    %49 = vector.broadcast %48 : vector<32x1xf32> to vector<32x128xf32>
    %50 = arith.mulf %46, %49 : vector<32x128xf32>
    %51 = arith.truncf %50 : vector<32x128xf32> to vector<32x128xbf16>
    %c0_35 = arith.constant 0 : index
    %c0_36 = arith.constant 0 : index
    %c0_37 = arith.constant 0 : index
    %52 = vector.load %arg9[%c0_35, %c0_36, %c0_37] : memref<3x128x128xbf16, #tpu.memory_space<vmem>>, vector<1x128x128xbf16>
    %53 = vector.shape_cast %52 : vector<1x128x128xbf16> to vector<128x128xbf16>
    %cst_38 = arith.constant dense<0.000000e+00> : vector<32x128xf32>
    %54 = tpu.matmul %51, %53, %cst_38 {dimension_numbers = #tpu.dot_dimension_numbers<[1], [0], [0], [1], [0, 0, 1, 1], [], []>} : vector<32x128xbf16>, vector<128x128xbf16>, vector<32x128xf32> -> vector<32x128xf32>
    %55 = arith.truncf %45 : vector<32x128xf32> to vector<32x128xbf16>
    %c1_39 = arith.constant 1 : index
    %c0_40 = arith.constant 0 : index
    %c0_41 = arith.constant 0 : index
    %56 = vector.load %arg9[%c1_39, %c0_40, %c0_41] : memref<3x128x128xbf16, #tpu.memory_space<vmem>>, vector<1x128x128xbf16>
    %57 = vector.shape_cast %56 : vector<1x128x128xbf16> to vector<128x128xbf16>
    %cst_42 = arith.constant dense<0.000000e+00> : vector<32x128xf32>
    %58 = tpu.matmul %55, %57, %cst_42 {dimension_numbers = #tpu.dot_dimension_numbers<[1], [0], [0], [1], [0, 0, 1, 1], [], []>} : vector<32x128xbf16>, vector<128x128xbf16>, vector<32x128xf32> -> vector<32x128xf32>
    %59 = arith.addf %54, %58 : vector<32x128xf32>
    %c31_i32_43 = arith.constant 31 : i32
    %60 = tpu.dynamic_rotate %45 by %c31_i32_43 dim 0 : vector<32x128xf32>, i32 -> vector<32x128xf32>
    %c3_44 = arith.constant 3 : index
    %c0_45 = arith.constant 0 : index
    %c0_46 = arith.constant 0 : index
    %61 = vector.load %arg2[%c3_44, %c0_45, %c0_46] : memref<6x32x1xf32, #tpu.memory_space<vmem>>, vector<1x32x1xf32>
    %62 = vector.shape_cast %61 : vector<1x32x1xf32> to vector<32x1xf32>
    %63 = vector.broadcast %62 : vector<32x1xf32> to vector<32x128xf32>
    %64 = arith.mulf %60, %63 : vector<32x128xf32>
    %65 = arith.truncf %64 : vector<32x128xf32> to vector<32x128xbf16>
    %c2_47 = arith.constant 2 : index
    %c0_48 = arith.constant 0 : index
    %c0_49 = arith.constant 0 : index
    %66 = vector.load %arg9[%c2_47, %c0_48, %c0_49] : memref<3x128x128xbf16, #tpu.memory_space<vmem>>, vector<1x128x128xbf16>
    %67 = vector.shape_cast %66 : vector<1x128x128xbf16> to vector<128x128xbf16>
    %cst_50 = arith.constant dense<0.000000e+00> : vector<32x128xf32>
    %68 = tpu.matmul %65, %67, %cst_50 {dimension_numbers = #tpu.dot_dimension_numbers<[1], [0], [0], [1], [0, 0, 1, 1], [], []>} : vector<32x128xbf16>, vector<128x128xbf16>, vector<32x128xf32> -> vector<32x128xf32>
    %69 = arith.addf %59, %68 : vector<32x128xf32>
    %c0_51 = arith.constant 0 : index
    %c0_52 = arith.constant 0 : index
    %70 = vector.load %arg10[%c0_51, %c0_52] : memref<1x128xf32, #tpu.memory_space<vmem>>, vector<1x128xf32>
    %71 = vector.broadcast %70 : vector<1x128xf32> to vector<32x128xf32>
    %72 = arith.addf %69, %71 : vector<32x128xf32>
    %cst_53 = arith.constant 0.000000e+00 : f32
    %73 = vector.broadcast %cst_53 : f32 to vector<32x128xf32>
    %74 = arith.maximumf %72, %73 : vector<32x128xf32>
    %c3_i32 = arith.constant 3 : i32
    %75 = tpu.dynamic_rotate %74 by %c3_i32 dim 0 : vector<32x128xf32>, i32 -> vector<32x128xf32>
    %c1_54 = arith.constant 1 : index
    %c0_55 = arith.constant 0 : index
    %c0_56 = arith.constant 0 : index
    %76 = vector.load %arg2[%c1_54, %c0_55, %c0_56] : memref<6x32x1xf32, #tpu.memory_space<vmem>>, vector<1x32x1xf32>
    %77 = vector.shape_cast %76 : vector<1x32x1xf32> to vector<32x1xf32>
    %78 = vector.broadcast %77 : vector<32x1xf32> to vector<32x128xf32>
    %79 = arith.mulf %75, %78 : vector<32x128xf32>
    %80 = arith.truncf %79 : vector<32x128xf32> to vector<32x128xbf16>
    %c0_57 = arith.constant 0 : index
    %c0_58 = arith.constant 0 : index
    %c0_59 = arith.constant 0 : index
    %81 = vector.load %arg11[%c0_57, %c0_58, %c0_59] : memref<3x128x128xbf16, #tpu.memory_space<vmem>>, vector<1x128x128xbf16>
    %82 = vector.shape_cast %81 : vector<1x128x128xbf16> to vector<128x128xbf16>
    %cst_60 = arith.constant dense<0.000000e+00> : vector<32x128xf32>
    %83 = tpu.matmul %80, %82, %cst_60 {dimension_numbers = #tpu.dot_dimension_numbers<[1], [0], [0], [1], [0, 0, 1, 1], [], []>} : vector<32x128xbf16>, vector<128x128xbf16>, vector<32x128xf32> -> vector<32x128xf32>
    %84 = arith.truncf %74 : vector<32x128xf32> to vector<32x128xbf16>
    %c1_61 = arith.constant 1 : index
    %c0_62 = arith.constant 0 : index
    %c0_63 = arith.constant 0 : index
    %85 = vector.load %arg11[%c1_61, %c0_62, %c0_63] : memref<3x128x128xbf16, #tpu.memory_space<vmem>>, vector<1x128x128xbf16>
    %86 = vector.shape_cast %85 : vector<1x128x128xbf16> to vector<128x128xbf16>
    %cst_64 = arith.constant dense<0.000000e+00> : vector<32x128xf32>
    %87 = tpu.matmul %84, %86, %cst_64 {dimension_numbers = #tpu.dot_dimension_numbers<[1], [0], [0], [1], [0, 0, 1, 1], [], []>} : vector<32x128xbf16>, vector<128x128xbf16>, vector<32x128xf32> -> vector<32x128xf32>
    %88 = arith.addf %83, %87 : vector<32x128xf32>
    %c29_i32 = arith.constant 29 : i32
    %89 = tpu.dynamic_rotate %74 by %c29_i32 dim 0 : vector<32x128xf32>, i32 -> vector<32x128xf32>
    %c4 = arith.constant 4 : index
    %c0_65 = arith.constant 0 : index
    %c0_66 = arith.constant 0 : index
    %90 = vector.load %arg2[%c4, %c0_65, %c0_66] : memref<6x32x1xf32, #tpu.memory_space<vmem>>, vector<1x32x1xf32>
    %91 = vector.shape_cast %90 : vector<1x32x1xf32> to vector<32x1xf32>
    %92 = vector.broadcast %91 : vector<32x1xf32> to vector<32x128xf32>
    %93 = arith.mulf %89, %92 : vector<32x128xf32>
    %94 = arith.truncf %93 : vector<32x128xf32> to vector<32x128xbf16>
    %c2_67 = arith.constant 2 : index
    %c0_68 = arith.constant 0 : index
    %c0_69 = arith.constant 0 : index
    %95 = vector.load %arg11[%c2_67, %c0_68, %c0_69] : memref<3x128x128xbf16, #tpu.memory_space<vmem>>, vector<1x128x128xbf16>
    %96 = vector.shape_cast %95 : vector<1x128x128xbf16> to vector<128x128xbf16>
    %cst_70 = arith.constant dense<0.000000e+00> : vector<32x128xf32>
    %97 = tpu.matmul %94, %96, %cst_70 {dimension_numbers = #tpu.dot_dimension_numbers<[1], [0], [0], [1], [0, 0, 1, 1], [], []>} : vector<32x128xbf16>, vector<128x128xbf16>, vector<32x128xf32> -> vector<32x128xf32>
    %98 = arith.addf %88, %97 : vector<32x128xf32>
    %c0_71 = arith.constant 0 : index
    %c0_72 = arith.constant 0 : index
    %99 = vector.load %arg12[%c0_71, %c0_72] : memref<1x128xf32, #tpu.memory_space<vmem>>, vector<1x128xf32>
    %100 = vector.broadcast %99 : vector<1x128xf32> to vector<32x128xf32>
    %101 = arith.addf %98, %100 : vector<32x128xf32>
    %102 = arith.truncf %0 : vector<32x256xf32> to vector<32x256xbf16>
    %c0_73 = arith.constant 0 : index
    %c0_74 = arith.constant 0 : index
    %c0_75 = arith.constant 0 : index
    %103 = vector.load %arg13[%c0_73, %c0_74, %c0_75] : memref<1x256x128xbf16, #tpu.memory_space<vmem>>, vector<1x256x128xbf16>
    %104 = vector.shape_cast %103 : vector<1x256x128xbf16> to vector<256x128xbf16>
    %cst_76 = arith.constant dense<0.000000e+00> : vector<32x128xf32>
    %105 = tpu.matmul %102, %104, %cst_76 {dimension_numbers = #tpu.dot_dimension_numbers<[1], [0], [0], [1], [0, 0, 1, 1], [], []>} : vector<32x256xbf16>, vector<256x128xbf16>, vector<32x128xf32> -> vector<32x128xf32>
    %c0_77 = arith.constant 0 : index
    %c0_78 = arith.constant 0 : index
    %106 = vector.load %arg14[%c0_77, %c0_78] : memref<1x128xf32, #tpu.memory_space<vmem>>, vector<1x128xf32>
    %107 = vector.broadcast %106 : vector<1x128xf32> to vector<32x128xf32>
    %108 = arith.addf %105, %107 : vector<32x128xf32>
    %cst_79 = arith.constant 0.000000e+00 : f32
    %109 = vector.broadcast %cst_79 : f32 to vector<32x128xf32>
    %110 = arith.maximumf %108, %109 : vector<32x128xf32>
    %111 = arith.truncf %110 : vector<32x128xf32> to vector<32x128xbf16>
    %c0_80 = arith.constant 0 : index
    %c0_81 = arith.constant 0 : index
    %c0_82 = arith.constant 0 : index
    %112 = vector.load %arg15[%c0_80, %c0_81, %c0_82] : memref<1x128x128xbf16, #tpu.memory_space<vmem>>, vector<1x128x128xbf16>
    %113 = vector.shape_cast %112 : vector<1x128x128xbf16> to vector<128x128xbf16>
    %cst_83 = arith.constant dense<0.000000e+00> : vector<32x128xf32>
    %114 = tpu.matmul %111, %113, %cst_83 {dimension_numbers = #tpu.dot_dimension_numbers<[1], [0], [0], [1], [0, 0, 1, 1], [], []>} : vector<32x128xbf16>, vector<128x128xbf16>, vector<32x128xf32> -> vector<32x128xf32>
    %c0_84 = arith.constant 0 : index
    %c0_85 = arith.constant 0 : index
    %115 = vector.load %arg16[%c0_84, %c0_85] : memref<1x128xf32, #tpu.memory_space<vmem>>, vector<1x128xf32>
    %116 = vector.broadcast %115 : vector<1x128xf32> to vector<32x128xf32>
    %117 = arith.addf %114, %116 : vector<32x128xf32>
    %cst_86 = arith.constant 0.000000e+00 : f32
    %118 = vector.broadcast %cst_86 : f32 to vector<32x128xf32>
    %119 = arith.maximumf %117, %118 : vector<32x128xf32>
    %c3_i32_87 = arith.constant 3 : i32
    %120 = tpu.dynamic_rotate %119 by %c3_i32_87 dim 0 : vector<32x128xf32>, i32 -> vector<32x128xf32>
    %c1_88 = arith.constant 1 : index
    %c0_89 = arith.constant 0 : index
    %c0_90 = arith.constant 0 : index
    %121 = vector.load %arg2[%c1_88, %c0_89, %c0_90] : memref<6x32x1xf32, #tpu.memory_space<vmem>>, vector<1x32x1xf32>
    %122 = vector.shape_cast %121 : vector<1x32x1xf32> to vector<32x1xf32>
    %123 = vector.broadcast %122 : vector<32x1xf32> to vector<32x128xf32>
    %124 = arith.mulf %120, %123 : vector<32x128xf32>
    %125 = arith.truncf %124 : vector<32x128xf32> to vector<32x128xbf16>
    %c0_91 = arith.constant 0 : index
    %c0_92 = arith.constant 0 : index
    %c0_93 = arith.constant 0 : index
    %126 = vector.load %arg17[%c0_91, %c0_92, %c0_93] : memref<3x128x128xbf16, #tpu.memory_space<vmem>>, vector<1x128x128xbf16>
    %127 = vector.shape_cast %126 : vector<1x128x128xbf16> to vector<128x128xbf16>
    %cst_94 = arith.constant dense<0.000000e+00> : vector<32x128xf32>
    %128 = tpu.matmul %125, %127, %cst_94 {dimension_numbers = #tpu.dot_dimension_numbers<[1], [0], [0], [1], [0, 0, 1, 1], [], []>} : vector<32x128xbf16>, vector<128x128xbf16>, vector<32x128xf32> -> vector<32x128xf32>
    %129 = arith.truncf %119 : vector<32x128xf32> to vector<32x128xbf16>
    %c1_95 = arith.constant 1 : index
    %c0_96 = arith.constant 0 : index
    %c0_97 = arith.constant 0 : index
    %130 = vector.load %arg17[%c1_95, %c0_96, %c0_97] : memref<3x128x128xbf16, #tpu.memory_space<vmem>>, vector<1x128x128xbf16>
    %131 = vector.shape_cast %130 : vector<1x128x128xbf16> to vector<128x128xbf16>
    %cst_98 = arith.constant dense<0.000000e+00> : vector<32x128xf32>
    %132 = tpu.matmul %129, %131, %cst_98 {dimension_numbers = #tpu.dot_dimension_numbers<[1], [0], [0], [1], [0, 0, 1, 1], [], []>} : vector<32x128xbf16>, vector<128x128xbf16>, vector<32x128xf32> -> vector<32x128xf32>
    %133 = arith.addf %128, %132 : vector<32x128xf32>
    %c29_i32_99 = arith.constant 29 : i32
    %134 = tpu.dynamic_rotate %119 by %c29_i32_99 dim 0 : vector<32x128xf32>, i32 -> vector<32x128xf32>
    %c4_100 = arith.constant 4 : index
    %c0_101 = arith.constant 0 : index
    %c0_102 = arith.constant 0 : index
    %135 = vector.load %arg2[%c4_100, %c0_101, %c0_102] : memref<6x32x1xf32, #tpu.memory_space<vmem>>, vector<1x32x1xf32>
    %136 = vector.shape_cast %135 : vector<1x32x1xf32> to vector<32x1xf32>
    %137 = vector.broadcast %136 : vector<32x1xf32> to vector<32x128xf32>
    %138 = arith.mulf %134, %137 : vector<32x128xf32>
    %139 = arith.truncf %138 : vector<32x128xf32> to vector<32x128xbf16>
    %c2_103 = arith.constant 2 : index
    %c0_104 = arith.constant 0 : index
    %c0_105 = arith.constant 0 : index
    %140 = vector.load %arg17[%c2_103, %c0_104, %c0_105] : memref<3x128x128xbf16, #tpu.memory_space<vmem>>, vector<1x128x128xbf16>
    %141 = vector.shape_cast %140 : vector<1x128x128xbf16> to vector<128x128xbf16>
    %cst_106 = arith.constant dense<0.000000e+00> : vector<32x128xf32>
    %142 = tpu.matmul %139, %141, %cst_106 {dimension_numbers = #tpu.dot_dimension_numbers<[1], [0], [0], [1], [0, 0, 1, 1], [], []>} : vector<32x128xbf16>, vector<128x128xbf16>, vector<32x128xf32> -> vector<32x128xf32>
    %143 = arith.addf %133, %142 : vector<32x128xf32>
    %c0_107 = arith.constant 0 : index
    %c0_108 = arith.constant 0 : index
    %144 = vector.load %arg18[%c0_107, %c0_108] : memref<1x128xf32, #tpu.memory_space<vmem>>, vector<1x128xf32>
    %145 = vector.broadcast %144 : vector<1x128xf32> to vector<32x128xf32>
    %146 = arith.addf %143, %145 : vector<32x128xf32>
    %147 = arith.truncf %0 : vector<32x256xf32> to vector<32x256xbf16>
    %c0_109 = arith.constant 0 : index
    %c0_110 = arith.constant 0 : index
    %c0_111 = arith.constant 0 : index
    %148 = vector.load %arg19[%c0_109, %c0_110, %c0_111] : memref<1x256x128xbf16, #tpu.memory_space<vmem>>, vector<1x256x128xbf16>
    %149 = vector.shape_cast %148 : vector<1x256x128xbf16> to vector<256x128xbf16>
    %cst_112 = arith.constant dense<0.000000e+00> : vector<32x128xf32>
    %150 = tpu.matmul %147, %149, %cst_112 {dimension_numbers = #tpu.dot_dimension_numbers<[1], [0], [0], [1], [0, 0, 1, 1], [], []>} : vector<32x256xbf16>, vector<256x128xbf16>, vector<32x128xf32> -> vector<32x128xf32>
    %c0_113 = arith.constant 0 : index
    %c0_114 = arith.constant 0 : index
    %151 = vector.load %arg20[%c0_113, %c0_114] : memref<1x128xf32, #tpu.memory_space<vmem>>, vector<1x128xf32>
    %152 = vector.broadcast %151 : vector<1x128xf32> to vector<32x128xf32>
    %153 = arith.addf %150, %152 : vector<32x128xf32>
    %cst_115 = arith.constant 0.000000e+00 : f32
    %154 = vector.broadcast %cst_115 : f32 to vector<32x128xf32>
    %155 = arith.maximumf %153, %154 : vector<32x128xf32>
    %156 = arith.truncf %155 : vector<32x128xf32> to vector<32x128xbf16>
    %c0_116 = arith.constant 0 : index
    %c0_117 = arith.constant 0 : index
    %c0_118 = arith.constant 0 : index
    %157 = vector.load %arg21[%c0_116, %c0_117, %c0_118] : memref<1x128x128xbf16, #tpu.memory_space<vmem>>, vector<1x128x128xbf16>
    %158 = vector.shape_cast %157 : vector<1x128x128xbf16> to vector<128x128xbf16>
    %cst_119 = arith.constant dense<0.000000e+00> : vector<32x128xf32>
    %159 = tpu.matmul %156, %158, %cst_119 {dimension_numbers = #tpu.dot_dimension_numbers<[1], [0], [0], [1], [0, 0, 1, 1], [], []>} : vector<32x128xbf16>, vector<128x128xbf16>, vector<32x128xf32> -> vector<32x128xf32>
    %c0_120 = arith.constant 0 : index
    %c0_121 = arith.constant 0 : index
    %160 = vector.load %arg22[%c0_120, %c0_121] : memref<1x128xf32, #tpu.memory_space<vmem>>, vector<1x128xf32>
    %161 = vector.broadcast %160 : vector<1x128xf32> to vector<32x128xf32>
    %162 = arith.addf %159, %161 : vector<32x128xf32>
    %cst_122 = arith.constant 0.000000e+00 : f32
    %163 = vector.broadcast %cst_122 : f32 to vector<32x128xf32>
    %164 = arith.maximumf %162, %163 : vector<32x128xf32>
    %c1_i32_123 = arith.constant 1 : i32
    %165 = tpu.dynamic_rotate %164 by %c1_i32_123 dim 0 : vector<32x128xf32>, i32 -> vector<32x128xf32>
    %c2_124 = arith.constant 2 : index
    %c0_125 = arith.constant 0 : index
    %c0_126 = arith.constant 0 : index
    %166 = vector.load %arg2[%c2_124, %c0_125, %c0_126] : memref<6x32x1xf32, #tpu.memory_space<vmem>>, vector<1x32x1xf32>
    %167 = vector.shape_cast %166 : vector<1x32x1xf32> to vector<32x1xf32>
    %168 = vector.broadcast %167 : vector<32x1xf32> to vector<32x128xf32>
    %169 = arith.mulf %165, %168 : vector<32x128xf32>
    %170 = arith.truncf %169 : vector<32x128xf32> to vector<32x128xbf16>
    %c0_127 = arith.constant 0 : index
    %c0_128 = arith.constant 0 : index
    %c0_129 = arith.constant 0 : index
    %171 = vector.load %arg23[%c0_127, %c0_128, %c0_129] : memref<3x128x128xbf16, #tpu.memory_space<vmem>>, vector<1x128x128xbf16>
    %172 = vector.shape_cast %171 : vector<1x128x128xbf16> to vector<128x128xbf16>
    %cst_130 = arith.constant dense<0.000000e+00> : vector<32x128xf32>
    %173 = tpu.matmul %170, %172, %cst_130 {dimension_numbers = #tpu.dot_dimension_numbers<[1], [0], [0], [1], [0, 0, 1, 1], [], []>} : vector<32x128xbf16>, vector<128x128xbf16>, vector<32x128xf32> -> vector<32x128xf32>
    %174 = arith.truncf %164 : vector<32x128xf32> to vector<32x128xbf16>
    %c1_131 = arith.constant 1 : index
    %c0_132 = arith.constant 0 : index
    %c0_133 = arith.constant 0 : index
    %175 = vector.load %arg23[%c1_131, %c0_132, %c0_133] : memref<3x128x128xbf16, #tpu.memory_space<vmem>>, vector<1x128x128xbf16>
    %176 = vector.shape_cast %175 : vector<1x128x128xbf16> to vector<128x128xbf16>
    %cst_134 = arith.constant dense<0.000000e+00> : vector<32x128xf32>
    %177 = tpu.matmul %174, %176, %cst_134 {dimension_numbers = #tpu.dot_dimension_numbers<[1], [0], [0], [1], [0, 0, 1, 1], [], []>} : vector<32x128xbf16>, vector<128x128xbf16>, vector<32x128xf32> -> vector<32x128xf32>
    %178 = arith.addf %173, %177 : vector<32x128xf32>
    %c31_i32_135 = arith.constant 31 : i32
    %179 = tpu.dynamic_rotate %164 by %c31_i32_135 dim 0 : vector<32x128xf32>, i32 -> vector<32x128xf32>
    %c3_136 = arith.constant 3 : index
    %c0_137 = arith.constant 0 : index
    %c0_138 = arith.constant 0 : index
    %180 = vector.load %arg2[%c3_136, %c0_137, %c0_138] : memref<6x32x1xf32, #tpu.memory_space<vmem>>, vector<1x32x1xf32>
    %181 = vector.shape_cast %180 : vector<1x32x1xf32> to vector<32x1xf32>
    %182 = vector.broadcast %181 : vector<32x1xf32> to vector<32x128xf32>
    %183 = arith.mulf %179, %182 : vector<32x128xf32>
    %184 = arith.truncf %183 : vector<32x128xf32> to vector<32x128xbf16>
    %c2_139 = arith.constant 2 : index
    %c0_140 = arith.constant 0 : index
    %c0_141 = arith.constant 0 : index
    %185 = vector.load %arg23[%c2_139, %c0_140, %c0_141] : memref<3x128x128xbf16, #tpu.memory_space<vmem>>, vector<1x128x128xbf16>
    %186 = vector.shape_cast %185 : vector<1x128x128xbf16> to vector<128x128xbf16>
    %cst_142 = arith.constant dense<0.000000e+00> : vector<32x128xf32>
    %187 = tpu.matmul %184, %186, %cst_142 {dimension_numbers = #tpu.dot_dimension_numbers<[1], [0], [0], [1], [0, 0, 1, 1], [], []>} : vector<32x128xbf16>, vector<128x128xbf16>, vector<32x128xf32> -> vector<32x128xf32>
    %188 = arith.addf %178, %187 : vector<32x128xf32>
    %c0_143 = arith.constant 0 : index
    %c0_144 = arith.constant 0 : index
    %189 = vector.load %arg24[%c0_143, %c0_144] : memref<1x128xf32, #tpu.memory_space<vmem>>, vector<1x128xf32>
    %190 = vector.broadcast %189 : vector<1x128xf32> to vector<32x128xf32>
    %191 = arith.addf %188, %190 : vector<32x128xf32>
    %cst_145 = arith.constant 0.000000e+00 : f32
    %192 = vector.broadcast %cst_145 : f32 to vector<32x128xf32>
    %193 = arith.maximumf %191, %192 : vector<32x128xf32>
    %c5_i32 = arith.constant 5 : i32
    %194 = tpu.dynamic_rotate %193 by %c5_i32 dim 0 : vector<32x128xf32>, i32 -> vector<32x128xf32>
    %c0_146 = arith.constant 0 : index
    %c0_147 = arith.constant 0 : index
    %c0_148 = arith.constant 0 : index
    %195 = vector.load %arg2[%c0_146, %c0_147, %c0_148] : memref<6x32x1xf32, #tpu.memory_space<vmem>>, vector<1x32x1xf32>
    %196 = vector.shape_cast %195 : vector<1x32x1xf32> to vector<32x1xf32>
    %197 = vector.broadcast %196 : vector<32x1xf32> to vector<32x128xf32>
    %198 = arith.mulf %194, %197 : vector<32x128xf32>
    %199 = arith.truncf %198 : vector<32x128xf32> to vector<32x128xbf16>
    %c0_149 = arith.constant 0 : index
    %c0_150 = arith.constant 0 : index
    %c0_151 = arith.constant 0 : index
    %200 = vector.load %arg25[%c0_149, %c0_150, %c0_151] : memref<3x128x128xbf16, #tpu.memory_space<vmem>>, vector<1x128x128xbf16>
    %201 = vector.shape_cast %200 : vector<1x128x128xbf16> to vector<128x128xbf16>
    %cst_152 = arith.constant dense<0.000000e+00> : vector<32x128xf32>
    %202 = tpu.matmul %199, %201, %cst_152 {dimension_numbers = #tpu.dot_dimension_numbers<[1], [0], [0], [1], [0, 0, 1, 1], [], []>} : vector<32x128xbf16>, vector<128x128xbf16>, vector<32x128xf32> -> vector<32x128xf32>
    %203 = arith.truncf %193 : vector<32x128xf32> to vector<32x128xbf16>
    %c1_153 = arith.constant 1 : index
    %c0_154 = arith.constant 0 : index
    %c0_155 = arith.constant 0 : index
    %204 = vector.load %arg25[%c1_153, %c0_154, %c0_155] : memref<3x128x128xbf16, #tpu.memory_space<vmem>>, vector<1x128x128xbf16>
    %205 = vector.shape_cast %204 : vector<1x128x128xbf16> to vector<128x128xbf16>
    %cst_156 = arith.constant dense<0.000000e+00> : vector<32x128xf32>
    %206 = tpu.matmul %203, %205, %cst_156 {dimension_numbers = #tpu.dot_dimension_numbers<[1], [0], [0], [1], [0, 0, 1, 1], [], []>} : vector<32x128xbf16>, vector<128x128xbf16>, vector<32x128xf32> -> vector<32x128xf32>
    %207 = arith.addf %202, %206 : vector<32x128xf32>
    %c27_i32 = arith.constant 27 : i32
    %208 = tpu.dynamic_rotate %193 by %c27_i32 dim 0 : vector<32x128xf32>, i32 -> vector<32x128xf32>
    %c5 = arith.constant 5 : index
    %c0_157 = arith.constant 0 : index
    %c0_158 = arith.constant 0 : index
    %209 = vector.load %arg2[%c5, %c0_157, %c0_158] : memref<6x32x1xf32, #tpu.memory_space<vmem>>, vector<1x32x1xf32>
    %210 = vector.shape_cast %209 : vector<1x32x1xf32> to vector<32x1xf32>
    %211 = vector.broadcast %210 : vector<32x1xf32> to vector<32x128xf32>
    %212 = arith.mulf %208, %211 : vector<32x128xf32>
    %213 = arith.truncf %212 : vector<32x128xf32> to vector<32x128xbf16>
    %c2_159 = arith.constant 2 : index
    %c0_160 = arith.constant 0 : index
    %c0_161 = arith.constant 0 : index
    %214 = vector.load %arg25[%c2_159, %c0_160, %c0_161] : memref<3x128x128xbf16, #tpu.memory_space<vmem>>, vector<1x128x128xbf16>
    %215 = vector.shape_cast %214 : vector<1x128x128xbf16> to vector<128x128xbf16>
    %cst_162 = arith.constant dense<0.000000e+00> : vector<32x128xf32>
    %216 = tpu.matmul %213, %215, %cst_162 {dimension_numbers = #tpu.dot_dimension_numbers<[1], [0], [0], [1], [0, 0, 1, 1], [], []>} : vector<32x128xbf16>, vector<128x128xbf16>, vector<32x128xf32> -> vector<32x128xf32>
    %217 = arith.addf %207, %216 : vector<32x128xf32>
    %c0_163 = arith.constant 0 : index
    %c0_164 = arith.constant 0 : index
    %218 = vector.load %arg26[%c0_163, %c0_164] : memref<1x128xf32, #tpu.memory_space<vmem>>, vector<1x128xf32>
    %219 = vector.broadcast %218 : vector<1x128xf32> to vector<32x128xf32>
    %220 = arith.addf %217, %219 : vector<32x128xf32>
    %221 = arith.truncf %36 : vector<32x128xf32> to vector<32x128xbf16>
    %c0_165 = arith.constant 0 : index
    %c0_166 = arith.constant 0 : index
    %c0_167 = arith.constant 0 : index
    %222 = vector.load %arg27[%c0_165, %c0_166, %c0_167] : memref<1x128x256xbf16, #tpu.memory_space<vmem>>, vector<1x128x256xbf16>
    %223 = vector.shape_cast %222 : vector<1x128x256xbf16> to vector<128x256xbf16>
    %cst_168 = arith.constant dense<0.000000e+00> : vector<32x256xf32>
    %224 = tpu.matmul %221, %223, %cst_168 {dimension_numbers = #tpu.dot_dimension_numbers<[1], [0], [0], [1], [0, 0, 1, 1], [], []>} : vector<32x128xbf16>, vector<128x256xbf16>, vector<32x256xf32> -> vector<32x256xf32>
    %225 = arith.truncf %101 : vector<32x128xf32> to vector<32x128xbf16>
    %c0_169 = arith.constant 0 : index
    %c0_170 = arith.constant 0 : index
    %c0_171 = arith.constant 0 : index
    %226 = vector.load %arg28[%c0_169, %c0_170, %c0_171] : memref<1x128x256xbf16, #tpu.memory_space<vmem>>, vector<1x128x256xbf16>
    %227 = vector.shape_cast %226 : vector<1x128x256xbf16> to vector<128x256xbf16>
    %cst_172 = arith.constant dense<0.000000e+00> : vector<32x256xf32>
    %228 = tpu.matmul %225, %227, %cst_172 {dimension_numbers = #tpu.dot_dimension_numbers<[1], [0], [0], [1], [0, 0, 1, 1], [], []>} : vector<32x128xbf16>, vector<128x256xbf16>, vector<32x256xf32> -> vector<32x256xf32>
    %229 = arith.addf %224, %228 : vector<32x256xf32>
    %230 = arith.truncf %146 : vector<32x128xf32> to vector<32x128xbf16>
    %c0_173 = arith.constant 0 : index
    %c0_174 = arith.constant 0 : index
    %c0_175 = arith.constant 0 : index
    %231 = vector.load %arg29[%c0_173, %c0_174, %c0_175] : memref<1x128x256xbf16, #tpu.memory_space<vmem>>, vector<1x128x256xbf16>
    %232 = vector.shape_cast %231 : vector<1x128x256xbf16> to vector<128x256xbf16>
    %cst_176 = arith.constant dense<0.000000e+00> : vector<32x256xf32>
    %233 = tpu.matmul %230, %232, %cst_176 {dimension_numbers = #tpu.dot_dimension_numbers<[1], [0], [0], [1], [0, 0, 1, 1], [], []>} : vector<32x128xbf16>, vector<128x256xbf16>, vector<32x256xf32> -> vector<32x256xf32>
    %234 = arith.addf %229, %233 : vector<32x256xf32>
    %235 = arith.truncf %220 : vector<32x128xf32> to vector<32x128xbf16>
    %c0_177 = arith.constant 0 : index
    %c0_178 = arith.constant 0 : index
    %c0_179 = arith.constant 0 : index
    %236 = vector.load %arg30[%c0_177, %c0_178, %c0_179] : memref<1x128x256xbf16, #tpu.memory_space<vmem>>, vector<1x128x256xbf16>
    %237 = vector.shape_cast %236 : vector<1x128x256xbf16> to vector<128x256xbf16>
    %cst_180 = arith.constant dense<0.000000e+00> : vector<32x256xf32>
    %238 = tpu.matmul %235, %237, %cst_180 {dimension_numbers = #tpu.dot_dimension_numbers<[1], [0], [0], [1], [0, 0, 1, 1], [], []>} : vector<32x128xbf16>, vector<128x256xbf16>, vector<32x256xf32> -> vector<32x256xf32>
    %239 = arith.addf %234, %238 : vector<32x256xf32>
    %c0_181 = arith.constant 0 : index
    %c0_182 = arith.constant 0 : index
    %240 = vector.load %arg31[%c0_181, %c0_182] : memref<1x256xf32, #tpu.memory_space<vmem>>, vector<1x256xf32>
    %241 = vector.broadcast %240 : vector<1x256xf32> to vector<32x256xf32>
    %242 = arith.addf %239, %241 : vector<32x256xf32>
    %c0_183 = arith.constant 0 : index
    %c0_184 = arith.constant 0 : index
    %c0_185 = arith.constant 0 : index
    %243 = vector.load %arg32[%c0_183, %c0_184, %c0_185] : memref<1x256x256xf32, #tpu.memory_space<vmem>>, vector<1x256x256xf32>
    %244 = vector.shape_cast %243 : vector<1x256x256xf32> to vector<256x256xf32>
    %cst_186 = arith.constant dense<0.000000e+00> : vector<32x256xf32>
    %245 = tpu.matmul %0, %244, %cst_186 {dimension_numbers = #tpu.dot_dimension_numbers<[1], [0], [0], [1], [0, 0, 1, 1], [], []>} : vector<32x256xf32>, vector<256x256xf32>, vector<32x256xf32> -> vector<32x256xf32>
    %c0_187 = arith.constant 0 : index
    %c0_188 = arith.constant 0 : index
    %246 = vector.load %arg33[%c0_187, %c0_188] : memref<1x256xf32, #tpu.memory_space<vmem>>, vector<1x256xf32>
    %247 = vector.broadcast %246 : vector<1x256xf32> to vector<32x256xf32>
    %248 = arith.addf %245, %247 : vector<32x256xf32>
    %249 = arith.addf %242, %248 : vector<32x256xf32>
    %cst_189 = arith.constant 0.000000e+00 : f32
    %250 = vector.broadcast %cst_189 : f32 to vector<32x256xf32>
    %251 = arith.maximumf %249, %250 : vector<32x256xf32>
    %c0_190 = arith.constant 0 : index
    %c0_191 = arith.constant 0 : index
    %252 = vector.load %arg34[%c0_190, %c0_191] : memref<32x256xf32, #tpu.memory_space<vmem>>, vector<32x256xf32>
    tpu.vector_store %arg34[%c0_190, %c0_191], %251 {strides = array<i32>} : memref<32x256xf32, #tpu.memory_space<vmem>>, vector<32x256xf32>,
    return
  }
  func.func @transform_0(%arg0: i32) -> (i32, i32) {
    %c0_i32 = arith.constant 0 : i32
    %c0_i32_0 = arith.constant 0 : i32
    return %arg0, %c0_i32 : i32, i32
  }
  func.func @transform_1(%arg0: i32) -> (i32, i32, i32) {
    %c0_i32 = arith.constant 0 : i32
    %c0_i32_0 = arith.constant 0 : i32
    %c0_i32_1 = arith.constant 0 : i32
    %c0_i32_2 = arith.constant 0 : i32
    return %c0_i32, %c0_i32_0, %c0_i32_1 : i32, i32, i32
  }
  func.func @transform_2(%arg0: i32) -> (i32, i32, i32) {
    %c0_i32 = arith.constant 0 : i32
    %c0_i32_0 = arith.constant 0 : i32
    %c0_i32_1 = arith.constant 0 : i32
    %c0_i32_2 = arith.constant 0 : i32
    return %c0_i32, %c0_i32_0, %c0_i32_1 : i32, i32, i32
  }
  func.func @transform_3(%arg0: i32) -> (i32, i32) {
    %c0_i32 = arith.constant 0 : i32
    %c0_i32_0 = arith.constant 0 : i32
    %c0_i32_1 = arith.constant 0 : i32
    return %c0_i32, %c0_i32_0 : i32, i32
  }
  func.func @transform_4(%arg0: i32) -> (i32, i32, i32) {
    %c0_i32 = arith.constant 0 : i32
    %c0_i32_0 = arith.constant 0 : i32
    %c0_i32_1 = arith.constant 0 : i32
    %c0_i32_2 = arith.constant 0 : i32
    return %c0_i32, %c0_i32_0, %c0_i32_1 : i32, i32, i32
  }
  func.func @transform_5(%arg0: i32) -> (i32, i32) {
    %c0_i32 = arith.constant 0 : i32
    %c0_i32_0 = arith.constant 0 : i32
    %c0_i32_1 = arith.constant 0 : i32
    return %c0_i32, %c0_i32_0 : i32, i32
  }
  func.func @transform_6(%arg0: i32) -> (i32, i32, i32) {
    %c0_i32 = arith.constant 0 : i32
    %c0_i32_0 = arith.constant 0 : i32
    %c0_i32_1 = arith.constant 0 : i32
    %c0_i32_2 = arith.constant 0 : i32
    return %c0_i32, %c0_i32_0, %c0_i32_1 : i32, i32, i32
  }
  func.func @transform_7(%arg0: i32) -> (i32, i32) {
    %c0_i32 = arith.constant 0 : i32
    %c0_i32_0 = arith.constant 0 : i32
    %c0_i32_1 = arith.constant 0 : i32
    return %c0_i32, %c0_i32_0 : i32, i32
  }
  func.func @transform_8(%arg0: i32) -> (i32, i32, i32) {
    %c0_i32 = arith.constant 0 : i32
    %c0_i32_0 = arith.constant 0 : i32
    %c0_i32_1 = arith.constant 0 : i32
    %c0_i32_2 = arith.constant 0 : i32
    return %c0_i32, %c0_i32_0, %c0_i32_1 : i32, i32, i32
  }
  func.func @transform_9(%arg0: i32) -> (i32, i32) {
    %c0_i32 = arith.constant 0 : i32
    %c0_i32_0 = arith.constant 0 : i32
    %c0_i32_1 = arith.constant 0 : i32
    return %c0_i32, %c0_i32_0 : i32, i32
  }
  func.func @transform_10(%arg0: i32) -> (i32, i32, i32) {
    %c0_i32 = arith.constant 0 : i32
    %c0_i32_0 = arith.constant 0 : i32
    %c0_i32_1 = arith.constant 0 : i32
    %c0_i32_2 = arith.constant 0 : i32
    return %c0_i32, %c0_i32_0, %c0_i32_1 : i32, i32, i32
  }
  func.func @transform_11(%arg0: i32) -> (i32, i32) {
    %c0_i32 = arith.constant 0 : i32
    %c0_i32_0 = arith.constant 0 : i32
    %c0_i32_1 = arith.constant 0 : i32
    return %c0_i32, %c0_i32_0 : i32, i32
  }
  func.func @transform_12(%arg0: i32) -> (i32, i32, i32) {
    %c0_i32 = arith.constant 0 : i32
    %c0_i32_0 = arith.constant 0 : i32
    %c0_i32_1 = arith.constant 0 : i32
    %c0_i32_2 = arith.constant 0 : i32
    return %c0_i32, %c0_i32_0, %c0_i32_1 : i32, i32, i32
  }
  func.func @transform_13(%arg0: i32) -> (i32, i32) {
    %c0_i32 = arith.constant 0 : i32
    %c0_i32_0 = arith.constant 0 : i32
    %c0_i32_1 = arith.constant 0 : i32
    return %c0_i32, %c0_i32_0 : i32, i32
  }
  func.func @transform_14(%arg0: i32) -> (i32, i32, i32) {
    %c0_i32 = arith.constant 0 : i32
    %c0_i32_0 = arith.constant 0 : i32
    %c0_i32_1 = arith.constant 0 : i32
    %c0_i32_2 = arith.constant 0 : i32
    return %c0_i32, %c0_i32_0, %c0_i32_1 : i32, i32, i32
  }
  func.func @transform_15(%arg0: i32) -> (i32, i32) {
    %c0_i32 = arith.constant 0 : i32
    %c0_i32_0 = arith.constant 0 : i32
    %c0_i32_1 = arith.constant 0 : i32
    return %c0_i32, %c0_i32_0 : i32, i32
  }
  func.func @transform_16(%arg0: i32) -> (i32, i32, i32) {
    %c0_i32 = arith.constant 0 : i32
    %c0_i32_0 = arith.constant 0 : i32
    %c0_i32_1 = arith.constant 0 : i32
    %c0_i32_2 = arith.constant 0 : i32
    return %c0_i32, %c0_i32_0, %c0_i32_1 : i32, i32, i32
  }
  func.func @transform_17(%arg0: i32) -> (i32, i32) {
    %c0_i32 = arith.constant 0 : i32
    %c0_i32_0 = arith.constant 0 : i32
    %c0_i32_1 = arith.constant 0 : i32
    return %c0_i32, %c0_i32_0 : i32, i32
  }
  func.func @transform_18(%arg0: i32) -> (i32, i32, i32) {
    %c0_i32 = arith.constant 0 : i32
    %c0_i32_0 = arith.constant 0 : i32
    %c0_i32_1 = arith.constant 0 : i32
    %c0_i32_2 = arith.constant 0 : i32
    return %c0_i32, %c0_i32_0, %c0_i32_1 : i32, i32, i32
  }
  func.func @transform_19(%arg0: i32) -> (i32, i32) {
    %c0_i32 = arith.constant 0 : i32
    %c0_i32_0 = arith.constant 0 : i32
    %c0_i32_1 = arith.constant 0 : i32
    return %c0_i32, %c0_i32_0 : i32, i32
  }
  func.func @transform_20(%arg0: i32) -> (i32, i32, i32) {
    %c0_i32 = arith.constant 0 : i32
    %c0_i32_0 = arith.constant 0 : i32
    %c0_i32_1 = arith.constant 0 : i32
    %c0_i32_2 = arith.constant 0 : i32
    return %c0_i32, %c0_i32_0, %c0_i32_1 : i32, i32, i32
  }
  func.func @transform_21(%arg0: i32) -> (i32, i32) {
    %c0_i32 = arith.constant 0 : i32
    %c0_i32_0 = arith.constant 0 : i32
    %c0_i32_1 = arith.constant 0 : i32
    return %c0_i32, %c0_i32_0 : i32, i32
  }
  func.func @transform_22(%arg0: i32) -> (i32, i32, i32) {
    %c0_i32 = arith.constant 0 : i32
    %c0_i32_0 = arith.constant 0 : i32
    %c0_i32_1 = arith.constant 0 : i32
    %c0_i32_2 = arith.constant 0 : i32
    return %c0_i32, %c0_i32_0, %c0_i32_1 : i32, i32, i32
  }
  func.func @transform_23(%arg0: i32) -> (i32, i32) {
    %c0_i32 = arith.constant 0 : i32
    %c0_i32_0 = arith.constant 0 : i32
    %c0_i32_1 = arith.constant 0 : i32
    return %c0_i32, %c0_i32_0 : i32, i32
  }
  func.func @transform_24(%arg0: i32) -> (i32, i32, i32) {
    %c0_i32 = arith.constant 0 : i32
    %c0_i32_0 = arith.constant 0 : i32
    %c0_i32_1 = arith.constant 0 : i32
    %c0_i32_2 = arith.constant 0 : i32
    return %c0_i32, %c0_i32_0, %c0_i32_1 : i32, i32, i32
  }
  func.func @transform_25(%arg0: i32) -> (i32, i32) {
    %c0_i32 = arith.constant 0 : i32
    %c0_i32_0 = arith.constant 0 : i32
    %c0_i32_1 = arith.constant 0 : i32
    return %c0_i32, %c0_i32_0 : i32, i32
  }
  func.func @transform_26(%arg0: i32) -> (i32, i32, i32) {
    %c0_i32 = arith.constant 0 : i32
    %c0_i32_0 = arith.constant 0 : i32
    %c0_i32_1 = arith.constant 0 : i32
    %c0_i32_2 = arith.constant 0 : i32
    return %c0_i32, %c0_i32_0, %c0_i32_1 : i32, i32, i32
  }
  func.func @transform_27(%arg0: i32) -> (i32, i32, i32) {
    %c0_i32 = arith.constant 0 : i32
    %c0_i32_0 = arith.constant 0 : i32
    %c0_i32_1 = arith.constant 0 : i32
    %c0_i32_2 = arith.constant 0 : i32
    return %c0_i32, %c0_i32_0, %c0_i32_1 : i32, i32, i32
  }
  func.func @transform_28(%arg0: i32) -> (i32, i32, i32) {
    %c0_i32 = arith.constant 0 : i32
    %c0_i32_0 = arith.constant 0 : i32
    %c0_i32_1 = arith.constant 0 : i32
    %c0_i32_2 = arith.constant 0 : i32
    return %c0_i32, %c0_i32_0, %c0_i32_1 : i32, i32, i32
  }
  func.func @transform_29(%arg0: i32) -> (i32, i32, i32) {
    %c0_i32 = arith.constant 0 : i32
    %c0_i32_0 = arith.constant 0 : i32
    %c0_i32_1 = arith.constant 0 : i32
    %c0_i32_2 = arith.constant 0 : i32
    return %c0_i32, %c0_i32_0, %c0_i32_1 : i32, i32, i32
  }
  func.func @transform_30(%arg0: i32) -> (i32, i32) {
    %c0_i32 = arith.constant 0 : i32
    %c0_i32_0 = arith.constant 0 : i32
    %c0_i32_1 = arith.constant 0 : i32
    return %c0_i32, %c0_i32_0 : i32, i32
  }
  func.func @transform_31(%arg0: i32) -> (i32, i32, i32) {
    %c0_i32 = arith.constant 0 : i32
    %c0_i32_0 = arith.constant 0 : i32
    %c0_i32_1 = arith.constant 0 : i32
    %c0_i32_2 = arith.constant 0 : i32
    return %c0_i32, %c0_i32_0, %c0_i32_1 : i32, i32, i32
  }
  func.func @transform_32(%arg0: i32) -> (i32, i32) {
    %c0_i32 = arith.constant 0 : i32
    %c0_i32_0 = arith.constant 0 : i32
    %c0_i32_1 = arith.constant 0 : i32
    return %c0_i32, %c0_i32_0 : i32, i32
  }
  func.func @transform_33(%arg0: i32) -> (i32, i32) {
    %c0_i32 = arith.constant 0 : i32
    %c0_i32_0 = arith.constant 0 : i32
    return %arg0, %c0_i32 : i32, i32
  }
}

</mosaic_0001>

<llo_original>
// kernel: tpu_custom_call.1
$region0: #{tpu_custom_call.1}
  #allocation0 [shape = 'u32[]', space=smem, size = 0x4, offset = 0x4, fixed_abs, tag = 'smem constant byte address 0x4 - core index']
  #allocation1 [shape = 'u32[144,128]{1,0:T(1,128)}', space=vmem, size = 0x12000, scoped, tag = 'internal scratch']
  %s0 = inlined_call_operand.smem [shape: u32[34], index: -1, kind: input, shape index: {}]
  %s1 = sld [smem:[%s0]]
  %s2 = scalar_lea.smem %s0, 1
  %s3 = sld [smem:[%s2]]
  %s4 = scalar_lea.smem %s0, 2
  %s5 = sld [smem:[%s4]]
  %s6 = scalar_lea.smem %s0, 3
  %s7 = sld [smem:[%s6]]
  %s8 = scalar_lea.smem %s0, 4
  %s9 = sld [smem:[%s8]]
  %s10 = scalar_lea.smem %s0, 5
  %s11 = sld [smem:[%s10]]
  %s12 = scalar_lea.smem %s0, 6
  %s13 = sld [smem:[%s12]]
  %s14 = scalar_lea.smem %s0, 7
  %s15 = sld [smem:[%s14]]
  %s16 = scalar_lea.smem %s0, 8
  %s17 = sld [smem:[%s16]]
  %s18 = scalar_lea.smem %s0, 9
  %s19 = sld [smem:[%s18]]
  %s20 = scalar_lea.smem %s0, 10
  %s21 = sld [smem:[%s20]]
  %s22 = scalar_lea.smem %s0, 11
  %s23 = sld [smem:[%s22]]
  %s24 = scalar_lea.smem %s0, 12
  %s25 = sld [smem:[%s24]]
  %s26 = scalar_lea.smem %s0, 13
  %s27 = sld [smem:[%s26]]
  %s28 = scalar_lea.smem %s0, 14
  %s29 = sld [smem:[%s28]]
  %s30 = scalar_lea.smem %s0, 15
  %s31 = sld [smem:[%s30]]
  %s32 = scalar_lea.smem %s0, 16
  %s33 = sld [smem:[%s32]]
  %s34 = scalar_lea.smem %s0, 17
  %s35 = sld [smem:[%s34]]
  %s36 = scalar_lea.smem %s0, 18
  %s37 = sld [smem:[%s36]]
  %s38 = scalar_lea.smem %s0, 19
  %s39 = sld [smem:[%s38]]
  %s40 = scalar_lea.smem %s0, 20
  %s41 = sld [smem:[%s40]]
  %s42 = scalar_lea.smem %s0, 21
  %s43 = sld [smem:[%s42]]
  %s44 = scalar_lea.smem %s0, 22
  %s45 = sld [smem:[%s44]]
  %s46 = scalar_lea.smem %s0, 23
  %s47 = sld [smem:[%s46]]
  %s48 = scalar_lea.smem %s0, 24
  %s49 = sld [smem:[%s48]]
  %s50 = scalar_lea.smem %s0, 25
  %s51 = sld [smem:[%s50]]
  %s52 = scalar_lea.smem %s0, 26
  %s53 = sld [smem:[%s52]]
  %s54 = scalar_lea.smem %s0, 27
  %s55 = sld [smem:[%s54]]
  %s56 = scalar_lea.smem %s0, 28
  %s57 = sld [smem:[%s56]]
  %s58 = scalar_lea.smem %s0, 29
  %s59 = sld [smem:[%s58]]
  %s60 = scalar_lea.smem %s0, 30
  %s61 = sld [smem:[%s60]]
  %s62 = scalar_lea.smem %s0, 31
  %s63 = sld [smem:[%s62]]
  %s64 = scalar_lea.smem %s0, 32
  %s65 = sld [smem:[%s64]]
  %s66 = scalar_lea.smem %s0, 33
  %s67 = sld [smem:[%s66]]
  %s68 = sld [smem:[#allocation0]]
  $region210: #{tpu_custom_call.1} parent=0
    _
  %s70 = ssub.s32 1, %s68
  %s71 = scalar_select 0, %s70, %s68
  $region1: #{tpu_custom_call.1} parent=0
    #allocation2 [shape = 'u8[32768]{0}', space=vmem, size = 0x8000, scoped, tag = 'input window, operand 0, single buffered']
    #allocation3 [shape = 's32[1]{0}', space=sflag, size = 0x4, scoped, tag = 'scoped memory for tpu_custom_call.1']
    #allocation4 [shape = 's32[1]{0}', space=sflag, size = 0x4, scoped, tag = 'scoped memory for tpu_custom_call.1']
    #allocation5 [shape = 'u8[65536]{0}', space=vmem, size = 0x10000, scoped, tag = 'input window, operand 2, single buffered']
    #allocation6 [shape = 's32[1]{0}', space=sflag, size = 0x4, scoped, tag = 'scoped memory for tpu_custom_call.1']
    #allocation7 [shape = 'u8[65536]{0}', space=vmem, size = 0x10000, scoped, tag = 'input window, operand 6, single buffered']
    #allocation8 [shape = 'u8[98304]{0}', space=vmem, size = 0x18000, scoped, tag = 'input window, operand 8, single buffered']
    #allocation9 [shape = 's32[1]{0}', space=sflag, size = 0x4, scoped, tag = 'scoped memory for tpu_custom_call.1']
    #allocation10 [shape = 'u8[98304]{0}', space=vmem, size = 0x18000, scoped, tag = 'input window, operand 10, single buffered']
    #allocation11 [shape = 'u8[65536]{0}', space=vmem, size = 0x10000, scoped, tag = 'input window, operand 12, single buffered']
    #allocation12 [shape = 's32[1]{0}', space=sflag, size = 0x4, scoped, tag = 'scoped memory for tpu_custom_call.1']
    #allocation13 [shape = 'u8[32768]{0}', space=vmem, size = 0x8000, scoped, tag = 'input window, operand 14, single buffered']
    #allocation14 [shape = 'u8[98304]{0}', space=vmem, size = 0x18000, scoped, tag = 'input window, operand 16, single buffered']
    #allocation15 [shape = 's32[1]{0}', space=sflag, size = 0x4, scoped, tag = 'scoped memory for tpu_custom_call.1']
    #allocation16 [shape = 'u8[65536]{0}', space=vmem, size = 0x10000, scoped, tag = 'input window, operand 18, single buffered']
    #allocation17 [shape = 'u8[32768]{0}', space=vmem, size = 0x8000, scoped, tag = 'input window, operand 20, single buffered']
    #allocation18 [shape = 's32[1]{0}', space=sflag, size = 0x4, scoped, tag = 'scoped memory for tpu_custom_call.1']
    #allocation19 [shape = 'u8[98304]{0}', space=vmem, size = 0x18000, scoped, tag = 'input window, operand 22, single buffered']
    #allocation20 [shape = 'u8[98304]{0}', space=vmem, size = 0x18000, scoped, tag = 'input window, operand 24, single buffered']
    #allocation21 [shape = 's32[1]{0}', space=sflag, size = 0x4, scoped, tag = 'scoped memory for tpu_custom_call.1']
    #allocation22 [shape = 'u8[65536]{0}', space=vmem, size = 0x10000, scoped, tag = 'input window, operand 26, single buffered']
    #allocation23 [shape = 'u8[65536]{0}', space=vmem, size = 0x10000, scoped, tag = 'input window, operand 27, single buffered']
    #allocation24 [shape = 's32[1]{0}', space=sflag, size = 0x4, scoped, tag = 'scoped memory for tpu_custom_call.1']
    #allocation25 [shape = 'u8[65536]{0}', space=vmem, size = 0x10000, scoped, tag = 'input window, operand 28, single buffered']
    #allocation26 [shape = 'u8[65536]{0}', space=vmem, size = 0x10000, scoped, tag = 'input window, operand 29, single buffered']
    #allocation27 [shape = 's32[1]{0}', space=sflag, size = 0x4, scoped, tag = 'scoped memory for tpu_custom_call.1']
    #allocation28 [shape = 'u8[262144]{0}', space=vmem, size = 0x40000, scoped, tag = 'input window, operand 31, single buffered']
    #allocation29 [shape = 'u8[32768]{0}', space=vmem, size = 0x8000, scoped, tag = 'output window, operand 0, single buffered']
    %72 = vsyncpa [#allocation3], 0
    %73 = vsyncpa [#allocation6], 0
    %74 = vsyncpa [#allocation9], 0
    %75 = vsyncpa [#allocation12], 0
    %76 = vsyncpa [#allocation15], 0
    %77 = vsyncpa [#allocation18], 0
    %78 = vsyncpa [#allocation21], 0
    %79 = vsyncpa [#allocation24], 0
    %80 = vsyncpa [#allocation27], 0
    %81 = vsyncpa [#allocation4], 0
    // Predicated region
    $region2: #{tpu_custom_call.1} parent=1 // pred_check
      _
    $region3: #{tpu_custom_call.1} parent=1 // pred_check_branch
      %83 = sbr.rel (0) target = $region5
    $region4: #{tpu_custom_call.1} parent=1 // pred_region
      %s85 = ssub.s32 1024, 1024
      %86 = vsyncadd [#allocation3], %s85
      %s87 = sshll.u32 [#allocation2], 4
      %s88 = int_to_ptr.vmem [resolvable:$true] %s87
      %93 = dma.hbm_to_vmem [thread:$0]  %s1, 1024, %s88, [#allocation3], 256, 256, 16
    $region5: #{tpu_custom_call.1} parent=1 // pred_fallthru
      _
    // Predicated region
    $region6: #{tpu_custom_call.1} parent=1 // pred_check
      _
    $region7: #{tpu_custom_call.1} parent=1 // pred_check_branch
      %95 = sbr.rel (0) target = $region9
    $region8: #{tpu_custom_call.1} parent=1 // pred_region
      _
    $region9: #{tpu_custom_call.1} parent=1 // pred_fallthru
      _
    // Predicated region
    $region10: #{tpu_custom_call.1} parent=1 // pred_check
      _
    $region11: #{tpu_custom_call.1} parent=1 // pred_check_branch
      %97 = sbr.rel (0) target = $region13
    $region12: #{tpu_custom_call.1} parent=1 // pred_region
      %s99 = ssub.s32 2048, 2048
      %100 = vsyncadd [#allocation6], %s99
      %s101 = sshll.u32 [#allocation5], 4
      %s102 = int_to_ptr.vmem [resolvable:$true] %s101
      %107 = dma.hbm_to_vmem [thread:$0]  %s5, 2048, %s102, [#allocation6], 64, 64, 4
    $region13: #{tpu_custom_call.1} parent=1 // pred_fallthru
      _
    // Predicated region
    $region14: #{tpu_custom_call.1} parent=1 // pred_check
      _
    $region15: #{tpu_custom_call.1} parent=1 // pred_check_branch
      %109 = sbr.rel (0) target = $region17
    $region16: #{tpu_custom_call.1} parent=1 // pred_region
      _
    $region17: #{tpu_custom_call.1} parent=1 // pred_fallthru
      _
    // Predicated region
    $region18: #{tpu_custom_call.1} parent=1 // pred_check
      _
    $region19: #{tpu_custom_call.1} parent=1 // pred_check_branch
      %111 = sbr.rel (0) target = $region21
    $region20: #{tpu_custom_call.1} parent=1 // pred_region
      _
    $region21: #{tpu_custom_call.1} parent=1 // pred_fallthru
      _
    // Predicated region
    $region22: #{tpu_custom_call.1} parent=1 // pred_check
      _
    $region23: #{tpu_custom_call.1} parent=1 // pred_check_branch
      %113 = sbr.rel (0) target = $region25
    $region24: #{tpu_custom_call.1} parent=1 // pred_region
      _
    $region25: #{tpu_custom_call.1} parent=1 // pred_fallthru
      _
    // Predicated region
    $region26: #{tpu_custom_call.1} parent=1 // pred_check
      _
    $region27: #{tpu_custom_call.1} parent=1 // pred_check_branch
      %115 = sbr.rel (0) target = $region29
    $region28: #{tpu_custom_call.1} parent=1 // pred_region
      %s117 = ssub.s32 2048, 2048
      %118 = vsyncadd [#allocation6], %s117
      %s119 = sshll.u32 [#allocation7], 4
      %s120 = int_to_ptr.vmem [resolvable:$true] %s119
      %125 = dma.hbm_to_vmem [thread:$0]  %s13, 2048, %s120, [#allocation6], 64, 64, 4
    $region29: #{tpu_custom_call.1} parent=1 // pred_fallthru
      _
    // Predicated region
    $region30: #{tpu_custom_call.1} parent=1 // pred_check
      _
    $region31: #{tpu_custom_call.1} parent=1 // pred_check_branch
      %127 = sbr.rel (0) target = $region33
    $region32: #{tpu_custom_call.1} parent=1 // pred_region
      _
    $region33: #{tpu_custom_call.1} parent=1 // pred_fallthru
      _
    // Predicated region
    $region34: #{tpu_custom_call.1} parent=1 // pred_check
      _
    $region35: #{tpu_custom_call.1} parent=1 // pred_check_branch
      %129 = sbr.rel (0) target = $region37
    $region36: #{tpu_custom_call.1} parent=1 // pred_region
      %s131 = ssub.s32 3072, 3072
      %132 = vsyncadd [#allocation9], %s131
      %s133 = sshll.u32 [#allocation8], 4
      %s134 = int_to_ptr.vmem [resolvable:$true] %s133
      %139 = dma.hbm_to_vmem [thread:$0]  %s17, 3072, %s134, [#allocation9], 64, 64, 4
    $region37: #{tpu_custom_call.1} parent=1 // pred_fallthru
      _
    // Predicated region
    $region38: #{tpu_custom_call.1} parent=1 // pred_check
      _
    $region39: #{tpu_custom_call.1} parent=1 // pred_check_branch
      %141 = sbr.rel (0) target = $region41
    $region40: #{tpu_custom_call.1} parent=1 // pred_region
      _
    $region41: #{tpu_custom_call.1} parent=1 // pred_fallthru
      _
    // Predicated region
    $region42: #{tpu_custom_call.1} parent=1 // pred_check
      _
    $region43: #{tpu_custom_call.1} parent=1 // pred_check_branch
      %143 = sbr.rel (0) target = $region45
    $region44: #{tpu_custom_call.1} parent=1 // pred_region
      %s145 = ssub.s32 3072, 3072
      %146 = vsyncadd [#allocation9], %s145
      %s147 = sshll.u32 [#allocation10], 4
      %s148 = int_to_ptr.vmem [resolvable:$true] %s147
      %153 = dma.hbm_to_vmem [thread:$0]  %s21, 3072, %s148, [#allocation9], 64, 64, 4
    $region45: #{tpu_custom_call.1} parent=1 // pred_fallthru
      _
    // Predicated region
    $region46: #{tpu_custom_call.1} parent=1 // pred_check
      _
    $region47: #{tpu_custom_call.1} parent=1 // pred_check_branch
      %155 = sbr.rel (0) target = $region49
    $region48: #{tpu_custom_call.1} parent=1 // pred_region
      _
    $region49: #{tpu_custom_call.1} parent=1 // pred_fallthru
      _
    // Predicated region
    $region50: #{tpu_custom_call.1} parent=1 // pred_check
      _
    $region51: #{tpu_custom_call.1} parent=1 // pred_check_branch
      %157 = sbr.rel (0) target = $region53
    $region52: #{tpu_custom_call.1} parent=1 // pred_region
      %s159 = ssub.s32 2048, 2048
      %160 = vsyncadd [#allocation12], %s159
      %s161 = sshll.u32 [#allocation11], 4
      %s162 = int_to_ptr.vmem [resolvable:$true] %s161
      %167 = dma.hbm_to_vmem [thread:$0]  %s25, 2048, %s162, [#allocation12], 64, 64, 4
    $region53: #{tpu_custom_call.1} parent=1 // pred_fallthru
      _
    // Predicated region
    $region54: #{tpu_custom_call.1} parent=1 // pred_check
      _
    $region55: #{tpu_custom_call.1} parent=1 // pred_check_branch
      %169 = sbr.rel (0) target = $region57
    $region56: #{tpu_custom_call.1} parent=1 // pred_region
      _
    $region57: #{tpu_custom_call.1} parent=1 // pred_fallthru
      _
    // Predicated region
    $region58: #{tpu_custom_call.1} parent=1 // pred_check
      _
    $region59: #{tpu_custom_call.1} parent=1 // pred_check_branch
      %171 = sbr.rel (0) target = $region61
    $region60: #{tpu_custom_call.1} parent=1 // pred_region
      %s173 = ssub.s32 1024, 1024
      %174 = vsyncadd [#allocation12], %s173
      %s175 = sshll.u32 [#allocation13], 4
      %s176 = int_to_ptr.vmem [resolvable:$true] %s175
      %181 = dma.hbm_to_vmem [thread:$0]  %s29, 1024, %s176, [#allocation12], 64, 64, 4
    $region61: #{tpu_custom_call.1} parent=1 // pred_fallthru
      _
    // Predicated region
    $region62: #{tpu_custom_call.1} parent=1 // pred_check
      _
    $region63: #{tpu_custom_call.1} parent=1 // pred_check_branch
      %183 = sbr.rel (0) target = $region65
    $region64: #{tpu_custom_call.1} parent=1 // pred_region
      _
    $region65: #{tpu_custom_call.1} parent=1 // pred_fallthru
      _
    // Predicated region
    $region66: #{tpu_custom_call.1} parent=1 // pred_check
      _
    $region67: #{tpu_custom_call.1} parent=1 // pred_check_branch
      %185 = sbr.rel (0) target = $region69
    $region68: #{tpu_custom_call.1} parent=1 // pred_region
      %s187 = ssub.s32 3072, 3072
      %188 = vsyncadd [#allocation15], %s187
      %s189 = sshll.u32 [#allocation14], 4
      %s190 = int_to_ptr.vmem [resolvable:$true] %s189
      %195 = dma.hbm_to_vmem [thread:$0]  %s33, 3072, %s190, [#allocation15], 64, 64, 4
    $region69: #{tpu_custom_call.1} parent=1 // pred_fallthru
      _
    // Predicated region
    $region70: #{tpu_custom_call.1} parent=1 // pred_check
      _
    $region71: #{tpu_custom_call.1} parent=1 // pred_check_branch
      %197 = sbr.rel (0) target = $region73
    $region72: #{tpu_custom_call.1} parent=1 // pred_region
      _
    $region73: #{tpu_custom_call.1} parent=1 // pred_fallthru
      _
    // Predicated region
    $region74: #{tpu_custom_call.1} parent=1 // pred_check
      _
    $region75: #{tpu_custom_call.1} parent=1 // pred_check_branch
      %199 = sbr.rel (0) target = $region77
    $region76: #{tpu_custom_call.1} parent=1 // pred_region
      %s201 = ssub.s32 2048, 2048
      %202 = vsyncadd [#allocation15], %s201
      %s203 = sshll.u32 [#allocation16], 4
      %s204 = int_to_ptr.vmem [resolvable:$true] %s203
      %209 = dma.hbm_to_vmem [thread:$0]  %s37, 2048, %s204, [#allocation15], 64, 64, 4
    $region77: #{tpu_custom_call.1} parent=1 // pred_fallthru
      _
    // Predicated region
    $region78: #{tpu_custom_call.1} parent=1 // pred_check
      _
    $region79: #{tpu_custom_call.1} parent=1 // pred_check_branch
      %211 = sbr.rel (0) target = $region81
    $region80: #{tpu_custom_call.1} parent=1 // pred_region
      _
    $region81: #{tpu_custom_call.1} parent=1 // pred_fallthru
      _
    // Predicated region
    $region82: #{tpu_custom_call.1} parent=1 // pred_check
      _
    $region83: #{tpu_custom_call.1} parent=1 // pred_check_branch
      %213 = sbr.rel (0) target = $region85
    $region84: #{tpu_custom_call.1} parent=1 // pred_region
      %s215 = ssub.s32 1024, 1024
      %216 = vsyncadd [#allocation18], %s215
      %s217 = sshll.u32 [#allocation17], 4
      %s218 = int_to_ptr.vmem [resolvable:$true] %s217
      %223 = dma.hbm_to_vmem [thread:$0]  %s41, 1024, %s218, [#allocation18], 64, 64, 4
    $region85: #{tpu_custom_call.1} parent=1 // pred_fallthru
      _
    // Predicated region
    $region86: #{tpu_custom_call.1} parent=1 // pred_check
      _
    $region87: #{tpu_custom_call.1} parent=1 // pred_check_branch
      %225 = sbr.rel (0) target = $region89
    $region88: #{tpu_custom_call.1} parent=1 // pred_region
      _
    $region89: #{tpu_custom_call.1} parent=1 // pred_fallthru
      _
    // Predicated region
    $region90: #{tpu_custom_call.1} parent=1 // pred_check
      _
    $region91: #{tpu_custom_call.1} parent=1 // pred_check_branch
      %227 = sbr.rel (0) target = $region93
    $region92: #{tpu_custom_call.1} parent=1 // pred_region
      %s229 = ssub.s32 3072, 3072
      %230 = vsyncadd [#allocation18], %s229
      %s231 = sshll.u32 [#allocation19], 4
      %s232 = int_to_ptr.vmem [resolvable:$true] %s231
      %237 = dma.hbm_to_vmem [thread:$0]  %s45, 3072, %s232, [#allocation18], 64, 64, 4
    $region93: #{tpu_custom_call.1} parent=1 // pred_fallthru
      _
    // Predicated region
    $region94: #{tpu_custom_call.1} parent=1 // pred_check
      _
    $region95: #{tpu_custom_call.1} parent=1 // pred_check_branch
      %239 = sbr.rel (0) target = $region97
    $region96: #{tpu_custom_call.1} parent=1 // pred_region
      _
    $region97: #{tpu_custom_call.1} parent=1 // pred_fallthru
      _
    // Predicated region
    $region98: #{tpu_custom_call.1} parent=1 // pred_check
      _
    $region99: #{tpu_custom_call.1} parent=1 // pred_check_branch
      %241 = sbr.rel (0) target = $region101
    $region100: #{tpu_custom_call.1} parent=1 // pred_region
      %s243 = ssub.s32 3072, 3072
      %244 = vsyncadd [#allocation21], %s243
      %s245 = sshll.u32 [#allocation20], 4
      %s246 = int_to_ptr.vmem [resolvable:$true] %s245
      %251 = dma.hbm_to_vmem [thread:$0]  %s49, 3072, %s246, [#allocation21], 64, 64, 4
    $region101: #{tpu_custom_call.1} parent=1 // pred_fallthru
      _
    // Predicated region
    $region102: #{tpu_custom_call.1} parent=1 // pred_check
      _
    $region103: #{tpu_custom_call.1} parent=1 // pred_check_branch
      %253 = sbr.rel (0) target = $region105
    $region104: #{tpu_custom_call.1} parent=1 // pred_region
      _
    $region105: #{tpu_custom_call.1} parent=1 // pred_fallthru
      _
    // Predicated region
    $region106: #{tpu_custom_call.1} parent=1 // pred_check
      _
    $region107: #{tpu_custom_call.1} parent=1 // pred_check_branch
      %255 = sbr.rel (0) target = $region109
    $region108: #{tpu_custom_call.1} parent=1 // pred_region
      %s257 = ssub.s32 2048, 2048
      %258 = vsyncadd [#allocation21], %s257
      %s259 = sshll.u32 [#allocation22], 4
      %s260 = int_to_ptr.vmem [resolvable:$true] %s259
      %265 = dma.hbm_to_vmem [thread:$0]  %s53, 2048, %s260, [#allocation21], 128, 128, 8
    $region109: #{tpu_custom_call.1} parent=1 // pred_fallthru
      _
    // Predicated region
    $region110: #{tpu_custom_call.1} parent=1 // pred_check
      _
    $region111: #{tpu_custom_call.1} parent=1 // pred_check_branch
      %267 = sbr.rel (0) target = $region113
    $region112: #{tpu_custom_call.1} parent=1 // pred_region
      %s269 = ssub.s32 2048, 2048
      %270 = vsyncadd [#allocation24], %s269
      %s271 = sshll.u32 [#allocation23], 4
      %s272 = int_to_ptr.vmem [resolvable:$true] %s271
      %277 = dma.hbm_to_vmem [thread:$0]  %s55, 2048, %s272, [#allocation24], 128, 128, 8
    $region113: #{tpu_custom_call.1} parent=1 // pred_fallthru
      _
    // Predicated region
    $region114: #{tpu_custom_call.1} parent=1 // pred_check
      _
    $region115: #{tpu_custom_call.1} parent=1 // pred_check_branch
      %279 = sbr.rel (0) target = $region117
    $region116: #{tpu_custom_call.1} parent=1 // pred_region
      %s281 = ssub.s32 2048, 2048
      %282 = vsyncadd [#allocation24], %s281
      %s283 = sshll.u32 [#allocation25], 4
      %s284 = int_to_ptr.vmem [resolvable:$true] %s283
      %289 = dma.hbm_to_vmem [thread:$0]  %s57, 2048, %s284, [#allocation24], 128, 128, 8
    $region117: #{tpu_custom_call.1} parent=1 // pred_fallthru
      _
    // Predicated region
    $region118: #{tpu_custom_call.1} parent=1 // pred_check
      _
    $region119: #{tpu_custom_call.1} parent=1 // pred_check_branch
      %291 = sbr.rel (0) target = $region121
    $region120: #{tpu_custom_call.1} parent=1 // pred_region
      %s293 = ssub.s32 2048, 2048
      %294 = vsyncadd [#allocation27], %s293
      %s295 = sshll.u32 [#allocation26], 4
      %s296 = int_to_ptr.vmem [resolvable:$true] %s295
      %301 = dma.hbm_to_vmem [thread:$0]  %s59, 2048, %s296, [#allocation27], 128, 128, 8
    $region121: #{tpu_custom_call.1} parent=1 // pred_fallthru
      _
    // Predicated region
    $region122: #{tpu_custom_call.1} parent=1 // pred_check
      _
    $region123: #{tpu_custom_call.1} parent=1 // pred_check_branch
      %303 = sbr.rel (0) target = $region125
    $region124: #{tpu_custom_call.1} parent=1 // pred_region
      _
    $region125: #{tpu_custom_call.1} parent=1 // pred_fallthru
      _
    // Predicated region
    $region126: #{tpu_custom_call.1} parent=1 // pred_check
      _
    $region127: #{tpu_custom_call.1} parent=1 // pred_check_branch
      %305 = sbr.rel (0) target = $region129
    $region128: #{tpu_custom_call.1} parent=1 // pred_region
      %s307 = ssub.s32 8192, 8192
      %308 = vsyncadd [#allocation27], %s307
      %s309 = sshll.u32 [#allocation28], 4
      %s310 = int_to_ptr.vmem [resolvable:$true] %s309
      %315 = dma.hbm_to_vmem [thread:$0]  %s63, 8192, %s310, [#allocation27], 256, 256, 16
    $region129: #{tpu_custom_call.1} parent=1 // pred_fallthru
      _
    // Predicated region
    $region130: #{tpu_custom_call.1} parent=1 // pred_check
      _
    $region131: #{tpu_custom_call.1} parent=1 // pred_check_branch
      %317 = sbr.rel (0) target = $region133
    $region132: #{tpu_custom_call.1} parent=1 // pred_region
      _
    $region133: #{tpu_custom_call.1} parent=1 // pred_fallthru
      _
    // Predicated region
    $region134: #{tpu_custom_call.1} parent=1 // pred_check
      _
    $region135: #{tpu_custom_call.1} parent=1 // pred_check_branch
      %319 = sbr.rel (0) target = $region137
    $region136: #{tpu_custom_call.1} parent=1 // pred_region
      %320 = dma.done [#allocation3], 1024
    $region137: #{tpu_custom_call.1} parent=1 // pred_fallthru
      _
    // Predicated region
    $region138: #{tpu_custom_call.1} parent=1 // pred_check
      _
    $region139: #{tpu_custom_call.1} parent=1 // pred_check_branch
      %322 = sbr.rel (0) target = $region141
    $region140: #{tpu_custom_call.1} parent=1 // pred_region
      %323 = dma.done [#allocation6], 2048
    $region141: #{tpu_custom_call.1} parent=1 // pred_fallthru
      _
    // Predicated region
    $region142: #{tpu_custom_call.1} parent=1 // pred_check
      _
    $region143: #{tpu_custom_call.1} parent=1 // pred_check_branch
      %325 = sbr.rel (0) target = $region145
    $region144: #{tpu_custom_call.1} parent=1 // pred_region
      %326 = dma.done [#allocation6], 2048
    $region145: #{tpu_custom_call.1} parent=1 // pred_fallthru
      _
    // Predicated region
    $region146: #{tpu_custom_call.1} parent=1 // pred_check
      _
    $region147: #{tpu_custom_call.1} parent=1 // pred_check_branch
      %328 = sbr.rel (0) target = $region149
    $region148: #{tpu_custom_call.1} parent=1 // pred_region
      %329 = dma.done [#allocation9], 3072
    $region149: #{tpu_custom_call.1} parent=1 // pred_fallthru
      _
    // Predicated region
    $region150: #{tpu_custom_call.1} parent=1 // pred_check
      _
    $region151: #{tpu_custom_call.1} parent=1 // pred_check_branch
      %331 = sbr.rel (0) target = $region153
    $region152: #{tpu_custom_call.1} parent=1 // pred_region
      %332 = dma.done [#allocation9], 3072
    $region153: #{tpu_custom_call.1} parent=1 // pred_fallthru
      _
    // Predicated region
    $region154: #{tpu_custom_call.1} parent=1 // pred_check
      _
    $region155: #{tpu_custom_call.1} parent=1 // pred_check_branch
      %334 = sbr.rel (0) target = $region157
    $region156: #{tpu_custom_call.1} parent=1 // pred_region
      %335 = dma.done [#allocation12], 2048
    $region157: #{tpu_custom_call.1} parent=1 // pred_fallthru
      _
    // Predicated region
    $region158: #{tpu_custom_call.1} parent=1 // pred_check
      _
    $region159: #{tpu_custom_call.1} parent=1 // pred_check_branch
      %337 = sbr.rel (0) target = $region161
    $region160: #{tpu_custom_call.1} parent=1 // pred_region
      %338 = dma.done [#allocation12], 1024
    $region161: #{tpu_custom_call.1} parent=1 // pred_fallthru
      _
    // Predicated region
    $region162: #{tpu_custom_call.1} parent=1 // pred_check
      _
    $region163: #{tpu_custom_call.1} parent=1 // pred_check_branch
      %340 = sbr.rel (0) target = $region165
    $region164: #{tpu_custom_call.1} parent=1 // pred_region
      %341 = dma.done [#allocation15], 3072
    $region165: #{tpu_custom_call.1} parent=1 // pred_fallthru
      _
    // Predicated region
    $region166: #{tpu_custom_call.1} parent=1 // pred_check
      _
    $region167: #{tpu_custom_call.1} parent=1 // pred_check_branch
      %343 = sbr.rel (0) target = $region169
    $region168: #{tpu_custom_call.1} parent=1 // pred_region
      %344 = dma.done [#allocation15], 2048
    $region169: #{tpu_custom_call.1} parent=1 // pred_fallthru
      _
    // Predicated region
    $region170: #{tpu_custom_call.1} parent=1 // pred_check
      _
    $region171: #{tpu_custom_call.1} parent=1 // pred_check_branch
      %346 = sbr.rel (0) target = $region173
    $region172: #{tpu_custom_call.1} parent=1 // pred_region
      %347 = dma.done [#allocation18], 1024
    $region173: #{tpu_custom_call.1} parent=1 // pred_fallthru
      _
    // Predicated region
    $region174: #{tpu_custom_call.1} parent=1 // pred_check
      _
    $region175: #{tpu_custom_call.1} parent=1 // pred_check_branch
      %349 = sbr.rel (0) target = $region177
    $region176: #{tpu_custom_call.1} parent=1 // pred_region
      %350 = dma.done [#allocation18], 3072
    $region177: #{tpu_custom_call.1} parent=1 // pred_fallthru
      _
    // Predicated region
    $region178: #{tpu_custom_call.1} parent=1 // pred_check
      _
    $region179: #{tpu_custom_call.1} parent=1 // pred_check_branch
      %352 = sbr.rel (0) target = $region181
    $region180: #{tpu_custom_call.1} parent=1 // pred_region
      %353 = dma.done [#allocation21], 3072
    $region181: #{tpu_custom_call.1} parent=1 // pred_fallthru
      _
    // Predicated region
    $region182: #{tpu_custom_call.1} parent=1 // pred_check
      _
    $region183: #{tpu_custom_call.1} parent=1 // pred_check_branch
      %355 = sbr.rel (0) target = $region185
    $region184: #{tpu_custom_call.1} parent=1 // pred_region
      %356 = dma.done [#allocation21], 2048
    $region185: #{tpu_custom_call.1} parent=1 // pred_fallthru
      _
    // Predicated region
    $region186: #{tpu_custom_call.1} parent=1 // pred_check
      _
    $region187: #{tpu_custom_call.1} parent=1 // pred_check_branch
      %358 = sbr.rel (0) target = $region189
    $region188: #{tpu_custom_call.1} parent=1 // pred_region
      %359 = dma.done [#allocation24], 2048
    $region189: #{tpu_custom_call.1} parent=1 // pred_fallthru
      _
    // Predicated region
    $region190: #{tpu_custom_call.1} parent=1 // pred_check
      _
    $region191: #{tpu_custom_call.1} parent=1 // pred_check_branch
      %361 = sbr.rel (0) target = $region193
    $region192: #{tpu_custom_call.1} parent=1 // pred_region
      %362 = dma.done [#allocation24], 2048
    $region193: #{tpu_custom_call.1} parent=1 // pred_fallthru
      _
    // Predicated region
    $region194: #{tpu_custom_call.1} parent=1 // pred_check
      _
    $region195: #{tpu_custom_call.1} parent=1 // pred_check_branch
      %364 = sbr.rel (0) target = $region197
    $region196: #{tpu_custom_call.1} parent=1 // pred_region
      %365 = dma.done [#allocation27], 2048
    $region197: #{tpu_custom_call.1} parent=1 // pred_fallthru
      _
    // Predicated region
    $region198: #{tpu_custom_call.1} parent=1 // pred_check
      _
    $region199: #{tpu_custom_call.1} parent=1 // pred_check_branch
      %367 = sbr.rel (0) target = $region201
    $region200: #{tpu_custom_call.1} parent=1 // pred_region
      %368 = dma.done [#allocation27], 8192
    $region201: #{tpu_custom_call.1} parent=1 // pred_fallthru
      _
    %v370 = vld [vmem:[#allocation2] sm:$0xff]
    %v371 = vld [vmem:[#allocation2 + $0x8] sm:$0xff]
    %v372 = vld [vmem:[#allocation2 + $0x10] sm:$0xff]
    %v373 = vld [vmem:[#allocation2 + $0x18] sm:$0xff]
    %v374 = vld [vmem:[#allocation2 + $0x20] sm:$0xff]
    %v375 = vld [vmem:[#allocation2 + $0x28] sm:$0xff]
    %v376 = vld [vmem:[#allocation2 + $0x30] sm:$0xff]
    %v377 = vld [vmem:[#allocation2 + $0x38] sm:$0xff]
    %v378 = vpack.c.bf16 %v372, %v370
    %v379 = vpack.c.bf16 %v373, %v371
    %v380 = vpack.c.bf16 %v376, %v374
    %v381 = vpack.c.bf16 %v377, %v375
    %v382 = vld [vmem:[#allocation5] sm:$0xf]
    %v383 = vld [vmem:[#allocation5 + $0x4] sm:$0xf]
    %v384 = vld [vmem:[#allocation5 + $0x8] sm:$0xf]
    %v385 = vld [vmem:[#allocation5 + $0xc] sm:$0xf]
    %v386 = vld [vmem:[#allocation5 + $0x10] sm:$0xf]
    %v387 = vld [vmem:[#allocation5 + $0x14] sm:$0xf]
    %v388 = vld [vmem:[#allocation5 + $0x18] sm:$0xf]
    %v389 = vld [vmem:[#allocation5 + $0x1c] sm:$0xf]
    %v390 = vld [vmem:[#allocation5 + $0x20] sm:$0xf]
    %v391 = vld [vmem:[#allocation5 + $0x24] sm:$0xf]
    %v392 = vld [vmem:[#allocation5 + $0x28] sm:$0xf]
    %v393 = vld [vmem:[#allocation5 + $0x2c] sm:$0xf]
    %v394 = vld [vmem:[#allocation5 + $0x30] sm:$0xf]
    %v395 = vld [vmem:[#allocation5 + $0x34] sm:$0xf]
    %v396 = vld [vmem:[#allocation5 + $0x38] sm:$0xf]
    %v397 = vld [vmem:[#allocation5 + $0x3c] sm:$0xf]
    %v398 = vld [vmem:[#allocation5 + $0x40] sm:$0xf]
    %v399 = vld [vmem:[#allocation5 + $0x44] sm:$0xf]
    %v400 = vld [vmem:[#allocation5 + $0x48] sm:$0xf]
    %v401 = vld [vmem:[#allocation5 + $0x4c] sm:$0xf]
    %v402 = vld [vmem:[#allocation5 + $0x50] sm:$0xf]
    %v403 = vld [vmem:[#allocation5 + $0x54] sm:$0xf]
    %v404 = vld [vmem:[#allocation5 + $0x58] sm:$0xf]
    %v405 = vld [vmem:[#allocation5 + $0x5c] sm:$0xf]
    %v406 = vld [vmem:[#allocation5 + $0x60] sm:$0xf]
    %v407 = vld [vmem:[#allocation5 + $0x64] sm:$0xf]
    %v408 = vld [vmem:[#allocation5 + $0x68] sm:$0xf]
    %v409 = vld [vmem:[#allocation5 + $0x6c] sm:$0xf]
    %v410 = vld [vmem:[#allocation5 + $0x70] sm:$0xf]
    %v411 = vld [vmem:[#allocation5 + $0x74] sm:$0xf]
    %v412 = vld [vmem:[#allocation5 + $0x78] sm:$0xf]
    %v413 = vld [vmem:[#allocation5 + $0x7c] sm:$0xf]
    %v414 = vld [vmem:[%s7] sm:$0x1]
    %v416 = vlaneseq
    %v417 = vshrl.u32 %v416, 7
    %v418 = vsub.s32 0, %v417
    %v419 = vrot.slane %v414, %v418
    %v453 = vunpack.c.l.b16 %v382
    %v454 = vunpack.c.l.b16 %v383
    %v455 = vunpack.c.l.b16 %v384
    %v456 = vunpack.c.l.b16 %v385
    %v457 = vunpack.c.l.b16 %v386
    %v458 = vunpack.c.l.b16 %v387
    %v459 = vunpack.c.l.b16 %v388
    %v460 = vunpack.c.l.b16 %v389
    %v461 = vunpack.c.l.b16 %v390
    %v462 = vunpack.c.l.b16 %v391
    %v463 = vunpack.c.l.b16 %v392
    %v464 = vunpack.c.l.b16 %v393
    %v465 = vunpack.c.l.b16 %v394
    %v466 = vunpack.c.l.b16 %v395
    %v467 = vunpack.c.l.b16 %v396
    %v468 = vunpack.c.l.b16 %v397
    %v469 = vunpack.c.l.b16 %v398
    %v470 = vunpack.c.l.b16 %v399
    %v471 = vunpack.c.l.b16 %v400
    %v472 = vunpack.c.l.b16 %v401
    %v473 = vunpack.c.l.b16 %v402
    %v474 = vunpack.c.l.b16 %v403
    %v475 = vunpack.c.l.b16 %v404
    %v476 = vunpack.c.l.b16 %v405
    %v477 = vunpack.c.l.b16 %v406
    %v478 = vunpack.c.l.b16 %v407
    %v479 = vunpack.c.l.b16 %v408
    %v480 = vunpack.c.l.b16 %v409
    %v481 = vunpack.c.l.b16 %v410
    %v482 = vunpack.c.l.b16 %v411
    %v483 = vunpack.c.l.b16 %v412
    %v484 = vunpack.c.l.b16 %v413
    %v485 = vpack.c.b16 %v454, %v453
    %v486 = vpack.c.b16 %v456, %v455
    %v487 = vpack.c.b16 %v458, %v457
    %v488 = vpack.c.b16 %v460, %v459
    %v489 = vpack.c.b16 %v462, %v461
    %v490 = vpack.c.b16 %v464, %v463
    %v491 = vpack.c.b16 %v466, %v465
    %v492 = vpack.c.b16 %v468, %v467
    %v493 = vpack.c.b16 %v470, %v469
    %v494 = vpack.c.b16 %v472, %v471
    %v495 = vpack.c.b16 %v474, %v473
    %v496 = vpack.c.b16 %v476, %v475
    %v497 = vpack.c.b16 %v478, %v477
    %v498 = vpack.c.b16 %v480, %v479
    %v499 = vpack.c.b16 %v482, %v481
    %v500 = vpack.c.b16 %v484, %v483
    %517 = vmatprep.subr.bf16.mxu0 0
    %518 = vmatpush1.bf16.msra.mxu0 %v492
    %519 = vmatprep.subr.bf16.mxu0 0
    %520 = vmatpush1.bf16.msra.mxu0 %v491
    %521 = vmatprep.subr.bf16.mxu0 0
    %522 = vmatpush1.bf16.msra.mxu0 %v490
    %523 = vmatprep.subr.bf16.mxu0 0
    %524 = vmatpush1.bf16.msra.mxu0 %v489
    %525 = vmatprep.subr.bf16.mxu0 0
    %526 = vmatpush1.bf16.msra.mxu0 %v488
    %527 = vmatprep.subr.bf16.mxu0 0
    %528 = vmatpush1.bf16.msra.mxu0 %v487
    %529 = vmatprep.subr.bf16.mxu0 0
    %530 = vmatpush1.bf16.msra.mxu0 %v486
    %531 = vmatprep.subr.bf16.mxu0 0
    %532 = vmatpush1.bf16.msra.mxu0 %v485
    %533 = vmatprep.subr.bf16.mxu0 0
    %534 = vmatpush2.bf16.msra.mxu0 %v500
    %535 = vmatprep.subr.bf16.mxu0 0
    %536 = vmatpush2.bf16.msra.mxu0 %v499
    %537 = vmatprep.subr.bf16.mxu0 0
    %538 = vmatpush2.bf16.msra.mxu0 %v498
    %539 = vmatprep.subr.bf16.mxu0 0
    %540 = vmatpush2.bf16.msra.mxu0 %v497
    %541 = vmatprep.subr.bf16.mxu0 0
    %542 = vmatpush2.bf16.msra.mxu0 %v496
    %543 = vmatprep.subr.bf16.mxu0 0
    %544 = vmatpush2.bf16.msra.mxu0 %v495
    %545 = vmatprep.subr.bf16.mxu0 0
    %546 = vmatpush2.bf16.msra.mxu0 %v494
    %547 = vmatprep.subr.bf16.mxu0 0
    %548 = vmatpush2.bf16.msra.mxu0 %v493
    %549 = vmatprep.mubr.bf16.mxu0 %v379
    %550 = vmatmul.mubr.bf16.gmra.mxu0 %v378
    %v551 = vpop.f32.mrf.mxu0
    %v552 = vadd.f32 %v419, %v551
    %v553 = vpop.f32.mrf.mxu0
    %v554 = vpop.f32.mrf.mxu0
    %v555 = vadd.f32 %v419, %v554
    %v556 = vpop.f32.mrf.mxu0
    %557 = vmatprep.mubr.bf16.mxu0 %v381
    %558 = vmatmul.mubr.bf16.gmra.mxu0 %v380
    %v559 = vpop.f32.mrf.mxu0
    %v560 = vadd.f32 %v419, %v559
    %v561 = vpop.f32.mrf.mxu0
    %v562 = vpop.f32.mrf.mxu0
    %v563 = vadd.f32 %v419, %v562
    %v564 = vpop.f32.mrf.mxu0
    %565 = vdwg.mxu0
    %v566 = vmax.f32 %v552, 0.0
    %v567 = vmax.f32 %v555, 0.0
    %v568 = vmax.f32 %v560, 0.0
    %v569 = vmax.f32 %v563, 0.0
    %v570 = vrot.slane %v566, 7
    %v571 = vrot.slane %v567, 7
    %v572 = vrot.slane %v568, 7
    %v573 = vrot.slane %v569, 7
    %v574 = vlaneseq
    %v575 = vshrl.u32 %v574, 7
    %vm576 = vcmp.lt.s32.totalorder %v575, 1
    %v577 = vsel %vm576, %v572, %v573
    %v578 = vsel %vm576, %v571, %v572
    %v579 = vsel %vm576, %v570, %v571
    %v580 = vsel %vm576, %v573, %v570
    %s581 = scalar_lea.vmem %s3, 64
    %v582 = vld [vmem:[%s581] sm:$0xff]
    %v583 = vld [vmem:[%s581 + $0x8] sm:$0xff]
    %v584 = vld [vmem:[%s581 + $0x10] sm:$0xff]
    %v585 = vld [vmem:[%s581 + $0x18] sm:$0xff]
    %587 = vset.pattern.permute.xlu0 0
    %588 = vperm.xlu0 %587, %v582
    %v589 = vpop.permute.xlu0 %588
    %592 = vset.pattern.permute.xlu0 0
    %593 = vperm.xlu0 %592, %v583
    %v594 = vpop.permute.xlu0 %593
    %597 = vset.pattern.permute.xlu0 0
    %598 = vperm.xlu0 %597, %v584
    %v599 = vpop.permute.xlu0 %598
    %602 = vset.pattern.permute.xlu0 0
    %603 = vperm.xlu0 %602, %v585
    %v604 = vpop.permute.xlu0 %603
    %v606 = vmul.f32 %v580, %v589
    %v607 = vmul.f32 %v579, %v594
    %v608 = vmul.f32 %v578, %v599
    %v609 = vmul.f32 %v577, %v604
    %v610 = vpack.c.bf16 %v607, %v606
    %v611 = vpack.c.bf16 %v609, %v608
    %v612 = vld [vmem:[%s9] sm:$0xf]
    %v613 = vld [vmem:[%s9 + $0x4] sm:$0xf]
    %v614 = vld [vmem:[%s9 + $0x8] sm:$0xf]
    %v615 = vld [vmem:[%s9 + $0xc] sm:$0xf]
    %v616 = vld [vmem:[%s9 + $0x10] sm:$0xf]
    %v617 = vld [vmem:[%s9 + $0x14] sm:$0xf]
    %v618 = vld [vmem:[%s9 + $0x18] sm:$0xf]
    %v619 = vld [vmem:[%s9 + $0x1c] sm:$0xf]
    %v620 = vld [vmem:[%s9 + $0x20] sm:$0xf]
    %v621 = vld [vmem:[%s9 + $0x24] sm:$0xf]
    %v622 = vld [vmem:[%s9 + $0x28] sm:$0xf]
    %v623 = vld [vmem:[%s9 + $0x2c] sm:$0xf]
    %v624 = vld [vmem:[%s9 + $0x30] sm:$0xf]
    %v625 = vld [vmem:[%s9 + $0x34] sm:$0xf]
    %v626 = vld [vmem:[%s9 + $0x38] sm:$0xf]
    %v627 = vld [vmem:[%s9 + $0x3c] sm:$0xf]
    %v628 = vpack.c.bf16 %v567, %v566
    %v629 = vpack.c.bf16 %v569, %v568
    %s630 = scalar_lea.vmem %s9, 64
    %v631 = vld [vmem:[%s630] sm:$0xf]
    %v632 = vld [vmem:[%s630 + $0x4] sm:$0xf]
    %v633 = vld [vmem:[%s630 + $0x8] sm:$0xf]
    %v634 = vld [vmem:[%s630 + $0xc] sm:$0xf]
    %v635 = vld [vmem:[%s630 + $0x10] sm:$0xf]
    %v636 = vld [vmem:[%s630 + $0x14] sm:$0xf]
    %v637 = vld [vmem:[%s630 + $0x18] sm:$0xf]
    %v638 = vld [vmem:[%s630 + $0x1c] sm:$0xf]
    %v639 = vld [vmem:[%s630 + $0x20] sm:$0xf]
    %v640 = vld [vmem:[%s630 + $0x24] sm:$0xf]
    %v641 = vld [vmem:[%s630 + $0x28] sm:$0xf]
    %v642 = vld [vmem:[%s630 + $0x2c] sm:$0xf]
    %v643 = vld [vmem:[%s630 + $0x30] sm:$0xf]
    %v644 = vld [vmem:[%s630 + $0x34] sm:$0xf]
    %v645 = vld [vmem:[%s630 + $0x38] sm:$0xf]
    %v646 = vld [vmem:[%s630 + $0x3c] sm:$0xf]
    %v663 = vunpack.c.l.b16 %v631
    %v664 = vunpack.c.l.b16 %v632
    %v665 = vunpack.c.l.b16 %v633
    %v666 = vunpack.c.l.b16 %v634
    %v667 = vunpack.c.l.b16 %v635
    %v668 = vunpack.c.l.b16 %v636
    %v669 = vunpack.c.l.b16 %v637
    %v670 = vunpack.c.l.b16 %v638
    %v671 = vunpack.c.l.b16 %v639
    %v672 = vunpack.c.l.b16 %v640
    %v673 = vunpack.c.l.b16 %v641
    %v674 = vunpack.c.l.b16 %v642
    %v675 = vunpack.c.l.b16 %v643
    %v676 = vunpack.c.l.b16 %v644
    %v677 = vunpack.c.l.b16 %v645
    %v678 = vunpack.c.l.b16 %v646
    %v679 = vpack.c.b16 %v664, %v663
    %v680 = vpack.c.b16 %v666, %v665
    %v681 = vpack.c.b16 %v668, %v667
    %v682 = vpack.c.b16 %v670, %v669
    %v683 = vpack.c.b16 %v672, %v671
    %v684 = vpack.c.b16 %v674, %v673
    %v685 = vpack.c.b16 %v676, %v675
    %v686 = vpack.c.b16 %v678, %v677
    %695 = vmatprep.subr.bf16.mxu0 0
    %696 = vmatpush1.bf16.msra.mxu0 %v686
    %697 = vmatprep.subr.bf16.mxu0 0
    %698 = vmatpush1.bf16.msra.mxu0 %v685
    %699 = vmatprep.subr.bf16.mxu0 0
    %700 = vmatpush1.bf16.msra.mxu0 %v684
    %701 = vmatprep.subr.bf16.mxu0 0
    %702 = vmatpush1.bf16.msra.mxu0 %v683
    %703 = vmatprep.subr.bf16.mxu0 0
    %704 = vmatpush1.bf16.msra.mxu0 %v682
    %705 = vmatprep.subr.bf16.mxu0 0
    %706 = vmatpush1.bf16.msra.mxu0 %v681
    %707 = vmatprep.subr.bf16.mxu0 0
    %708 = vmatpush1.bf16.msra.mxu0 %v680
    %709 = vmatprep.subr.bf16.mxu0 0
    %710 = vmatpush1.bf16.msra.mxu0 %v679
    %711 = vmatprep.subr.bf16.mxu0 0
    %712 = vmatpush2.bf16.msra.mxu0 0
    %713 = vmatprep.subr.bf16.mxu0 0
    %714 = vmatpush2.bf16.msra.mxu0 0
    %715 = vmatprep.subr.bf16.mxu0 0
    %716 = vmatpush2.bf16.msra.mxu0 0
    %717 = vmatprep.subr.bf16.mxu0 0
    %718 = vmatpush2.bf16.msra.mxu0 0
    %719 = vmatprep.subr.bf16.mxu0 0
    %720 = vmatpush2.bf16.msra.mxu0 0
    %721 = vmatprep.subr.bf16.mxu0 0
    %722 = vmatpush2.bf16.msra.mxu0 0
    %723 = vmatprep.subr.bf16.mxu0 0
    %724 = vmatpush2.bf16.msra.mxu0 0
    %725 = vmatprep.subr.bf16.mxu0 0
    %726 = vmatpush2.bf16.msra.mxu0 0
    %727 = vmatprep.mubr.bf16.mxu0 0
    %728 = vmatmul.mubr.bf16.gmra.mxu0 %v628
    %v729 = vpop.f32.mrf.mxu0
    %v730 = vadd.f32 0.0, %v729
    %v731 = vpop.f32.mrf.mxu0
    %v732 = vpop.f32.mrf.mxu0
    %v733 = vadd.f32 0.0, %v732
    %v734 = vpop.f32.mrf.mxu0
    %735 = vmatprep.mubr.bf16.mxu0 0
    %736 = vmatmul.mubr.bf16.gmra.mxu0 %v629
    %v737 = vpop.f32.mrf.mxu0
    %v738 = vadd.f32 0.0, %v737
    %v739 = vpop.f32.mrf.mxu0
    %v740 = vpop.f32.mrf.mxu0
    %v741 = vadd.f32 0.0, %v740
    %v742 = vpop.f32.mrf.mxu0
    %743 = vdwg.mxu0
    %v760 = vunpack.c.l.b16 %v612
    %v761 = vunpack.c.l.b16 %v613
    %v762 = vunpack.c.l.b16 %v614
    %v763 = vunpack.c.l.b16 %v615
    %v764 = vunpack.c.l.b16 %v616
    %v765 = vunpack.c.l.b16 %v617
    %v766 = vunpack.c.l.b16 %v618
    %v767 = vunpack.c.l.b16 %v619
    %v768 = vunpack.c.l.b16 %v620
    %v769 = vunpack.c.l.b16 %v621
    %v770 = vunpack.c.l.b16 %v622
    %v771 = vunpack.c.l.b16 %v623
    %v772 = vunpack.c.l.b16 %v624
    %v773 = vunpack.c.l.b16 %v625
    %v774 = vunpack.c.l.b16 %v626
    %v775 = vunpack.c.l.b16 %v627
    %v776 = vpack.c.b16 %v761, %v760
    %v777 = vpack.c.b16 %v763, %v762
    %v778 = vpack.c.b16 %v765, %v764
    %v779 = vpack.c.b16 %v767, %v766
    %v780 = vpack.c.b16 %v769, %v768
    %v781 = vpack.c.b16 %v771, %v770
    %v782 = vpack.c.b16 %v773, %v772
    %v783 = vpack.c.b16 %v775, %v774
    %792 = vmatprep.subr.bf16.mxu0 0
    %793 = vmatpush1.bf16.msra.mxu0 %v783
    %794 = vmatprep.subr.bf16.mxu0 0
    %795 = vmatpush1.bf16.msra.mxu0 %v782
    %796 = vmatprep.subr.bf16.mxu0 0
    %797 = vmatpush1.bf16.msra.mxu0 %v781
    %798 = vmatprep.subr.bf16.mxu0 0
    %799 = vmatpush1.bf16.msra.mxu0 %v780
    %800 = vmatprep.subr.bf16.mxu0 0
    %801 = vmatpush1.bf16.msra.mxu0 %v779
    %802 = vmatprep.subr.bf16.mxu0 0
    %803 = vmatpush1.bf16.msra.mxu0 %v778
    %804 = vmatprep.subr.bf16.mxu0 0
    %805 = vmatpush1.bf16.msra.mxu0 %v777
    %806 = vmatprep.subr.bf16.mxu0 0
    %807 = vmatpush1.bf16.msra.mxu0 %v776
    %808 = vmatprep.subr.bf16.mxu0 0
    %809 = vmatpush2.bf16.msra.mxu0 0
    %810 = vmatprep.subr.bf16.mxu0 0
    %811 = vmatpush2.bf16.msra.mxu0 0
    %812 = vmatprep.subr.bf16.mxu0 0
    %813 = vmatpush2.bf16.msra.mxu0 0
    %814 = vmatprep.subr.bf16.mxu0 0
    %815 = vmatpush2.bf16.msra.mxu0 0
    %816 = vmatprep.subr.bf16.mxu0 0
    %817 = vmatpush2.bf16.msra.mxu0 0
    %818 = vmatprep.subr.bf16.mxu0 0
    %819 = vmatpush2.bf16.msra.mxu0 0
    %820 = vmatprep.subr.bf16.mxu0 0
    %821 = vmatpush2.bf16.msra.mxu0 0
    %822 = vmatprep.subr.bf16.mxu0 0
    %823 = vmatpush2.bf16.msra.mxu0 0
    %824 = vmatprep.mubr.bf16.mxu0 0
    %825 = vmatmul.mubr.bf16.gmra.mxu0 %v610
    %v826 = vpop.f32.mrf.mxu0
    %v827 = vadd.f32 %v730, %v826
    %v828 = vpop.f32.mrf.mxu0
    %v829 = vpop.f32.mrf.mxu0
    %v830 = vadd.f32 %v733, %v829
    %v831 = vpop.f32.mrf.mxu0
    %832 = vmatprep.mubr.bf16.mxu0 0
    %833 = vmatmul.mubr.bf16.gmra.mxu0 %v611
    %v834 = vpop.f32.mrf.mxu0
    %v835 = vadd.f32 %v738, %v834
    %v836 = vpop.f32.mrf.mxu0
    %v837 = vpop.f32.mrf.mxu0
    %v838 = vadd.f32 %v741, %v837
    %v839 = vpop.f32.mrf.mxu0
    %840 = vdwg.mxu0
    %v841 = vrot.slane %v566, 1
    %v842 = vrot.slane %v567, 1
    %v843 = vrot.slane %v568, 1
    %v844 = vrot.slane %v569, 1
    %vm845 = vcmp.lt.s32.totalorder %v575, 7
    %v846 = vsel %vm845, %v843, %v844
    %v847 = vsel %vm845, %v842, %v843
    %v848 = vsel %vm845, %v841, %v842
    %v849 = vsel %vm845, %v844, %v841
    %s850 = scalar_lea.vmem %s3, 96
    %v851 = vld [vmem:[%s850] sm:$0xff]
    %v852 = vld [vmem:[%s850 + $0x8] sm:$0xff]
    %v853 = vld [vmem:[%s850 + $0x10] sm:$0xff]
    %v854 = vld [vmem:[%s850 + $0x18] sm:$0xff]
    %856 = vset.pattern.permute.xlu0 0
    %857 = vperm.xlu0 %856, %v851
    %v858 = vpop.permute.xlu0 %857
    %861 = vset.pattern.permute.xlu0 0
    %862 = vperm.xlu0 %861, %v852
    %v863 = vpop.permute.xlu0 %862
    %866 = vset.pattern.permute.xlu0 0
    %867 = vperm.xlu0 %866, %v853
    %v868 = vpop.permute.xlu0 %867
    %871 = vset.pattern.permute.xlu0 0
    %872 = vperm.xlu0 %871, %v854
    %v873 = vpop.permute.xlu0 %872
    %v875 = vmul.f32 %v848, %v858
    %v876 = vmul.f32 %v847, %v863
    %v877 = vmul.f32 %v846, %v868
    %v878 = vmul.f32 %v849, %v873
    %v879 = vpack.c.bf16 %v876, %v875
    %v880 = vpack.c.bf16 %v878, %v877
    %s881 = scalar_lea.vmem %s9, 128
    %v882 = vld [vmem:[%s881] sm:$0xf]
    %v883 = vld [vmem:[%s881 + $0x4] sm:$0xf]
    %v884 = vld [vmem:[%s881 + $0x8] sm:$0xf]
    %v885 = vld [vmem:[%s881 + $0xc] sm:$0xf]
    %v886 = vld [vmem:[%s881 + $0x10] sm:$0xf]
    %v887 = vld [vmem:[%s881 + $0x14] sm:$0xf]
    %v888 = vld [vmem:[%s881 + $0x18] sm:$0xf]
    %v889 = vld [vmem:[%s881 + $0x1c] sm:$0xf]
    %v890 = vld [vmem:[%s881 + $0x20] sm:$0xf]
    %v891 = vld [vmem:[%s881 + $0x24] sm:$0xf]
    %v892 = vld [vmem:[%s881 + $0x28] sm:$0xf]
    %v893 = vld [vmem:[%s881 + $0x2c] sm:$0xf]
    %v894 = vld [vmem:[%s881 + $0x30] sm:$0xf]
    %v895 = vld [vmem:[%s881 + $0x34] sm:$0xf]
    %v896 = vld [vmem:[%s881 + $0x38] sm:$0xf]
    %v897 = vld [vmem:[%s881 + $0x3c] sm:$0xf]
    %v914 = vunpack.c.l.b16 %v882
    %v915 = vunpack.c.l.b16 %v883
    %v916 = vunpack.c.l.b16 %v884
    %v917 = vunpack.c.l.b16 %v885
    %v918 = vunpack.c.l.b16 %v886
    %v919 = vunpack.c.l.b16 %v887
    %v920 = vunpack.c.l.b16 %v888
    %v921 = vunpack.c.l.b16 %v889
    %v922 = vunpack.c.l.b16 %v890
    %v923 = vunpack.c.l.b16 %v891
    %v924 = vunpack.c.l.b16 %v892
    %v925 = vunpack.c.l.b16 %v893
    %v926 = vunpack.c.l.b16 %v894
    %v927 = vunpack.c.l.b16 %v895
    %v928 = vunpack.c.l.b16 %v896
    %v929 = vunpack.c.l.b16 %v897
    %v930 = vpack.c.b16 %v915, %v914
    %v931 = vpack.c.b16 %v917, %v916
    %v932 = vpack.c.b16 %v919, %v918
    %v933 = vpack.c.b16 %v921, %v920
    %v934 = vpack.c.b16 %v923, %v922
    %v935 = vpack.c.b16 %v925, %v924
    %v936 = vpack.c.b16 %v927, %v926
    %v937 = vpack.c.b16 %v929, %v928
    %946 = vmatprep.subr.bf16.mxu0 0
    %947 = vmatpush1.bf16.msra.mxu0 %v937
    %948 = vmatprep.subr.bf16.mxu0 0
    %949 = vmatpush1.bf16.msra.mxu0 %v936
    %950 = vmatprep.subr.bf16.mxu0 0
    %951 = vmatpush1.bf16.msra.mxu0 %v935
    %952 = vmatprep.subr.bf16.mxu0 0
    %953 = vmatpush1.bf16.msra.mxu0 %v934
    %954 = vmatprep.subr.bf16.mxu0 0
    %955 = vmatpush1.bf16.msra.mxu0 %v933
    %956 = vmatprep.subr.bf16.mxu0 0
    %957 = vmatpush1.bf16.msra.mxu0 %v932
    %958 = vmatprep.subr.bf16.mxu0 0
    %959 = vmatpush1.bf16.msra.mxu0 %v931
    %960 = vmatprep.subr.bf16.mxu0 0
    %961 = vmatpush1.bf16.msra.mxu0 %v930
    %962 = vmatprep.subr.bf16.mxu0 0
    %963 = vmatpush2.bf16.msra.mxu0 0
    %964 = vmatprep.subr.bf16.mxu0 0
    %965 = vmatpush2.bf16.msra.mxu0 0
    %966 = vmatprep.subr.bf16.mxu0 0
    %967 = vmatpush2.bf16.msra.mxu0 0
    %968 = vmatprep.subr.bf16.mxu0 0
    %969 = vmatpush2.bf16.msra.mxu0 0
    %970 = vmatprep.subr.bf16.mxu0 0
    %971 = vmatpush2.bf16.msra.mxu0 0
    %972 = vmatprep.subr.bf16.mxu0 0
    %973 = vmatpush2.bf16.msra.mxu0 0
    %974 = vmatprep.subr.bf16.mxu0 0
    %975 = vmatpush2.bf16.msra.mxu0 0
    %976 = vmatprep.subr.bf16.mxu0 0
    %977 = vmatpush2.bf16.msra.mxu0 0
    %978 = vmatprep.mubr.bf16.mxu0 0
    %979 = vmatmul.mubr.bf16.gmra.mxu0 %v879
    %v980 = vpop.f32.mrf.mxu0
    %v981 = vadd.f32 0.0, %v980
    %v982 = vpop.f32.mrf.mxu0
    %v983 = vpop.f32.mrf.mxu0
    %v984 = vadd.f32 0.0, %v983
    %v985 = vpop.f32.mrf.mxu0
    %986 = vmatprep.mubr.bf16.mxu0 0
    %987 = vmatmul.mubr.bf16.gmra.mxu0 %v880
    %v988 = vpop.f32.mrf.mxu0
    %v989 = vadd.f32 0.0, %v988
    %v990 = vpop.f32.mrf.mxu0
    %v991 = vpop.f32.mrf.mxu0
    %v992 = vadd.f32 0.0, %v991
    %v993 = vpop.f32.mrf.mxu0
    %994 = vdwg.mxu0
    %v995 = vadd.f32 %v827, %v981
    %v996 = vadd.f32 %v830, %v984
    %v997 = vadd.f32 %v835, %v989
    %v998 = vadd.f32 %v838, %v992
    %v999 = vld [vmem:[%s11] sm:$0x1]
    %v1001 = vlaneseq
    %v1002 = vshrl.u32 %v1001, 7
    %v1003 = vsub.s32 0, %v1002
    %v1004 = vrot.slane %v999, %v1003
    %v1006 = vadd.f32 %v995, %v1004
    %v1007 = vadd.f32 %v996, %v1004
    %v1008 = vadd.f32 %v997, %v1004
    %v1009 = vadd.f32 %v998, %v1004
    %v1010 = vld [vmem:[#allocation7] sm:$0xf]
    %v1011 = vld [vmem:[#allocation7 + $0x4] sm:$0xf]
    %v1012 = vld [vmem:[#allocation7 + $0x8] sm:$0xf]
    %v1013 = vld [vmem:[#allocation7 + $0xc] sm:$0xf]
    %v1014 = vld [vmem:[#allocation7 + $0x10] sm:$0xf]
    %v1015 = vld [vmem:[#allocation7 + $0x14] sm:$0xf]
    %v1016 = vld [vmem:[#allocation7 + $0x18] sm:$0xf]
    %v1017 = vld [vmem:[#allocation7 + $0x1c] sm:$0xf]
    %v1018 = vld [vmem:[#allocation7 + $0x20] sm:$0xf]
    %v1019 = vld [vmem:[#allocation7 + $0x24] sm:$0xf]
    %v1020 = vld [vmem:[#allocation7 + $0x28] sm:$0xf]
    %v1021 = vld [vmem:[#allocation7 + $0x2c] sm:$0xf]
    %v1022 = vld [vmem:[#allocation7 + $0x30] sm:$0xf]
    %v1023 = vld [vmem:[#allocation7 + $0x34] sm:$0xf]
    %v1024 = vld [vmem:[#allocation7 + $0x38] sm:$0xf]
    %v1025 = vld [vmem:[#allocation7 + $0x3c] sm:$0xf]
    %v1026 = vld [vmem:[#allocation7 + $0x40] sm:$0xf]
    %v1027 = vld [vmem:[#allocation7 + $0x44] sm:$0xf]
    %v1028 = vld [vmem:[#allocation7 + $0x48] sm:$0xf]
    %v1029 = vld [vmem:[#allocation7 + $0x4c] sm:$0xf]
    %v1030 = vld [vmem:[#allocation7 + $0x50] sm:$0xf]
    %v1031 = vld [vmem:[#allocation7 + $0x54] sm:$0xf]
    %v1032 = vld [vmem:[#allocation7 + $0x58] sm:$0xf]
    %v1033 = vld [vmem:[#allocation7 + $0x5c] sm:$0xf]
    %v1034 = vld [vmem:[#allocation7 + $0x60] sm:$0xf]
    %v1035 = vld [vmem:[#allocation7 + $0x64] sm:$0xf]
    %v1036 = vld [vmem:[#allocation7 + $0x68] sm:$0xf]
    %v1037 = vld [vmem:[#allocation7 + $0x6c] sm:$0xf]
    %v1038 = vld [vmem:[#allocation7 + $0x70] sm:$0xf]
    %v1039 = vld [vmem:[#allocation7 + $0x74] sm:$0xf]
    %v1040 = vld [vmem:[#allocation7 + $0x78] sm:$0xf]
    %v1041 = vld [vmem:[#allocation7 + $0x7c] sm:$0xf]
    %v1042 = vld [vmem:[%s15] sm:$0x1]
    %v1044 = vlaneseq
    %v1045 = vshrl.u32 %v1044, 7
    %v1046 = vsub.s32 0, %v1045
    %v1047 = vrot.slane %v1042, %v1046
    %v1081 = vunpack.c.l.b16 %v1010
    %v1082 = vunpack.c.l.b16 %v1011
    %v1083 = vunpack.c.l.b16 %v1012
    %v1084 = vunpack.c.l.b16 %v1013
    %v1085 = vunpack.c.l.b16 %v1014
    %v1086 = vunpack.c.l.b16 %v1015
    %v1087 = vunpack.c.l.b16 %v1016
    %v1088 = vunpack.c.l.b16 %v1017
    %v1089 = vunpack.c.l.b16 %v1018
    %v1090 = vunpack.c.l.b16 %v1019
    %v1091 = vunpack.c.l.b16 %v1020
    %v1092 = vunpack.c.l.b16 %v1021
    %v1093 = vunpack.c.l.b16 %v1022
    %v1094 = vunpack.c.l.b16 %v1023
    %v1095 = vunpack.c.l.b16 %v1024
    %v1096 = vunpack.c.l.b16 %v1025
    %v1097 = vunpack.c.l.b16 %v1026
    %v1098 = vunpack.c.l.b16 %v1027
    %v1099 = vunpack.c.l.b16 %v1028
    %v1100 = vunpack.c.l.b16 %v1029
    %v1101 = vunpack.c.l.b16 %v1030
    %v1102 = vunpack.c.l.b16 %v1031
    %v1103 = vunpack.c.l.b16 %v1032
    %v1104 = vunpack.c.l.b16 %v1033
    %v1105 = vunpack.c.l.b16 %v1034
    %v1106 = vunpack.c.l.b16 %v1035
    %v1107 = vunpack.c.l.b16 %v1036
    %v1108 = vunpack.c.l.b16 %v1037
    %v1109 = vunpack.c.l.b16 %v1038
    %v1110 = vunpack.c.l.b16 %v1039
    %v1111 = vunpack.c.l.b16 %v1040
    %v1112 = vunpack.c.l.b16 %v1041
    %v1113 = vpack.c.b16 %v1082, %v1081
    %v1114 = vpack.c.b16 %v1084, %v1083
    %v1115 = vpack.c.b16 %v1086, %v1085
    %v1116 = vpack.c.b16 %v1088, %v1087
    %v1117 = vpack.c.b16 %v1090, %v1089
    %v1118 = vpack.c.b16 %v1092, %v1091
    %v1119 = vpack.c.b16 %v1094, %v1093
    %v1120 = vpack.c.b16 %v1096, %v1095
    %v1121 = vpack.c.b16 %v1098, %v1097
    %v1122 = vpack.c.b16 %v1100, %v1099
    %v1123 = vpack.c.b16 %v1102, %v1101
    %v1124 = vpack.c.b16 %v1104, %v1103
    %v1125 = vpack.c.b16 %v1106, %v1105
    %v1126 = vpack.c.b16 %v1108, %v1107
    %v1127 = vpack.c.b16 %v1110, %v1109
    %v1128 = vpack.c.b16 %v1112, %v1111
    %1145 = vmatprep.subr.bf16.mxu0 0
    %1146 = vmatpush1.bf16.msra.mxu0 %v1120
    %1147 = vmatprep.subr.bf16.mxu0 0
    %1148 = vmatpush1.bf16.msra.mxu0 %v1119
    %1149 = vmatprep.subr.bf16.mxu0 0
    %1150 = vmatpush1.bf16.msra.mxu0 %v1118
    %1151 = vmatprep.subr.bf16.mxu0 0
    %1152 = vmatpush1.bf16.msra.mxu0 %v1117
    %1153 = vmatprep.subr.bf16.mxu0 0
    %1154 = vmatpush1.bf16.msra.mxu0 %v1116
    %1155 = vmatprep.subr.bf16.mxu0 0
    %1156 = vmatpush1.bf16.msra.mxu0 %v1115
    %1157 = vmatprep.subr.bf16.mxu0 0
    %1158 = vmatpush1.bf16.msra.mxu0 %v1114
    %1159 = vmatprep.subr.bf16.mxu0 0
    %1160 = vmatpush1.bf16.msra.mxu0 %v1113
    %1161 = vmatprep.subr.bf16.mxu0 0
    %1162 = vmatpush2.bf16.msra.mxu0 %v1128
    %1163 = vmatprep.subr.bf16.mxu0 0
    %1164 = vmatpush2.bf16.msra.mxu0 %v1127
    %1165 = vmatprep.subr.bf16.mxu0 0
    %1166 = vmatpush2.bf16.msra.mxu0 %v1126
    %1167 = vmatprep.subr.bf16.mxu0 0
    %1168 = vmatpush2.bf16.msra.mxu0 %v1125
    %1169 = vmatprep.subr.bf16.mxu0 0
    %1170 = vmatpush2.bf16.msra.mxu0 %v1124
    %1171 = vmatprep.subr.bf16.mxu0 0
    %1172 = vmatpush2.bf16.msra.mxu0 %v1123
    %1173 = vmatprep.subr.bf16.mxu0 0
    %1174 = vmatpush2.bf16.msra.mxu0 %v1122
    %1175 = vmatprep.subr.bf16.mxu0 0
    %1176 = vmatpush2.bf16.msra.mxu0 %v1121
    %1177 = vmatprep.mubr.bf16.mxu0 %v379
    %1178 = vmatmul.mubr.bf16.gmra.mxu0 %v378
    %v1179 = vpop.f32.mrf.mxu0
    %v1180 = vadd.f32 %v1047, %v1179
    %v1181 = vpop.f32.mrf.mxu0
    %v1182 = vpop.f32.mrf.mxu0
    %v1183 = vadd.f32 %v1047, %v1182
    %v1184 = vpop.f32.mrf.mxu0
    %1185 = vmatprep.mubr.bf16.mxu0 %v381
    %1186 = vmatmul.mubr.bf16.gmra.mxu0 %v380
    %v1187 = vpop.f32.mrf.mxu0
    %v1188 = vadd.f32 %v1047, %v1187
    %v1189 = vpop.f32.mrf.mxu0
    %v1190 = vpop.f32.mrf.mxu0
    %v1191 = vadd.f32 %v1047, %v1190
    %v1192 = vpop.f32.mrf.mxu0
    %1193 = vdwg.mxu0
    %v1194 = vmax.f32 %v1180, 0.0
    %v1195 = vmax.f32 %v1183, 0.0
    %v1196 = vmax.f32 %v1188, 0.0
    %v1197 = vmax.f32 %v1191, 0.0
    %v1198 = vrot.slane %v1194, 7
    %v1199 = vrot.slane %v1195, 7
    %v1200 = vrot.slane %v1196, 7
    %v1201 = vrot.slane %v1197, 7
    %v1202 = vsel %vm576, %v1200, %v1201
    %v1203 = vsel %vm576, %v1199, %v1200
    %v1204 = vsel %vm576, %v1198, %v1199
    %v1205 = vsel %vm576, %v1201, %v1198
    %v1206 = vmul.f32 %v1205, %v589
    %v1207 = vmul.f32 %v1204, %v594
    %v1208 = vmul.f32 %v1203, %v599
    %v1209 = vmul.f32 %v1202, %v604
    %v1210 = vpack.c.bf16 %v1207, %v1206
    %v1211 = vpack.c.bf16 %v1209, %v1208
    %v1212 = vld [vmem:[#allocation8] sm:$0xf]
    %v1213 = vld [vmem:[#allocation8 + $0x4] sm:$0xf]
    %v1214 = vld [vmem:[#allocation8 + $0x8] sm:$0xf]
    %v1215 = vld [vmem:[#allocation8 + $0xc] sm:$0xf]
    %v1216 = vld [vmem:[#allocation8 + $0x10] sm:$0xf]
    %v1217 = vld [vmem:[#allocation8 + $0x14] sm:$0xf]
    %v1218 = vld [vmem:[#allocation8 + $0x18] sm:$0xf]
    %v1219 = vld [vmem:[#allocation8 + $0x1c] sm:$0xf]
    %v1220 = vld [vmem:[#allocation8 + $0x20] sm:$0xf]
    %v1221 = vld [vmem:[#allocation8 + $0x24] sm:$0xf]
    %v1222 = vld [vmem:[#allocation8 + $0x28] sm:$0xf]
    %v1223 = vld [vmem:[#allocation8 + $0x2c] sm:$0xf]
    %v1224 = vld [vmem:[#allocation8 + $0x30] sm:$0xf]
    %v1225 = vld [vmem:[#allocation8 + $0x34] sm:$0xf]
    %v1226 = vld [vmem:[#allocation8 + $0x38] sm:$0xf]
    %v1227 = vld [vmem:[#allocation8 + $0x3c] sm:$0xf]
    %v1228 = vpack.c.bf16 %v1195, %v1194
    %v1229 = vpack.c.bf16 %v1197, %v1196
    %s1230 = scalar_lea.vmem [#allocation8], 64
    %v1231 = vld [vmem:[%s1230] sm:$0xf]
    %v1232 = vld [vmem:[%s1230 + $0x4] sm:$0xf]
    %v1233 = vld [vmem:[%s1230 + $0x8] sm:$0xf]
    %v1234 = vld [vmem:[%s1230 + $0xc] sm:$0xf]
    %v1235 = vld [vmem:[%s1230 + $0x10] sm:$0xf]
    %v1236 = vld [vmem:[%s1230 + $0x14] sm:$0xf]
    %v1237 = vld [vmem:[%s1230 + $0x18] sm:$0xf]
    %v1238 = vld [vmem:[%s1230 + $0x1c] sm:$0xf]
    %v1239 = vld [vmem:[%s1230 + $0x20] sm:$0xf]
    %v1240 = vld [vmem:[%s1230 + $0x24] sm:$0xf]
    %v1241 = vld [vmem:[%s1230 + $0x28] sm:$0xf]
    %v1242 = vld [vmem:[%s1230 + $0x2c] sm:$0xf]
    %v1243 = vld [vmem:[%s1230 + $0x30] sm:$0xf]
    %v1244 = vld [vmem:[%s1230 + $0x34] sm:$0xf]
    %v1245 = vld [vmem:[%s1230 + $0x38] sm:$0xf]
    %v1246 = vld [vmem:[%s1230 + $0x3c] sm:$0xf]
    %v1263 = vunpack.c.l.b16 %v1231
    %v1264 = vunpack.c.l.b16 %v1232
    %v1265 = vunpack.c.l.b16 %v1233
    %v1266 = vunpack.c.l.b16 %v1234
    %v1267 = vunpack.c.l.b16 %v1235
    %v1268 = vunpack.c.l.b16 %v1236
    %v1269 = vunpack.c.l.b16 %v1237
    %v1270 = vunpack.c.l.b16 %v1238
    %v1271 = vunpack.c.l.b16 %v1239
    %v1272 = vunpack.c.l.b16 %v1240
    %v1273 = vunpack.c.l.b16 %v1241
    %v1274 = vunpack.c.l.b16 %v1242
    %v1275 = vunpack.c.l.b16 %v1243
    %v1276 = vunpack.c.l.b16 %v1244
    %v1277 = vunpack.c.l.b16 %v1245
    %v1278 = vunpack.c.l.b16 %v1246
    %v1279 = vpack.c.b16 %v1264, %v1263
    %v1280 = vpack.c.b16 %v1266, %v1265
    %v1281 = vpack.c.b16 %v1268, %v1267
    %v1282 = vpack.c.b16 %v1270, %v1269
    %v1283 = vpack.c.b16 %v1272, %v1271
    %v1284 = vpack.c.b16 %v1274, %v1273
    %v1285 = vpack.c.b16 %v1276, %v1275
    %v1286 = vpack.c.b16 %v1278, %v1277
    %1295 = vmatprep.subr.bf16.mxu0 0
    %1296 = vmatpush1.bf16.msra.mxu0 %v1286
    %1297 = vmatprep.subr.bf16.mxu0 0
    %1298 = vmatpush1.bf16.msra.mxu0 %v1285
    %1299 = vmatprep.subr.bf16.mxu0 0
    %1300 = vmatpush1.bf16.msra.mxu0 %v1284
    %1301 = vmatprep.subr.bf16.mxu0 0
    %1302 = vmatpush1.bf16.msra.mxu0 %v1283
    %1303 = vmatprep.subr.bf16.mxu0 0
    %1304 = vmatpush1.bf16.msra.mxu0 %v1282
    %1305 = vmatprep.subr.bf16.mxu0 0
    %1306 = vmatpush1.bf16.msra.mxu0 %v1281
    %1307 = vmatprep.subr.bf16.mxu0 0
    %1308 = vmatpush1.bf16.msra.mxu0 %v1280
    %1309 = vmatprep.subr.bf16.mxu0 0
    %1310 = vmatpush1.bf16.msra.mxu0 %v1279
    %1311 = vmatprep.subr.bf16.mxu0 0
    %1312 = vmatpush2.bf16.msra.mxu0 0
    %1313 = vmatprep.subr.bf16.mxu0 0
    %1314 = vmatpush2.bf16.msra.mxu0 0
    %1315 = vmatprep.subr.bf16.mxu0 0
    %1316 = vmatpush2.bf16.msra.mxu0 0
    %1317 = vmatprep.subr.bf16.mxu0 0
    %1318 = vmatpush2.bf16.msra.mxu0 0
    %1319 = vmatprep.subr.bf16.mxu0 0
    %1320 = vmatpush2.bf16.msra.mxu0 0
    %1321 = vmatprep.subr.bf16.mxu0 0
    %1322 = vmatpush2.bf16.msra.mxu0 0
    %1323 = vmatprep.subr.bf16.mxu0 0
    %1324 = vmatpush2.bf16.msra.mxu0 0
    %1325 = vmatprep.subr.bf16.mxu0 0
    %1326 = vmatpush2.bf16.msra.mxu0 0
    %1327 = vmatprep.mubr.bf16.mxu0 0
    %1328 = vmatmul.mubr.bf16.gmra.mxu0 %v1228
    %v1329 = vpop.f32.mrf.mxu0
    %v1330 = vadd.f32 0.0, %v1329
    %v1331 = vpop.f32.mrf.mxu0
    %v1332 = vpop.f32.mrf.mxu0
    %v1333 = vadd.f32 0.0, %v1332
    %v1334 = vpop.f32.mrf.mxu0
    %1335 = vmatprep.mubr.bf16.mxu0 0
    %1336 = vmatmul.mubr.bf16.gmra.mxu0 %v1229
    %v1337 = vpop.f32.mrf.mxu0
    %v1338 = vadd.f32 0.0, %v1337
    %v1339 = vpop.f32.mrf.mxu0
    %v1340 = vpop.f32.mrf.mxu0
    %v1341 = vadd.f32 0.0, %v1340
    %v1342 = vpop.f32.mrf.mxu0
    %1343 = vdwg.mxu0
    %v1360 = vunpack.c.l.b16 %v1212
    %v1361 = vunpack.c.l.b16 %v1213
    %v1362 = vunpack.c.l.b16 %v1214
    %v1363 = vunpack.c.l.b16 %v1215
    %v1364 = vunpack.c.l.b16 %v1216
    %v1365 = vunpack.c.l.b16 %v1217
    %v1366 = vunpack.c.l.b16 %v1218
    %v1367 = vunpack.c.l.b16 %v1219
    %v1368 = vunpack.c.l.b16 %v1220
    %v1369 = vunpack.c.l.b16 %v1221
    %v1370 = vunpack.c.l.b16 %v1222
    %v1371 = vunpack.c.l.b16 %v1223
    %v1372 = vunpack.c.l.b16 %v1224
    %v1373 = vunpack.c.l.b16 %v1225
    %v1374 = vunpack.c.l.b16 %v1226
    %v1375 = vunpack.c.l.b16 %v1227
    %v1376 = vpack.c.b16 %v1361, %v1360
    %v1377 = vpack.c.b16 %v1363, %v1362
    %v1378 = vpack.c.b16 %v1365, %v1364
    %v1379 = vpack.c.b16 %v1367, %v1366
    %v1380 = vpack.c.b16 %v1369, %v1368
    %v1381 = vpack.c.b16 %v1371, %v1370
    %v1382 = vpack.c.b16 %v1373, %v1372
    %v1383 = vpack.c.b16 %v1375, %v1374
    %1392 = vmatprep.subr.bf16.mxu0 0
    %1393 = vmatpush1.bf16.msra.mxu0 %v1383
    %1394 = vmatprep.subr.bf16.mxu0 0
    %1395 = vmatpush1.bf16.msra.mxu0 %v1382
    %1396 = vmatprep.subr.bf16.mxu0 0
    %1397 = vmatpush1.bf16.msra.mxu0 %v1381
    %1398 = vmatprep.subr.bf16.mxu0 0
    %1399 = vmatpush1.bf16.msra.mxu0 %v1380
    %1400 = vmatprep.subr.bf16.mxu0 0
    %1401 = vmatpush1.bf16.msra.mxu0 %v1379
    %1402 = vmatprep.subr.bf16.mxu0 0
    %1403 = vmatpush1.bf16.msra.mxu0 %v1378
    %1404 = vmatprep.subr.bf16.mxu0 0
    %1405 = vmatpush1.bf16.msra.mxu0 %v1377
    %1406 = vmatprep.subr.bf16.mxu0 0
    %1407 = vmatpush1.bf16.msra.mxu0 %v1376
    %1408 = vmatprep.subr.bf16.mxu0 0
    %1409 = vmatpush2.bf16.msra.mxu0 0
    %1410 = vmatprep.subr.bf16.mxu0 0
    %1411 = vmatpush2.bf16.msra.mxu0 0
    %1412 = vmatprep.subr.bf16.mxu0 0
    %1413 = vmatpush2.bf16.msra.mxu0 0
    %1414 = vmatprep.subr.bf16.mxu0 0
    %1415 = vmatpush2.bf16.msra.mxu0 0
    %1416 = vmatprep.subr.bf16.mxu0 0
    %1417 = vmatpush2.bf16.msra.mxu0 0
    %1418 = vmatprep.subr.bf16.mxu0 0
    %1419 = vmatpush2.bf16.msra.mxu0 0
    %1420 = vmatprep.subr.bf16.mxu0 0
    %1421 = vmatpush2.bf16.msra.mxu0 0
    %1422 = vmatprep.subr.bf16.mxu0 0
    %1423 = vmatpush2.bf16.msra.mxu0 0
    %1424 = vmatprep.mubr.bf16.mxu0 0
    %1425 = vmatmul.mubr.bf16.gmra.mxu0 %v1210
    %v1426 = vpop.f32.mrf.mxu0
    %v1427 = vadd.f32 %v1330, %v1426
    %v1428 = vpop.f32.mrf.mxu0
    %v1429 = vpop.f32.mrf.mxu0
    %v1430 = vadd.f32 %v1333, %v1429
    %v1431 = vpop.f32.mrf.mxu0
    %1432 = vmatprep.mubr.bf16.mxu0 0
    %1433 = vmatmul.mubr.bf16.gmra.mxu0 %v1211
    %v1434 = vpop.f32.mrf.mxu0
    %v1435 = vadd.f32 %v1338, %v1434
    %v1436 = vpop.f32.mrf.mxu0
    %v1437 = vpop.f32.mrf.mxu0
    %v1438 = vadd.f32 %v1341, %v1437
    %v1439 = vpop.f32.mrf.mxu0
    %1440 = vdwg.mxu0
    %v1441 = vrot.slane %v1194, 1
    %v1442 = vrot.slane %v1195, 1
    %v1443 = vrot.slane %v1196, 1
    %v1444 = vrot.slane %v1197, 1
    %v1445 = vsel %vm845, %v1443, %v1444
    %v1446 = vsel %vm845, %v1442, %v1443
    %v1447 = vsel %vm845, %v1441, %v1442
    %v1448 = vsel %vm845, %v1444, %v1441
    %v1449 = vmul.f32 %v1447, %v858
    %v1450 = vmul.f32 %v1446, %v863
    %v1451 = vmul.f32 %v1445, %v868
    %v1452 = vmul.f32 %v1448, %v873
    %v1453 = vpack.c.bf16 %v1450, %v1449
    %v1454 = vpack.c.bf16 %v1452, %v1451
    %s1455 = scalar_lea.vmem [#allocation8], 128
    %v1456 = vld [vmem:[%s1455] sm:$0xf]
    %v1457 = vld [vmem:[%s1455 + $0x4] sm:$0xf]
    %v1458 = vld [vmem:[%s1455 + $0x8] sm:$0xf]
    %v1459 = vld [vmem:[%s1455 + $0xc] sm:$0xf]
    %v1460 = vld [vmem:[%s1455 + $0x10] sm:$0xf]
    %v1461 = vld [vmem:[%s1455 + $0x14] sm:$0xf]
    %v1462 = vld [vmem:[%s1455 + $0x18] sm:$0xf]
    %v1463 = vld [vmem:[%s1455 + $0x1c] sm:$0xf]
    %v1464 = vld [vmem:[%s1455 + $0x20] sm:$0xf]
    %v1465 = vld [vmem:[%s1455 + $0x24] sm:$0xf]
    %v1466 = vld [vmem:[%s1455 + $0x28] sm:$0xf]
    %v1467 = vld [vmem:[%s1455 + $0x2c] sm:$0xf]
    %v1468 = vld [vmem:[%s1455 + $0x30] sm:$0xf]
    %v1469 = vld [vmem:[%s1455 + $0x34] sm:$0xf]
    %v1470 = vld [vmem:[%s1455 + $0x38] sm:$0xf]
    %v1471 = vld [vmem:[%s1455 + $0x3c] sm:$0xf]
    %v1488 = vunpack.c.l.b16 %v1456
    %v1489 = vunpack.c.l.b16 %v1457
    %v1490 = vunpack.c.l.b16 %v1458
    %v1491 = vunpack.c.l.b16 %v1459
    %v1492 = vunpack.c.l.b16 %v1460
    %v1493 = vunpack.c.l.b16 %v1461
    %v1494 = vunpack.c.l.b16 %v1462
    %v1495 = vunpack.c.l.b16 %v1463
    %v1496 = vunpack.c.l.b16 %v1464
    %v1497 = vunpack.c.l.b16 %v1465
    %v1498 = vunpack.c.l.b16 %v1466
    %v1499 = vunpack.c.l.b16 %v1467
    %v1500 = vunpack.c.l.b16 %v1468
    %v1501 = vunpack.c.l.b16 %v1469
    %v1502 = vunpack.c.l.b16 %v1470
    %v1503 = vunpack.c.l.b16 %v1471
    %v1504 = vpack.c.b16 %v1489, %v1488
    %v1505 = vpack.c.b16 %v1491, %v1490
    %v1506 = vpack.c.b16 %v1493, %v1492
    %v1507 = vpack.c.b16 %v1495, %v1494
    %v1508 = vpack.c.b16 %v1497, %v1496
    %v1509 = vpack.c.b16 %v1499, %v1498
    %v1510 = vpack.c.b16 %v1501, %v1500
    %v1511 = vpack.c.b16 %v1503, %v1502
    %1520 = vmatprep.subr.bf16.mxu0 0
    %1521 = vmatpush1.bf16.msra.mxu0 %v1511
    %1522 = vmatprep.subr.bf16.mxu0 0
    %1523 = vmatpush1.bf16.msra.mxu0 %v1510
    %1524 = vmatprep.subr.bf16.mxu0 0
    %1525 = vmatpush1.bf16.msra.mxu0 %v1509
    %1526 = vmatprep.subr.bf16.mxu0 0
    %1527 = vmatpush1.bf16.msra.mxu0 %v1508
    %1528 = vmatprep.subr.bf16.mxu0 0
    %1529 = vmatpush1.bf16.msra.mxu0 %v1507
    %1530 = vmatprep.subr.bf16.mxu0 0
    %1531 = vmatpush1.bf16.msra.mxu0 %v1506
    %1532 = vmatprep.subr.bf16.mxu0 0
    %1533 = vmatpush1.bf16.msra.mxu0 %v1505
    %1534 = vmatprep.subr.bf16.mxu0 0
    %1535 = vmatpush1.bf16.msra.mxu0 %v1504
    %1536 = vmatprep.subr.bf16.mxu0 0
    %1537 = vmatpush2.bf16.msra.mxu0 0
    %1538 = vmatprep.subr.bf16.mxu0 0
    %1539 = vmatpush2.bf16.msra.mxu0 0
    %1540 = vmatprep.subr.bf16.mxu0 0
    %1541 = vmatpush2.bf16.msra.mxu0 0
    %1542 = vmatprep.subr.bf16.mxu0 0
    %1543 = vmatpush2.bf16.msra.mxu0 0
    %1544 = vmatprep.subr.bf16.mxu0 0
    %1545 = vmatpush2.bf16.msra.mxu0 0
    %1546 = vmatprep.subr.bf16.mxu0 0
    %1547 = vmatpush2.bf16.msra.mxu0 0
    %1548 = vmatprep.subr.bf16.mxu0 0
    %1549 = vmatpush2.bf16.msra.mxu0 0
    %1550 = vmatprep.subr.bf16.mxu0 0
    %1551 = vmatpush2.bf16.msra.mxu0 0
    %1552 = vmatprep.mubr.bf16.mxu0 0
    %1553 = vmatmul.mubr.bf16.gmra.mxu0 %v1453
    %v1554 = vpop.f32.mrf.mxu0
    %v1555 = vadd.f32 0.0, %v1554
    %v1556 = vpop.f32.mrf.mxu0
    %v1557 = vpop.f32.mrf.mxu0
    %v1558 = vadd.f32 0.0, %v1557
    %v1559 = vpop.f32.mrf.mxu0
    %1560 = vmatprep.mubr.bf16.mxu0 0
    %1561 = vmatmul.mubr.bf16.gmra.mxu0 %v1454
    %v1562 = vpop.f32.mrf.mxu0
    %v1563 = vadd.f32 0.0, %v1562
    %v1564 = vpop.f32.mrf.mxu0
    %v1565 = vpop.f32.mrf.mxu0
    %v1566 = vadd.f32 0.0, %v1565
    %v1567 = vpop.f32.mrf.mxu0
    %1568 = vdwg.mxu0
    %v1569 = vadd.f32 %v1427, %v1555
    %v1570 = vadd.f32 %v1430, %v1558
    %v1571 = vadd.f32 %v1435, %v1563
    %v1572 = vadd.f32 %v1438, %v1566
    %v1573 = vld [vmem:[%s19] sm:$0x1]
    %v1575 = vlaneseq
    %v1576 = vshrl.u32 %v1575, 7
    %v1577 = vsub.s32 0, %v1576
    %v1578 = vrot.slane %v1573, %v1577
    %v1580 = vadd.f32 %v1569, %v1578
    %v1581 = vadd.f32 %v1570, %v1578
    %v1582 = vadd.f32 %v1571, %v1578
    %v1583 = vadd.f32 %v1572, %v1578
    %v1584 = vmax.f32 %v1580, 0.0
    %v1585 = vmax.f32 %v1581, 0.0
    %v1586 = vmax.f32 %v1582, 0.0
    %v1587 = vmax.f32 %v1583, 0.0
    %v1588 = vrot.slane %v1584, 5
    %v1589 = vrot.slane %v1585, 5
    %v1590 = vrot.slane %v1586, 5
    %v1591 = vrot.slane %v1587, 5
    %vm1592 = vcmp.lt.s32.totalorder %v575, 3
    %v1593 = vsel %vm1592, %v1590, %v1591
    %v1594 = vsel %vm1592, %v1589, %v1590
    %v1595 = vsel %vm1592, %v1588, %v1589
    %v1596 = vsel %vm1592, %v1591, %v1588
    %s1597 = scalar_lea.vmem %s3, 32
    %v1598 = vld [vmem:[%s1597] sm:$0xff]
    %v1599 = vld [vmem:[%s1597 + $0x8] sm:$0xff]
    %v1600 = vld [vmem:[%s1597 + $0x10] sm:$0xff]
    %v1601 = vld [vmem:[%s1597 + $0x18] sm:$0xff]
    %1603 = vset.pattern.permute.xlu0 0
    %1604 = vperm.xlu0 %1603, %v1598
    %v1605 = vpop.permute.xlu0 %1604
    %1608 = vset.pattern.permute.xlu0 0
    %1609 = vperm.xlu0 %1608, %v1599
    %v1610 = vpop.permute.xlu0 %1609
    %1613 = vset.pattern.permute.xlu0 0
    %1614 = vperm.xlu0 %1613, %v1600
    %v1615 = vpop.permute.xlu0 %1614
    %1618 = vset.pattern.permute.xlu0 0
    %1619 = vperm.xlu0 %1618, %v1601
    %v1620 = vpop.permute.xlu0 %1619
    %v1622 = vmul.f32 %v1596, %v1605
    %v1623 = vmul.f32 %v1595, %v1610
    %v1624 = vmul.f32 %v1594, %v1615
    %v1625 = vmul.f32 %v1593, %v1620
    %v1626 = vpack.c.bf16 %v1623, %v1622
    %v1627 = vpack.c.bf16 %v1625, %v1624
    %v1628 = vld [vmem:[#allocation10] sm:$0xf]
    %v1629 = vld [vmem:[#allocation10 + $0x4] sm:$0xf]
    %v1630 = vld [vmem:[#allocation10 + $0x8] sm:$0xf]
    %v1631 = vld [vmem:[#allocation10 + $0xc] sm:$0xf]
    %v1632 = vld [vmem:[#allocation10 + $0x10] sm:$0xf]
    %v1633 = vld [vmem:[#allocation10 + $0x14] sm:$0xf]
    %v1634 = vld [vmem:[#allocation10 + $0x18] sm:$0xf]
    %v1635 = vld [vmem:[#allocation10 + $0x1c] sm:$0xf]
    %v1636 = vld [vmem:[#allocation10 + $0x20] sm:$0xf]
    %v1637 = vld [vmem:[#allocation10 + $0x24] sm:$0xf]
    %v1638 = vld [vmem:[#allocation10 + $0x28] sm:$0xf]
    %v1639 = vld [vmem:[#allocation10 + $0x2c] sm:$0xf]
    %v1640 = vld [vmem:[#allocation10 + $0x30] sm:$0xf]
    %v1641 = vld [vmem:[#allocation10 + $0x34] sm:$0xf]
    %v1642 = vld [vmem:[#allocation10 + $0x38] sm:$0xf]
    %v1643 = vld [vmem:[#allocation10 + $0x3c] sm:$0xf]
    %v1644 = vpack.c.bf16 %v1585, %v1584
    %v1645 = vpack.c.bf16 %v1587, %v1586
    %s1646 = scalar_lea.vmem [#allocation10], 64
    %v1647 = vld [vmem:[%s1646] sm:$0xf]
    %v1648 = vld [vmem:[%s1646 + $0x4] sm:$0xf]
    %v1649 = vld [vmem:[%s1646 + $0x8] sm:$0xf]
    %v1650 = vld [vmem:[%s1646 + $0xc] sm:$0xf]
    %v1651 = vld [vmem:[%s1646 + $0x10] sm:$0xf]
    %v1652 = vld [vmem:[%s1646 + $0x14] sm:$0xf]
    %v1653 = vld [vmem:[%s1646 + $0x18] sm:$0xf]
    %v1654 = vld [vmem:[%s1646 + $0x1c] sm:$0xf]
    %v1655 = vld [vmem:[%s1646 + $0x20] sm:$0xf]
    %v1656 = vld [vmem:[%s1646 + $0x24] sm:$0xf]
    %v1657 = vld [vmem:[%s1646 + $0x28] sm:$0xf]
    %v1658 = vld [vmem:[%s1646 + $0x2c] sm:$0xf]
    %v1659 = vld [vmem:[%s1646 + $0x30] sm:$0xf]
    %v1660 = vld [vmem:[%s1646 + $0x34] sm:$0xf]
    %v1661 = vld [vmem:[%s1646 + $0x38] sm:$0xf]
    %v1662 = vld [vmem:[%s1646 + $0x3c] sm:$0xf]
    %v1679 = vunpack.c.l.b16 %v1647
    %v1680 = vunpack.c.l.b16 %v1648
    %v1681 = vunpack.c.l.b16 %v1649
    %v1682 = vunpack.c.l.b16 %v1650
    %v1683 = vunpack.c.l.b16 %v1651
    %v1684 = vunpack.c.l.b16 %v1652
    %v1685 = vunpack.c.l.b16 %v1653
    %v1686 = vunpack.c.l.b16 %v1654
    %v1687 = vunpack.c.l.b16 %v1655
    %v1688 = vunpack.c.l.b16 %v1656
    %v1689 = vunpack.c.l.b16 %v1657
    %v1690 = vunpack.c.l.b16 %v1658
    %v1691 = vunpack.c.l.b16 %v1659
    %v1692 = vunpack.c.l.b16 %v1660
    %v1693 = vunpack.c.l.b16 %v1661
    %v1694 = vunpack.c.l.b16 %v1662
    %v1695 = vpack.c.b16 %v1680, %v1679
    %v1696 = vpack.c.b16 %v1682, %v1681
    %v1697 = vpack.c.b16 %v1684, %v1683
    %v1698 = vpack.c.b16 %v1686, %v1685
    %v1699 = vpack.c.b16 %v1688, %v1687
    %v1700 = vpack.c.b16 %v1690, %v1689
    %v1701 = vpack.c.b16 %v1692, %v1691
    %v1702 = vpack.c.b16 %v1694, %v1693
    %1711 = vmatprep.subr.bf16.mxu0 0
    %1712 = vmatpush1.bf16.msra.mxu0 %v1702
    %1713 = vmatprep.subr.bf16.mxu0 0
    %1714 = vmatpush1.bf16.msra.mxu0 %v1701
    %1715 = vmatprep.subr.bf16.mxu0 0
    %1716 = vmatpush1.bf16.msra.mxu0 %v1700
    %1717 = vmatprep.subr.bf16.mxu0 0
    %1718 = vmatpush1.bf16.msra.mxu0 %v1699
    %1719 = vmatprep.subr.bf16.mxu0 0
    %1720 = vmatpush1.bf16.msra.mxu0 %v1698
    %1721 = vmatprep.subr.bf16.mxu0 0
    %1722 = vmatpush1.bf16.msra.mxu0 %v1697
    %1723 = vmatprep.subr.bf16.mxu0 0
    %1724 = vmatpush1.bf16.msra.mxu0 %v1696
    %1725 = vmatprep.subr.bf16.mxu0 0
    %1726 = vmatpush1.bf16.msra.mxu0 %v1695
    %1727 = vmatprep.subr.bf16.mxu0 0
    %1728 = vmatpush2.bf16.msra.mxu0 0
    %1729 = vmatprep.subr.bf16.mxu0 0
    %1730 = vmatpush2.bf16.msra.mxu0 0
    %1731 = vmatprep.subr.bf16.mxu0 0
    %1732 = vmatpush2.bf16.msra.mxu0 0
    %1733 = vmatprep.subr.bf16.mxu0 0
    %1734 = vmatpush2.bf16.msra.mxu0 0
    %1735 = vmatprep.subr.bf16.mxu0 0
    %1736 = vmatpush2.bf16.msra.mxu0 0
    %1737 = vmatprep.subr.bf16.mxu0 0
    %1738 = vmatpush2.bf16.msra.mxu0 0
    %1739 = vmatprep.subr.bf16.mxu0 0
    %1740 = vmatpush2.bf16.msra.mxu0 0
    %1741 = vmatprep.subr.bf16.mxu0 0
    %1742 = vmatpush2.bf16.msra.mxu0 0
    %1743 = vmatprep.mubr.bf16.mxu0 0
    %1744 = vmatmul.mubr.bf16.gmra.mxu0 %v1644
    %v1745 = vpop.f32.mrf.mxu0
    %v1746 = vadd.f32 0.0, %v1745
    %v1747 = vpop.f32.mrf.mxu0
    %v1748 = vpop.f32.mrf.mxu0
    %v1749 = vadd.f32 0.0, %v1748
    %v1750 = vpop.f32.mrf.mxu0
    %1751 = vmatprep.mubr.bf16.mxu0 0
    %1752 = vmatmul.mubr.bf16.gmra.mxu0 %v1645
    %v1753 = vpop.f32.mrf.mxu0
    %v1754 = vadd.f32 0.0, %v1753
    %v1755 = vpop.f32.mrf.mxu0
    %v1756 = vpop.f32.mrf.mxu0
    %v1757 = vadd.f32 0.0, %v1756
    %v1758 = vpop.f32.mrf.mxu0
    %1759 = vdwg.mxu0
    %v1776 = vunpack.c.l.b16 %v1628
    %v1777 = vunpack.c.l.b16 %v1629
    %v1778 = vunpack.c.l.b16 %v1630
    %v1779 = vunpack.c.l.b16 %v1631
    %v1780 = vunpack.c.l.b16 %v1632
    %v1781 = vunpack.c.l.b16 %v1633
    %v1782 = vunpack.c.l.b16 %v1634
    %v1783 = vunpack.c.l.b16 %v1635
    %v1784 = vunpack.c.l.b16 %v1636
    %v1785 = vunpack.c.l.b16 %v1637
    %v1786 = vunpack.c.l.b16 %v1638
    %v1787 = vunpack.c.l.b16 %v1639
    %v1788 = vunpack.c.l.b16 %v1640
    %v1789 = vunpack.c.l.b16 %v1641
    %v1790 = vunpack.c.l.b16 %v1642
    %v1791 = vunpack.c.l.b16 %v1643
    %v1792 = vpack.c.b16 %v1777, %v1776
    %v1793 = vpack.c.b16 %v1779, %v1778
    %v1794 = vpack.c.b16 %v1781, %v1780
    %v1795 = vpack.c.b16 %v1783, %v1782
    %v1796 = vpack.c.b16 %v1785, %v1784
    %v1797 = vpack.c.b16 %v1787, %v1786
    %v1798 = vpack.c.b16 %v1789, %v1788
    %v1799 = vpack.c.b16 %v1791, %v1790
    %1808 = vmatprep.subr.bf16.mxu0 0
    %1809 = vmatpush1.bf16.msra.mxu0 %v1799
    %1810 = vmatprep.subr.bf16.mxu0 0
    %1811 = vmatpush1.bf16.msra.mxu0 %v1798
    %1812 = vmatprep.subr.bf16.mxu0 0
    %1813 = vmatpush1.bf16.msra.mxu0 %v1797
    %1814 = vmatprep.subr.bf16.mxu0 0
    %1815 = vmatpush1.bf16.msra.mxu0 %v1796
    %1816 = vmatprep.subr.bf16.mxu0 0
    %1817 = vmatpush1.bf16.msra.mxu0 %v1795
    %1818 = vmatprep.subr.bf16.mxu0 0
    %1819 = vmatpush1.bf16.msra.mxu0 %v1794
    %1820 = vmatprep.subr.bf16.mxu0 0
    %1821 = vmatpush1.bf16.msra.mxu0 %v1793
    %1822 = vmatprep.subr.bf16.mxu0 0
    %1823 = vmatpush1.bf16.msra.mxu0 %v1792
    %1824 = vmatprep.subr.bf16.mxu0 0
    %1825 = vmatpush2.bf16.msra.mxu0 0
    %1826 = vmatprep.subr.bf16.mxu0 0
    %1827 = vmatpush2.bf16.msra.mxu0 0
    %1828 = vmatprep.subr.bf16.mxu0 0
    %1829 = vmatpush2.bf16.msra.mxu0 0
    %1830 = vmatprep.subr.bf16.mxu0 0
    %1831 = vmatpush2.bf16.msra.mxu0 0
    %1832 = vmatprep.subr.bf16.mxu0 0
    %1833 = vmatpush2.bf16.msra.mxu0 0
    %1834 = vmatprep.subr.bf16.mxu0 0
    %1835 = vmatpush2.bf16.msra.mxu0 0
    %1836 = vmatprep.subr.bf16.mxu0 0
    %1837 = vmatpush2.bf16.msra.mxu0 0
    %1838 = vmatprep.subr.bf16.mxu0 0
    %1839 = vmatpush2.bf16.msra.mxu0 0
    %1840 = vmatprep.mubr.bf16.mxu0 0
    %1841 = vmatmul.mubr.bf16.gmra.mxu0 %v1626
    %v1842 = vpop.f32.mrf.mxu0
    %v1843 = vadd.f32 %v1746, %v1842
    %v1844 = vpop.f32.mrf.mxu0
    %v1845 = vpop.f32.mrf.mxu0
    %v1846 = vadd.f32 %v1749, %v1845
    %v1847 = vpop.f32.mrf.mxu0
    %1848 = vmatprep.mubr.bf16.mxu0 0
    %1849 = vmatmul.mubr.bf16.gmra.mxu0 %v1627
    %v1850 = vpop.f32.mrf.mxu0
    %v1851 = vadd.f32 %v1754, %v1850
    %v1852 = vpop.f32.mrf.mxu0
    %v1853 = vpop.f32.mrf.mxu0
    %v1854 = vadd.f32 %v1757, %v1853
    %v1855 = vpop.f32.mrf.mxu0
    %1856 = vdwg.mxu0
    %v1857 = vrot.slane %v1584, 3
    %v1858 = vrot.slane %v1585, 3
    %v1859 = vrot.slane %v1586, 3
    %v1860 = vrot.slane %v1587, 3
    %vm1861 = vcmp.lt.s32.totalorder %v575, 5
    %v1862 = vsel %vm1861, %v1859, %v1860
    %v1863 = vsel %vm1861, %v1858, %v1859
    %v1864 = vsel %vm1861, %v1857, %v1858
    %v1865 = vsel %vm1861, %v1860, %v1857
    %s1866 = scalar_lea.vmem %s3, 128
    %v1867 = vld [vmem:[%s1866] sm:$0xff]
    %v1868 = vld [vmem:[%s1866 + $0x8] sm:$0xff]
    %v1869 = vld [vmem:[%s1866 + $0x10] sm:$0xff]
    %v1870 = vld [vmem:[%s1866 + $0x18] sm:$0xff]
    %1872 = vset.pattern.permute.xlu0 0
    %1873 = vperm.xlu0 %1872, %v1867
    %v1874 = vpop.permute.xlu0 %1873
    %1877 = vset.pattern.permute.xlu0 0
    %1878 = vperm.xlu0 %1877, %v1868
    %v1879 = vpop.permute.xlu0 %1878
    %1882 = vset.pattern.permute.xlu0 0
    %1883 = vperm.xlu0 %1882, %v1869
    %v1884 = vpop.permute.xlu0 %1883
    %1887 = vset.pattern.permute.xlu0 0
    %1888 = vperm.xlu0 %1887, %v1870
    %v1889 = vpop.permute.xlu0 %1888
    %v1891 = vmul.f32 %v1864, %v1874
    %v1892 = vmul.f32 %v1863, %v1879
    %v1893 = vmul.f32 %v1862, %v1884
    %v1894 = vmul.f32 %v1865, %v1889
    %v1895 = vpack.c.bf16 %v1892, %v1891
    %v1896 = vpack.c.bf16 %v1894, %v1893
    %s1897 = scalar_lea.vmem [#allocation10], 128
    %v1898 = vld [vmem:[%s1897] sm:$0xf]
    %v1899 = vld [vmem:[%s1897 + $0x4] sm:$0xf]
    %v1900 = vld [vmem:[%s1897 + $0x8] sm:$0xf]
    %v1901 = vld [vmem:[%s1897 + $0xc] sm:$0xf]
    %v1902 = vld [vmem:[%s1897 + $0x10] sm:$0xf]
    %v1903 = vld [vmem:[%s1897 + $0x14] sm:$0xf]
    %v1904 = vld [vmem:[%s1897 + $0x18] sm:$0xf]
    %v1905 = vld [vmem:[%s1897 + $0x1c] sm:$0xf]
    %v1906 = vld [vmem:[%s1897 + $0x20] sm:$0xf]
    %v1907 = vld [vmem:[%s1897 + $0x24] sm:$0xf]
    %v1908 = vld [vmem:[%s1897 + $0x28] sm:$0xf]
    %v1909 = vld [vmem:[%s1897 + $0x2c] sm:$0xf]
    %v1910 = vld [vmem:[%s1897 + $0x30] sm:$0xf]
    %v1911 = vld [vmem:[%s1897 + $0x34] sm:$0xf]
    %v1912 = vld [vmem:[%s1897 + $0x38] sm:$0xf]
    %v1913 = vld [vmem:[%s1897 + $0x3c] sm:$0xf]
    %v1930 = vunpack.c.l.b16 %v1898
    %v1931 = vunpack.c.l.b16 %v1899
    %v1932 = vunpack.c.l.b16 %v1900
    %v1933 = vunpack.c.l.b16 %v1901
    %v1934 = vunpack.c.l.b16 %v1902
    %v1935 = vunpack.c.l.b16 %v1903
    %v1936 = vunpack.c.l.b16 %v1904
    %v1937 = vunpack.c.l.b16 %v1905
    %v1938 = vunpack.c.l.b16 %v1906
    %v1939 = vunpack.c.l.b16 %v1907
    %v1940 = vunpack.c.l.b16 %v1908
    %v1941 = vunpack.c.l.b16 %v1909
    %v1942 = vunpack.c.l.b16 %v1910
    %v1943 = vunpack.c.l.b16 %v1911
    %v1944 = vunpack.c.l.b16 %v1912
    %v1945 = vunpack.c.l.b16 %v1913
    %v1946 = vpack.c.b16 %v1931, %v1930
    %v1947 = vpack.c.b16 %v1933, %v1932
    %v1948 = vpack.c.b16 %v1935, %v1934
    %v1949 = vpack.c.b16 %v1937, %v1936
    %v1950 = vpack.c.b16 %v1939, %v1938
    %v1951 = vpack.c.b16 %v1941, %v1940
    %v1952 = vpack.c.b16 %v1943, %v1942
    %v1953 = vpack.c.b16 %v1945, %v1944
    %1962 = vmatprep.subr.bf16.mxu0 0
    %1963 = vmatpush1.bf16.msra.mxu0 %v1953
    %1964 = vmatprep.subr.bf16.mxu0 0
    %1965 = vmatpush1.bf16.msra.mxu0 %v1952
    %1966 = vmatprep.subr.bf16.mxu0 0
    %1967 = vmatpush1.bf16.msra.mxu0 %v1951
    %1968 = vmatprep.subr.bf16.mxu0 0
    %1969 = vmatpush1.bf16.msra.mxu0 %v1950
    %1970 = vmatprep.subr.bf16.mxu0 0
    %1971 = vmatpush1.bf16.msra.mxu0 %v1949
    %1972 = vmatprep.subr.bf16.mxu0 0
    %1973 = vmatpush1.bf16.msra.mxu0 %v1948
    %1974 = vmatprep.subr.bf16.mxu0 0
    %1975 = vmatpush1.bf16.msra.mxu0 %v1947
    %1976 = vmatprep.subr.bf16.mxu0 0
    %1977 = vmatpush1.bf16.msra.mxu0 %v1946
    %1978 = vmatprep.subr.bf16.mxu0 0
    %1979 = vmatpush2.bf16.msra.mxu0 0
    %1980 = vmatprep.subr.bf16.mxu0 0
    %1981 = vmatpush2.bf16.msra.mxu0 0
    %1982 = vmatprep.subr.bf16.mxu0 0
    %1983 = vmatpush2.bf16.msra.mxu0 0
    %1984 = vmatprep.subr.bf16.mxu0 0
    %1985 = vmatpush2.bf16.msra.mxu0 0
    %1986 = vmatprep.subr.bf16.mxu0 0
    %1987 = vmatpush2.bf16.msra.mxu0 0
    %1988 = vmatprep.subr.bf16.mxu0 0
    %1989 = vmatpush2.bf16.msra.mxu0 0
    %1990 = vmatprep.subr.bf16.mxu0 0
    %1991 = vmatpush2.bf16.msra.mxu0 0
    %1992 = vmatprep.subr.bf16.mxu0 0
    %1993 = vmatpush2.bf16.msra.mxu0 0
    %1994 = vmatprep.mubr.bf16.mxu0 0
    %1995 = vmatmul.mubr.bf16.gmra.mxu0 %v1895
    %v1996 = vpop.f32.mrf.mxu0
    %v1997 = vadd.f32 0.0, %v1996
    %v1998 = vpop.f32.mrf.mxu0
    %v1999 = vpop.f32.mrf.mxu0
    %v2000 = vadd.f32 0.0, %v1999
    %v2001 = vpop.f32.mrf.mxu0
    %2002 = vmatprep.mubr.bf16.mxu0 0
    %2003 = vmatmul.mubr.bf16.gmra.mxu0 %v1896
    %v2004 = vpop.f32.mrf.mxu0
    %v2005 = vadd.f32 0.0, %v2004
    %v2006 = vpop.f32.mrf.mxu0
    %v2007 = vpop.f32.mrf.mxu0
    %v2008 = vadd.f32 0.0, %v2007
    %v2009 = vpop.f32.mrf.mxu0
    %2010 = vdwg.mxu0
    %v2011 = vadd.f32 %v1843, %v1997
    %v2012 = vadd.f32 %v1846, %v2000
    %v2013 = vadd.f32 %v1851, %v2005
    %v2014 = vadd.f32 %v1854, %v2008
    %v2015 = vld [vmem:[%s23] sm:$0x1]
    %v2017 = vlaneseq
    %v2018 = vshrl.u32 %v2017, 7
    %v2019 = vsub.s32 0, %v2018
    %v2020 = vrot.slane %v2015, %v2019
    %v2022 = vadd.f32 %v2011, %v2020
    %v2023 = vadd.f32 %v2012, %v2020
    %v2024 = vadd.f32 %v2013, %v2020
    %v2025 = vadd.f32 %v2014, %v2020
    %v2026 = vld [vmem:[#allocation11] sm:$0xf]
    %v2027 = vld [vmem:[#allocation11 + $0x4] sm:$0xf]
    %v2028 = vld [vmem:[#allocation11 + $0x8] sm:$0xf]
    %v2029 = vld [vmem:[#allocation11 + $0xc] sm:$0xf]
    %v2030 = vld [vmem:[#allocation11 + $0x10] sm:$0xf]
    %v2031 = vld [vmem:[#allocation11 + $0x14] sm:$0xf]
    %v2032 = vld [vmem:[#allocation11 + $0x18] sm:$0xf]
    %v2033 = vld [vmem:[#allocation11 + $0x1c] sm:$0xf]
    %v2034 = vld [vmem:[#allocation11 + $0x20] sm:$0xf]
    %v2035 = vld [vmem:[#allocation11 + $0x24] sm:$0xf]
    %v2036 = vld [vmem:[#allocation11 + $0x28] sm:$0xf]
    %v2037 = vld [vmem:[#allocation11 + $0x2c] sm:$0xf]
    %v2038 = vld [vmem:[#allocation11 + $0x30] sm:$0xf]
    %v2039 = vld [vmem:[#allocation11 + $0x34] sm:$0xf]
    %v2040 = vld [vmem:[#allocation11 + $0x38] sm:$0xf]
    %v2041 = vld [vmem:[#allocation11 + $0x3c] sm:$0xf]
    %v2042 = vld [vmem:[#allocation11 + $0x40] sm:$0xf]
    %v2043 = vld [vmem:[#allocation11 + $0x44] sm:$0xf]
    %v2044 = vld [vmem:[#allocation11 + $0x48] sm:$0xf]
    %v2045 = vld [vmem:[#allocation11 + $0x4c] sm:$0xf]
    %v2046 = vld [vmem:[#allocation11 + $0x50] sm:$0xf]
    %v2047 = vld [vmem:[#allocation11 + $0x54] sm:$0xf]
    %v2048 = vld [vmem:[#allocation11 + $0x58] sm:$0xf]
    %v2049 = vld [vmem:[#allocation11 + $0x5c] sm:$0xf]
    %v2050 = vld [vmem:[#allocation11 + $0x60] sm:$0xf]
    %v2051 = vld [vmem:[#allocation11 + $0x64] sm:$0xf]
    %v2052 = vld [vmem:[#allocation11 + $0x68] sm:$0xf]
    %v2053 = vld [vmem:[#allocation11 + $0x6c] sm:$0xf]
    %v2054 = vld [vmem:[#allocation11 + $0x70] sm:$0xf]
    %v2055 = vld [vmem:[#allocation11 + $0x74] sm:$0xf]
    %v2056 = vld [vmem:[#allocation11 + $0x78] sm:$0xf]
    %v2057 = vld [vmem:[#allocation11 + $0x7c] sm:$0xf]
    %v2058 = vld [vmem:[%s27] sm:$0x1]
    %v2060 = vlaneseq
    %v2061 = vshrl.u32 %v2060, 7
    %v2062 = vsub.s32 0, %v2061
    %v2063 = vrot.slane %v2058, %v2062
    %v2097 = vunpack.c.l.b16 %v2026
    %v2098 = vunpack.c.l.b16 %v2027
    %v2099 = vunpack.c.l.b16 %v2028
    %v2100 = vunpack.c.l.b16 %v2029
    %v2101 = vunpack.c.l.b16 %v2030
    %v2102 = vunpack.c.l.b16 %v2031
    %v2103 = vunpack.c.l.b16 %v2032
    %v2104 = vunpack.c.l.b16 %v2033
    %v2105 = vunpack.c.l.b16 %v2034
    %v2106 = vunpack.c.l.b16 %v2035
    %v2107 = vunpack.c.l.b16 %v2036
    %v2108 = vunpack.c.l.b16 %v2037
    %v2109 = vunpack.c.l.b16 %v2038
    %v2110 = vunpack.c.l.b16 %v2039
    %v2111 = vunpack.c.l.b16 %v2040
    %v2112 = vunpack.c.l.b16 %v2041
    %v2113 = vunpack.c.l.b16 %v2042
    %v2114 = vunpack.c.l.b16 %v2043
    %v2115 = vunpack.c.l.b16 %v2044
    %v2116 = vunpack.c.l.b16 %v2045
    %v2117 = vunpack.c.l.b16 %v2046
    %v2118 = vunpack.c.l.b16 %v2047
    %v2119 = vunpack.c.l.b16 %v2048
    %v2120 = vunpack.c.l.b16 %v2049
    %v2121 = vunpack.c.l.b16 %v2050
    %v2122 = vunpack.c.l.b16 %v2051
    %v2123 = vunpack.c.l.b16 %v2052
    %v2124 = vunpack.c.l.b16 %v2053
    %v2125 = vunpack.c.l.b16 %v2054
    %v2126 = vunpack.c.l.b16 %v2055
    %v2127 = vunpack.c.l.b16 %v2056
    %v2128 = vunpack.c.l.b16 %v2057
    %v2129 = vpack.c.b16 %v2098, %v2097
    %v2130 = vpack.c.b16 %v2100, %v2099
    %v2131 = vpack.c.b16 %v2102, %v2101
    %v2132 = vpack.c.b16 %v2104, %v2103
    %v2133 = vpack.c.b16 %v2106, %v2105
    %v2134 = vpack.c.b16 %v2108, %v2107
    %v2135 = vpack.c.b16 %v2110, %v2109
    %v2136 = vpack.c.b16 %v2112, %v2111
    %v2137 = vpack.c.b16 %v2114, %v2113
    %v2138 = vpack.c.b16 %v2116, %v2115
    %v2139 = vpack.c.b16 %v2118, %v2117
    %v2140 = vpack.c.b16 %v2120, %v2119
    %v2141 = vpack.c.b16 %v2122, %v2121
    %v2142 = vpack.c.b16 %v2124, %v2123
    %v2143 = vpack.c.b16 %v2126, %v2125
    %v2144 = vpack.c.b16 %v2128, %v2127
    %2161 = vmatprep.subr.bf16.mxu0 0
    %2162 = vmatpush1.bf16.msra.mxu0 %v2136
    %2163 = vmatprep.subr.bf16.mxu0 0
    %2164 = vmatpush1.bf16.msra.mxu0 %v2135
    %2165 = vmatprep.subr.bf16.mxu0 0
    %2166 = vmatpush1.bf16.msra.mxu0 %v2134
    %2167 = vmatprep.subr.bf16.mxu0 0
    %2168 = vmatpush1.bf16.msra.mxu0 %v2133
    %2169 = vmatprep.subr.bf16.mxu0 0
    %2170 = vmatpush1.bf16.msra.mxu0 %v2132
    %2171 = vmatprep.subr.bf16.mxu0 0
    %2172 = vmatpush1.bf16.msra.mxu0 %v2131
    %2173 = vmatprep.subr.bf16.mxu0 0
    %2174 = vmatpush1.bf16.msra.mxu0 %v2130
    %2175 = vmatprep.subr.bf16.mxu0 0
    %2176 = vmatpush1.bf16.msra.mxu0 %v2129
    %2177 = vmatprep.subr.bf16.mxu0 0
    %2178 = vmatpush2.bf16.msra.mxu0 %v2144
    %2179 = vmatprep.subr.bf16.mxu0 0
    %2180 = vmatpush2.bf16.msra.mxu0 %v2143
    %2181 = vmatprep.subr.bf16.mxu0 0
    %2182 = vmatpush2.bf16.msra.mxu0 %v2142
    %2183 = vmatprep.subr.bf16.mxu0 0
    %2184 = vmatpush2.bf16.msra.mxu0 %v2141
    %2185 = vmatprep.subr.bf16.mxu0 0
    %2186 = vmatpush2.bf16.msra.mxu0 %v2140
    %2187 = vmatprep.subr.bf16.mxu0 0
    %2188 = vmatpush2.bf16.msra.mxu0 %v2139
    %2189 = vmatprep.subr.bf16.mxu0 0
    %2190 = vmatpush2.bf16.msra.mxu0 %v2138
    %2191 = vmatprep.subr.bf16.mxu0 0
    %2192 = vmatpush2.bf16.msra.mxu0 %v2137
    %2193 = vmatprep.mubr.bf16.mxu0 %v379
    %2194 = vmatmul.mubr.bf16.gmra.mxu0 %v378
    %v2195 = vpop.f32.mrf.mxu0
    %v2196 = vadd.f32 %v2063, %v2195
    %v2197 = vpop.f32.mrf.mxu0
    %v2198 = vpop.f32.mrf.mxu0
    %v2199 = vadd.f32 %v2063, %v2198
    %v2200 = vpop.f32.mrf.mxu0
    %2201 = vmatprep.mubr.bf16.mxu0 %v381
    %2202 = vmatmul.mubr.bf16.gmra.mxu0 %v380
    %v2203 = vpop.f32.mrf.mxu0
    %v2204 = vadd.f32 %v2063, %v2203
    %v2205 = vpop.f32.mrf.mxu0
    %v2206 = vpop.f32.mrf.mxu0
    %v2207 = vadd.f32 %v2063, %v2206
    %v2208 = vpop.f32.mrf.mxu0
    %2209 = vdwg.mxu0
    %v2210 = vmax.f32 %v2196, 0.0
    %v2211 = vmax.f32 %v2199, 0.0
    %v2212 = vmax.f32 %v2204, 0.0
    %v2213 = vmax.f32 %v2207, 0.0
    %v2214 = vpack.c.bf16 %v2211, %v2210
    %v2215 = vpack.c.bf16 %v2213, %v2212
    %v2216 = vld [vmem:[#allocation13] sm:$0xf]
    %v2217 = vld [vmem:[#allocation13 + $0x4] sm:$0xf]
    %v2218 = vld [vmem:[#allocation13 + $0x8] sm:$0xf]
    %v2219 = vld [vmem:[#allocation13 + $0xc] sm:$0xf]
    %v2220 = vld [vmem:[#allocation13 + $0x10] sm:$0xf]
    %v2221 = vld [vmem:[#allocation13 + $0x14] sm:$0xf]
    %v2222 = vld [vmem:[#allocation13 + $0x18] sm:$0xf]
    %v2223 = vld [vmem:[#allocation13 + $0x1c] sm:$0xf]
    %v2224 = vld [vmem:[#allocation13 + $0x20] sm:$0xf]
    %v2225 = vld [vmem:[#allocation13 + $0x24] sm:$0xf]
    %v2226 = vld [vmem:[#allocation13 + $0x28] sm:$0xf]
    %v2227 = vld [vmem:[#allocation13 + $0x2c] sm:$0xf]
    %v2228 = vld [vmem:[#allocation13 + $0x30] sm:$0xf]
    %v2229 = vld [vmem:[#allocation13 + $0x34] sm:$0xf]
    %v2230 = vld [vmem:[#allocation13 + $0x38] sm:$0xf]
    %v2231 = vld [vmem:[#allocation13 + $0x3c] sm:$0xf]
    %v2232 = vld [vmem:[%s31] sm:$0x1]
    %v2234 = vlaneseq
    %v2235 = vshrl.u32 %v2234, 7
    %v2236 = vsub.s32 0, %v2235
    %v2237 = vrot.slane %v2232, %v2236
    %v2255 = vunpack.c.l.b16 %v2216
    %v2256 = vunpack.c.l.b16 %v2217
    %v2257 = vunpack.c.l.b16 %v2218
    %v2258 = vunpack.c.l.b16 %v2219
    %v2259 = vunpack.c.l.b16 %v2220
    %v2260 = vunpack.c.l.b16 %v2221
    %v2261 = vunpack.c.l.b16 %v2222
    %v2262 = vunpack.c.l.b16 %v2223
    %v2263 = vunpack.c.l.b16 %v2224
    %v2264 = vunpack.c.l.b16 %v2225
    %v2265 = vunpack.c.l.b16 %v2226
    %v2266 = vunpack.c.l.b16 %v2227
    %v2267 = vunpack.c.l.b16 %v2228
    %v2268 = vunpack.c.l.b16 %v2229
    %v2269 = vunpack.c.l.b16 %v2230
    %v2270 = vunpack.c.l.b16 %v2231
    %v2271 = vpack.c.b16 %v2256, %v2255
    %v2272 = vpack.c.b16 %v2258, %v2257
    %v2273 = vpack.c.b16 %v2260, %v2259
    %v2274 = vpack.c.b16 %v2262, %v2261
    %v2275 = vpack.c.b16 %v2264, %v2263
    %v2276 = vpack.c.b16 %v2266, %v2265
    %v2277 = vpack.c.b16 %v2268, %v2267
    %v2278 = vpack.c.b16 %v2270, %v2269
    %2287 = vmatprep.subr.bf16.mxu0 0
    %2288 = vmatpush1.bf16.msra.mxu0 %v2278
    %2289 = vmatprep.subr.bf16.mxu0 0
    %2290 = vmatpush1.bf16.msra.mxu0 %v2277
    %2291 = vmatprep.subr.bf16.mxu0 0
    %2292 = vmatpush1.bf16.msra.mxu0 %v2276
    %2293 = vmatprep.subr.bf16.mxu0 0
    %2294 = vmatpush1.bf16.msra.mxu0 %v2275
    %2295 = vmatprep.subr.bf16.mxu0 0
    %2296 = vmatpush1.bf16.msra.mxu0 %v2274
    %2297 = vmatprep.subr.bf16.mxu0 0
    %2298 = vmatpush1.bf16.msra.mxu0 %v2273
    %2299 = vmatprep.subr.bf16.mxu0 0
    %2300 = vmatpush1.bf16.msra.mxu0 %v2272
    %2301 = vmatprep.subr.bf16.mxu0 0
    %2302 = vmatpush1.bf16.msra.mxu0 %v2271
    %2303 = vmatprep.subr.bf16.mxu0 0
    %2304 = vmatpush2.bf16.msra.mxu0 0
    %2305 = vmatprep.subr.bf16.mxu0 0
    %2306 = vmatpush2.bf16.msra.mxu0 0
    %2307 = vmatprep.subr.bf16.mxu0 0
    %2308 = vmatpush2.bf16.msra.mxu0 0
    %2309 = vmatprep.subr.bf16.mxu0 0
    %2310 = vmatpush2.bf16.msra.mxu0 0
    %2311 = vmatprep.subr.bf16.mxu0 0
    %2312 = vmatpush2.bf16.msra.mxu0 0
    %2313 = vmatprep.subr.bf16.mxu0 0
    %2314 = vmatpush2.bf16.msra.mxu0 0
    %2315 = vmatprep.subr.bf16.mxu0 0
    %2316 = vmatpush2.bf16.msra.mxu0 0
    %2317 = vmatprep.subr.bf16.mxu0 0
    %2318 = vmatpush2.bf16.msra.mxu0 0
    %2319 = vmatprep.mubr.bf16.mxu0 0
    %2320 = vmatmul.mubr.bf16.gmra.mxu0 %v2214
    %v2321 = vpop.f32.mrf.mxu0
    %v2322 = vadd.f32 %v2237, %v2321
    %v2323 = vpop.f32.mrf.mxu0
    %v2324 = vpop.f32.mrf.mxu0
    %v2325 = vadd.f32 %v2237, %v2324
    %v2326 = vpop.f32.mrf.mxu0
    %2327 = vmatprep.mubr.bf16.mxu0 0
    %2328 = vmatmul.mubr.bf16.gmra.mxu0 %v2215
    %v2329 = vpop.f32.mrf.mxu0
    %v2330 = vadd.f32 %v2237, %v2329
    %v2331 = vpop.f32.mrf.mxu0
    %v2332 = vpop.f32.mrf.mxu0
    %v2333 = vadd.f32 %v2237, %v2332
    %v2334 = vpop.f32.mrf.mxu0
    %2335 = vdwg.mxu0
    %v2336 = vmax.f32 %v2322, 0.0
    %v2337 = vmax.f32 %v2325, 0.0
    %v2338 = vmax.f32 %v2330, 0.0
    %v2339 = vmax.f32 %v2333, 0.0
    %v2340 = vrot.slane %v2336, 5
    %v2341 = vrot.slane %v2337, 5
    %v2342 = vrot.slane %v2338, 5
    %v2343 = vrot.slane %v2339, 5
    %v2344 = vsel %vm1592, %v2342, %v2343
    %v2345 = vsel %vm1592, %v2341, %v2342
    %v2346 = vsel %vm1592, %v2340, %v2341
    %v2347 = vsel %vm1592, %v2343, %v2340
    %v2348 = vmul.f32 %v2347, %v1605
    %v2349 = vmul.f32 %v2346, %v1610
    %v2350 = vmul.f32 %v2345, %v1615
    %v2351 = vmul.f32 %v2344, %v1620
    %v2352 = vpack.c.bf16 %v2349, %v2348
    %v2353 = vpack.c.bf16 %v2351, %v2350
    %v2354 = vld [vmem:[#allocation14] sm:$0xf]
    %v2355 = vld [vmem:[#allocation14 + $0x4] sm:$0xf]
    %v2356 = vld [vmem:[#allocation14 + $0x8] sm:$0xf]
    %v2357 = vld [vmem:[#allocation14 + $0xc] sm:$0xf]
    %v2358 = vld [vmem:[#allocation14 + $0x10] sm:$0xf]
    %v2359 = vld [vmem:[#allocation14 + $0x14] sm:$0xf]
    %v2360 = vld [vmem:[#allocation14 + $0x18] sm:$0xf]
    %v2361 = vld [vmem:[#allocation14 + $0x1c] sm:$0xf]
    %v2362 = vld [vmem:[#allocation14 + $0x20] sm:$0xf]
    %v2363 = vld [vmem:[#allocation14 + $0x24] sm:$0xf]
    %v2364 = vld [vmem:[#allocation14 + $0x28] sm:$0xf]
    %v2365 = vld [vmem:[#allocation14 + $0x2c] sm:$0xf]
    %v2366 = vld [vmem:[#allocation14 + $0x30] sm:$0xf]
    %v2367 = vld [vmem:[#allocation14 + $0x34] sm:$0xf]
    %v2368 = vld [vmem:[#allocation14 + $0x38] sm:$0xf]
    %v2369 = vld [vmem:[#allocation14 + $0x3c] sm:$0xf]
    %v2370 = vpack.c.bf16 %v2337, %v2336
    %v2371 = vpack.c.bf16 %v2339, %v2338
    %s2372 = scalar_lea.vmem [#allocation14], 64
    %v2373 = vld [vmem:[%s2372] sm:$0xf]
    %v2374 = vld [vmem:[%s2372 + $0x4] sm:$0xf]
    %v2375 = vld [vmem:[%s2372 + $0x8] sm:$0xf]
    %v2376 = vld [vmem:[%s2372 + $0xc] sm:$0xf]
    %v2377 = vld [vmem:[%s2372 + $0x10] sm:$0xf]
    %v2378 = vld [vmem:[%s2372 + $0x14] sm:$0xf]
    %v2379 = vld [vmem:[%s2372 + $0x18] sm:$0xf]
    %v2380 = vld [vmem:[%s2372 + $0x1c] sm:$0xf]
    %v2381 = vld [vmem:[%s2372 + $0x20] sm:$0xf]
    %v2382 = vld [vmem:[%s2372 + $0x24] sm:$0xf]
    %v2383 = vld [vmem:[%s2372 + $0x28] sm:$0xf]
    %v2384 = vld [vmem:[%s2372 + $0x2c] sm:$0xf]
    %v2385 = vld [vmem:[%s2372 + $0x30] sm:$0xf]
    %v2386 = vld [vmem:[%s2372 + $0x34] sm:$0xf]
    %v2387 = vld [vmem:[%s2372 + $0x38] sm:$0xf]
    %v2388 = vld [vmem:[%s2372 + $0x3c] sm:$0xf]
    %v2405 = vunpack.c.l.b16 %v2373
    %v2406 = vunpack.c.l.b16 %v2374
    %v2407 = vunpack.c.l.b16 %v2375
    %v2408 = vunpack.c.l.b16 %v2376
    %v2409 = vunpack.c.l.b16 %v2377
    %v2410 = vunpack.c.l.b16 %v2378
    %v2411 = vunpack.c.l.b16 %v2379
    %v2412 = vunpack.c.l.b16 %v2380
    %v2413 = vunpack.c.l.b16 %v2381
    %v2414 = vunpack.c.l.b16 %v2382
    %v2415 = vunpack.c.l.b16 %v2383
    %v2416 = vunpack.c.l.b16 %v2384
    %v2417 = vunpack.c.l.b16 %v2385
    %v2418 = vunpack.c.l.b16 %v2386
    %v2419 = vunpack.c.l.b16 %v2387
    %v2420 = vunpack.c.l.b16 %v2388
    %v2421 = vpack.c.b16 %v2406, %v2405
    %v2422 = vpack.c.b16 %v2408, %v2407
    %v2423 = vpack.c.b16 %v2410, %v2409
    %v2424 = vpack.c.b16 %v2412, %v2411
    %v2425 = vpack.c.b16 %v2414, %v2413
    %v2426 = vpack.c.b16 %v2416, %v2415
    %v2427 = vpack.c.b16 %v2418, %v2417
    %v2428 = vpack.c.b16 %v2420, %v2419
    %2437 = vmatprep.subr.bf16.mxu0 0
    %2438 = vmatpush1.bf16.msra.mxu0 %v2428
    %2439 = vmatprep.subr.bf16.mxu0 0
    %2440 = vmatpush1.bf16.msra.mxu0 %v2427
    %2441 = vmatprep.subr.bf16.mxu0 0
    %2442 = vmatpush1.bf16.msra.mxu0 %v2426
    %2443 = vmatprep.subr.bf16.mxu0 0
    %2444 = vmatpush1.bf16.msra.mxu0 %v2425
    %2445 = vmatprep.subr.bf16.mxu0 0
    %2446 = vmatpush1.bf16.msra.mxu0 %v2424
    %2447 = vmatprep.subr.bf16.mxu0 0
    %2448 = vmatpush1.bf16.msra.mxu0 %v2423
    %2449 = vmatprep.subr.bf16.mxu0 0
    %2450 = vmatpush1.bf16.msra.mxu0 %v2422
    %2451 = vmatprep.subr.bf16.mxu0 0
    %2452 = vmatpush1.bf16.msra.mxu0 %v2421
    %2453 = vmatprep.subr.bf16.mxu0 0
    %2454 = vmatpush2.bf16.msra.mxu0 0
    %2455 = vmatprep.subr.bf16.mxu0 0
    %2456 = vmatpush2.bf16.msra.mxu0 0
    %2457 = vmatprep.subr.bf16.mxu0 0
    %2458 = vmatpush2.bf16.msra.mxu0 0
    %2459 = vmatprep.subr.bf16.mxu0 0
    %2460 = vmatpush2.bf16.msra.mxu0 0
    %2461 = vmatprep.subr.bf16.mxu0 0
    %2462 = vmatpush2.bf16.msra.mxu0 0
    %2463 = vmatprep.subr.bf16.mxu0 0
    %2464 = vmatpush2.bf16.msra.mxu0 0
    %2465 = vmatprep.subr.bf16.mxu0 0
    %2466 = vmatpush2.bf16.msra.mxu0 0
    %2467 = vmatprep.subr.bf16.mxu0 0
    %2468 = vmatpush2.bf16.msra.mxu0 0
    %2469 = vmatprep.mubr.bf16.mxu0 0
    %2470 = vmatmul.mubr.bf16.gmra.mxu0 %v2370
    %v2471 = vpop.f32.mrf.mxu0
    %v2472 = vadd.f32 0.0, %v2471
    %v2473 = vpop.f32.mrf.mxu0
    %v2474 = vpop.f32.mrf.mxu0
    %v2475 = vadd.f32 0.0, %v2474
    %v2476 = vpop.f32.mrf.mxu0
    %2477 = vmatprep.mubr.bf16.mxu0 0
    %2478 = vmatmul.mubr.bf16.gmra.mxu0 %v2371
    %v2479 = vpop.f32.mrf.mxu0
    %v2480 = vadd.f32 0.0, %v2479
    %v2481 = vpop.f32.mrf.mxu0
    %v2482 = vpop.f32.mrf.mxu0
    %v2483 = vadd.f32 0.0, %v2482
    %v2484 = vpop.f32.mrf.mxu0
    %2485 = vdwg.mxu0
    %v2502 = vunpack.c.l.b16 %v2354
    %v2503 = vunpack.c.l.b16 %v2355
    %v2504 = vunpack.c.l.b16 %v2356
    %v2505 = vunpack.c.l.b16 %v2357
    %v2506 = vunpack.c.l.b16 %v2358
    %v2507 = vunpack.c.l.b16 %v2359
    %v2508 = vunpack.c.l.b16 %v2360
    %v2509 = vunpack.c.l.b16 %v2361
    %v2510 = vunpack.c.l.b16 %v2362
    %v2511 = vunpack.c.l.b16 %v2363
    %v2512 = vunpack.c.l.b16 %v2364
    %v2513 = vunpack.c.l.b16 %v2365
    %v2514 = vunpack.c.l.b16 %v2366
    %v2515 = vunpack.c.l.b16 %v2367
    %v2516 = vunpack.c.l.b16 %v2368
    %v2517 = vunpack.c.l.b16 %v2369
    %v2518 = vpack.c.b16 %v2503, %v2502
    %v2519 = vpack.c.b16 %v2505, %v2504
    %v2520 = vpack.c.b16 %v2507, %v2506
    %v2521 = vpack.c.b16 %v2509, %v2508
    %v2522 = vpack.c.b16 %v2511, %v2510
    %v2523 = vpack.c.b16 %v2513, %v2512
    %v2524 = vpack.c.b16 %v2515, %v2514
    %v2525 = vpack.c.b16 %v2517, %v2516
    %2534 = vmatprep.subr.bf16.mxu0 0
    %2535 = vmatpush1.bf16.msra.mxu0 %v2525
    %2536 = vmatprep.subr.bf16.mxu0 0
    %2537 = vmatpush1.bf16.msra.mxu0 %v2524
    %2538 = vmatprep.subr.bf16.mxu0 0
    %2539 = vmatpush1.bf16.msra.mxu0 %v2523
    %2540 = vmatprep.subr.bf16.mxu0 0
    %2541 = vmatpush1.bf16.msra.mxu0 %v2522
    %2542 = vmatprep.subr.bf16.mxu0 0
    %2543 = vmatpush1.bf16.msra.mxu0 %v2521
    %2544 = vmatprep.subr.bf16.mxu0 0
    %2545 = vmatpush1.bf16.msra.mxu0 %v2520
    %2546 = vmatprep.subr.bf16.mxu0 0
    %2547 = vmatpush1.bf16.msra.mxu0 %v2519
    %2548 = vmatprep.subr.bf16.mxu0 0
    %2549 = vmatpush1.bf16.msra.mxu0 %v2518
    %2550 = vmatprep.subr.bf16.mxu0 0
    %2551 = vmatpush2.bf16.msra.mxu0 0
    %2552 = vmatprep.subr.bf16.mxu0 0
    %2553 = vmatpush2.bf16.msra.mxu0 0
    %2554 = vmatprep.subr.bf16.mxu0 0
    %2555 = vmatpush2.bf16.msra.mxu0 0
    %2556 = vmatprep.subr.bf16.mxu0 0
    %2557 = vmatpush2.bf16.msra.mxu0 0
    %2558 = vmatprep.subr.bf16.mxu0 0
    %2559 = vmatpush2.bf16.msra.mxu0 0
    %2560 = vmatprep.subr.bf16.mxu0 0
    %2561 = vmatpush2.bf16.msra.mxu0 0
    %2562 = vmatprep.subr.bf16.mxu0 0
    %2563 = vmatpush2.bf16.msra.mxu0 0
    %2564 = vmatprep.subr.bf16.mxu0 0
    %2565 = vmatpush2.bf16.msra.mxu0 0
    %2566 = vmatprep.mubr.bf16.mxu0 0
    %2567 = vmatmul.mubr.bf16.gmra.mxu0 %v2352
    %v2568 = vpop.f32.mrf.mxu0
    %v2569 = vadd.f32 %v2472, %v2568
    %v2570 = vpop.f32.mrf.mxu0
    %v2571 = vpop.f32.mrf.mxu0
    %v2572 = vadd.f32 %v2475, %v2571
    %v2573 = vpop.f32.mrf.mxu0
    %2574 = vmatprep.mubr.bf16.mxu0 0
    %2575 = vmatmul.mubr.bf16.gmra.mxu0 %v2353
    %v2576 = vpop.f32.mrf.mxu0
    %v2577 = vadd.f32 %v2480, %v2576
    %v2578 = vpop.f32.mrf.mxu0
    %v2579 = vpop.f32.mrf.mxu0
    %v2580 = vadd.f32 %v2483, %v2579
    %v2581 = vpop.f32.mrf.mxu0
    %2582 = vdwg.mxu0
    %v2583 = vrot.slane %v2336, 3
    %v2584 = vrot.slane %v2337, 3
    %v2585 = vrot.slane %v2338, 3
    %v2586 = vrot.slane %v2339, 3
    %v2587 = vsel %vm1861, %v2585, %v2586
    %v2588 = vsel %vm1861, %v2584, %v2585
    %v2589 = vsel %vm1861, %v2583, %v2584
    %v2590 = vsel %vm1861, %v2586, %v2583
    %v2591 = vmul.f32 %v2589, %v1874
    %v2592 = vmul.f32 %v2588, %v1879
    %v2593 = vmul.f32 %v2587, %v1884
    %v2594 = vmul.f32 %v2590, %v1889
    %v2595 = vpack.c.bf16 %v2592, %v2591
    %v2596 = vpack.c.bf16 %v2594, %v2593
    %s2597 = scalar_lea.vmem [#allocation14], 128
    %v2598 = vld [vmem:[%s2597] sm:$0xf]
    %v2599 = vld [vmem:[%s2597 + $0x4] sm:$0xf]
    %v2600 = vld [vmem:[%s2597 + $0x8] sm:$0xf]
    %v2601 = vld [vmem:[%s2597 + $0xc] sm:$0xf]
    %v2602 = vld [vmem:[%s2597 + $0x10] sm:$0xf]
    %v2603 = vld [vmem:[%s2597 + $0x14] sm:$0xf]
    %v2604 = vld [vmem:[%s2597 + $0x18] sm:$0xf]
    %v2605 = vld [vmem:[%s2597 + $0x1c] sm:$0xf]
    %v2606 = vld [vmem:[%s2597 + $0x20] sm:$0xf]
    %v2607 = vld [vmem:[%s2597 + $0x24] sm:$0xf]
    %v2608 = vld [vmem:[%s2597 + $0x28] sm:$0xf]
    %v2609 = vld [vmem:[%s2597 + $0x2c] sm:$0xf]
    %v2610 = vld [vmem:[%s2597 + $0x30] sm:$0xf]
    %v2611 = vld [vmem:[%s2597 + $0x34] sm:$0xf]
    %v2612 = vld [vmem:[%s2597 + $0x38] sm:$0xf]
    %v2613 = vld [vmem:[%s2597 + $0x3c] sm:$0xf]
    %v2630 = vunpack.c.l.b16 %v2598
    %v2631 = vunpack.c.l.b16 %v2599
    %v2632 = vunpack.c.l.b16 %v2600
    %v2633 = vunpack.c.l.b16 %v2601
    %v2634 = vunpack.c.l.b16 %v2602
    %v2635 = vunpack.c.l.b16 %v2603
    %v2636 = vunpack.c.l.b16 %v2604
    %v2637 = vunpack.c.l.b16 %v2605
    %v2638 = vunpack.c.l.b16 %v2606
    %v2639 = vunpack.c.l.b16 %v2607
    %v2640 = vunpack.c.l.b16 %v2608
    %v2641 = vunpack.c.l.b16 %v2609
    %v2642 = vunpack.c.l.b16 %v2610
    %v2643 = vunpack.c.l.b16 %v2611
    %v2644 = vunpack.c.l.b16 %v2612
    %v2645 = vunpack.c.l.b16 %v2613
    %v2646 = vpack.c.b16 %v2631, %v2630
    %v2647 = vpack.c.b16 %v2633, %v2632
    %v2648 = vpack.c.b16 %v2635, %v2634
    %v2649 = vpack.c.b16 %v2637, %v2636
    %v2650 = vpack.c.b16 %v2639, %v2638
    %v2651 = vpack.c.b16 %v2641, %v2640
    %v2652 = vpack.c.b16 %v2643, %v2642
    %v2653 = vpack.c.b16 %v2645, %v2644
    %2662 = vmatprep.subr.bf16.mxu0 0
    %2663 = vmatpush1.bf16.msra.mxu0 %v2653
    %2664 = vmatprep.subr.bf16.mxu0 0
    %2665 = vmatpush1.bf16.msra.mxu0 %v2652
    %2666 = vmatprep.subr.bf16.mxu0 0
    %2667 = vmatpush1.bf16.msra.mxu0 %v2651
    %2668 = vmatprep.subr.bf16.mxu0 0
    %2669 = vmatpush1.bf16.msra.mxu0 %v2650
    %2670 = vmatprep.subr.bf16.mxu0 0
    %2671 = vmatpush1.bf16.msra.mxu0 %v2649
    %2672 = vmatprep.subr.bf16.mxu0 0
    %2673 = vmatpush1.bf16.msra.mxu0 %v2648
    %2674 = vmatprep.subr.bf16.mxu0 0
    %2675 = vmatpush1.bf16.msra.mxu0 %v2647
    %2676 = vmatprep.subr.bf16.mxu0 0
    %2677 = vmatpush1.bf16.msra.mxu0 %v2646
    %2678 = vmatprep.subr.bf16.mxu0 0
    %2679 = vmatpush2.bf16.msra.mxu0 0
    %2680 = vmatprep.subr.bf16.mxu0 0
    %2681 = vmatpush2.bf16.msra.mxu0 0
    %2682 = vmatprep.subr.bf16.mxu0 0
    %2683 = vmatpush2.bf16.msra.mxu0 0
    %2684 = vmatprep.subr.bf16.mxu0 0
    %2685 = vmatpush2.bf16.msra.mxu0 0
    %2686 = vmatprep.subr.bf16.mxu0 0
    %2687 = vmatpush2.bf16.msra.mxu0 0
    %2688 = vmatprep.subr.bf16.mxu0 0
    %2689 = vmatpush2.bf16.msra.mxu0 0
    %2690 = vmatprep.subr.bf16.mxu0 0
    %2691 = vmatpush2.bf16.msra.mxu0 0
    %2692 = vmatprep.subr.bf16.mxu0 0
    %2693 = vmatpush2.bf16.msra.mxu0 0
    %2694 = vmatprep.mubr.bf16.mxu0 0
    %2695 = vmatmul.mubr.bf16.gmra.mxu0 %v2595
    %v2696 = vpop.f32.mrf.mxu0
    %v2697 = vadd.f32 0.0, %v2696
    %v2698 = vpop.f32.mrf.mxu0
    %v2699 = vpop.f32.mrf.mxu0
    %v2700 = vadd.f32 0.0, %v2699
    %v2701 = vpop.f32.mrf.mxu0
    %2702 = vmatprep.mubr.bf16.mxu0 0
    %2703 = vmatmul.mubr.bf16.gmra.mxu0 %v2596
    %v2704 = vpop.f32.mrf.mxu0
    %v2705 = vadd.f32 0.0, %v2704
    %v2706 = vpop.f32.mrf.mxu0
    %v2707 = vpop.f32.mrf.mxu0
    %v2708 = vadd.f32 0.0, %v2707
    %v2709 = vpop.f32.mrf.mxu0
    %2710 = vdwg.mxu0
    %v2711 = vadd.f32 %v2569, %v2697
    %v2712 = vadd.f32 %v2572, %v2700
    %v2713 = vadd.f32 %v2577, %v2705
    %v2714 = vadd.f32 %v2580, %v2708
    %v2715 = vld [vmem:[%s35] sm:$0x1]
    %v2717 = vlaneseq
    %v2718 = vshrl.u32 %v2717, 7
    %v2719 = vsub.s32 0, %v2718
    %v2720 = vrot.slane %v2715, %v2719
    %v2722 = vadd.f32 %v2711, %v2720
    %v2723 = vadd.f32 %v2712, %v2720
    %v2724 = vadd.f32 %v2713, %v2720
    %v2725 = vadd.f32 %v2714, %v2720
    %v2726 = vld [vmem:[#allocation16] sm:$0xf]
    %v2727 = vld [vmem:[#allocation16 + $0x4] sm:$0xf]
    %v2728 = vld [vmem:[#allocation16 + $0x8] sm:$0xf]
    %v2729 = vld [vmem:[#allocation16 + $0xc] sm:$0xf]
    %v2730 = vld [vmem:[#allocation16 + $0x10] sm:$0xf]
    %v2731 = vld [vmem:[#allocation16 + $0x14] sm:$0xf]
    %v2732 = vld [vmem:[#allocation16 + $0x18] sm:$0xf]
    %v2733 = vld [vmem:[#allocation16 + $0x1c] sm:$0xf]
    %v2734 = vld [vmem:[#allocation16 + $0x20] sm:$0xf]
    %v2735 = vld [vmem:[#allocation16 + $0x24] sm:$0xf]
    %v2736 = vld [vmem:[#allocation16 + $0x28] sm:$0xf]
    %v2737 = vld [vmem:[#allocation16 + $0x2c] sm:$0xf]
    %v2738 = vld [vmem:[#allocation16 + $0x30] sm:$0xf]
    %v2739 = vld [vmem:[#allocation16 + $0x34] sm:$0xf]
    %v2740 = vld [vmem:[#allocation16 + $0x38] sm:$0xf]
    %v2741 = vld [vmem:[#allocation16 + $0x3c] sm:$0xf]
    %v2742 = vld [vmem:[#allocation16 + $0x40] sm:$0xf]
    %v2743 = vld [vmem:[#allocation16 + $0x44] sm:$0xf]
    %v2744 = vld [vmem:[#allocation16 + $0x48] sm:$0xf]
    %v2745 = vld [vmem:[#allocation16 + $0x4c] sm:$0xf]
    %v2746 = vld [vmem:[#allocation16 + $0x50] sm:$0xf]
    %v2747 = vld [vmem:[#allocation16 + $0x54] sm:$0xf]
    %v2748 = vld [vmem:[#allocation16 + $0x58] sm:$0xf]
    %v2749 = vld [vmem:[#allocation16 + $0x5c] sm:$0xf]
    %v2750 = vld [vmem:[#allocation16 + $0x60] sm:$0xf]
    %v2751 = vld [vmem:[#allocation16 + $0x64] sm:$0xf]
    %v2752 = vld [vmem:[#allocation16 + $0x68] sm:$0xf]
    %v2753 = vld [vmem:[#allocation16 + $0x6c] sm:$0xf]
    %v2754 = vld [vmem:[#allocation16 + $0x70] sm:$0xf]
    %v2755 = vld [vmem:[#allocation16 + $0x74] sm:$0xf]
    %v2756 = vld [vmem:[#allocation16 + $0x78] sm:$0xf]
    %v2757 = vld [vmem:[#allocation16 + $0x7c] sm:$0xf]
    %v2758 = vld [vmem:[%s39] sm:$0x1]
    %v2760 = vlaneseq
    %v2761 = vshrl.u32 %v2760, 7
    %v2762 = vsub.s32 0, %v2761
    %v2763 = vrot.slane %v2758, %v2762
    %v2797 = vunpack.c.l.b16 %v2726
    %v2798 = vunpack.c.l.b16 %v2727
    %v2799 = vunpack.c.l.b16 %v2728
    %v2800 = vunpack.c.l.b16 %v2729
    %v2801 = vunpack.c.l.b16 %v2730
    %v2802 = vunpack.c.l.b16 %v2731
    %v2803 = vunpack.c.l.b16 %v2732
    %v2804 = vunpack.c.l.b16 %v2733
    %v2805 = vunpack.c.l.b16 %v2734
    %v2806 = vunpack.c.l.b16 %v2735
    %v2807 = vunpack.c.l.b16 %v2736
    %v2808 = vunpack.c.l.b16 %v2737
    %v2809 = vunpack.c.l.b16 %v2738
    %v2810 = vunpack.c.l.b16 %v2739
    %v2811 = vunpack.c.l.b16 %v2740
    %v2812 = vunpack.c.l.b16 %v2741
    %v2813 = vunpack.c.l.b16 %v2742
    %v2814 = vunpack.c.l.b16 %v2743
    %v2815 = vunpack.c.l.b16 %v2744
    %v2816 = vunpack.c.l.b16 %v2745
    %v2817 = vunpack.c.l.b16 %v2746
    %v2818 = vunpack.c.l.b16 %v2747
    %v2819 = vunpack.c.l.b16 %v2748
    %v2820 = vunpack.c.l.b16 %v2749
    %v2821 = vunpack.c.l.b16 %v2750
    %v2822 = vunpack.c.l.b16 %v2751
    %v2823 = vunpack.c.l.b16 %v2752
    %v2824 = vunpack.c.l.b16 %v2753
    %v2825 = vunpack.c.l.b16 %v2754
    %v2826 = vunpack.c.l.b16 %v2755
    %v2827 = vunpack.c.l.b16 %v2756
    %v2828 = vunpack.c.l.b16 %v2757
    %v2829 = vpack.c.b16 %v2798, %v2797
    %v2830 = vpack.c.b16 %v2800, %v2799
    %v2831 = vpack.c.b16 %v2802, %v2801
    %v2832 = vpack.c.b16 %v2804, %v2803
    %v2833 = vpack.c.b16 %v2806, %v2805
    %v2834 = vpack.c.b16 %v2808, %v2807
    %v2835 = vpack.c.b16 %v2810, %v2809
    %v2836 = vpack.c.b16 %v2812, %v2811
    %v2837 = vpack.c.b16 %v2814, %v2813
    %v2838 = vpack.c.b16 %v2816, %v2815
    %v2839 = vpack.c.b16 %v2818, %v2817
    %v2840 = vpack.c.b16 %v2820, %v2819
    %v2841 = vpack.c.b16 %v2822, %v2821
    %v2842 = vpack.c.b16 %v2824, %v2823
    %v2843 = vpack.c.b16 %v2826, %v2825
    %v2844 = vpack.c.b16 %v2828, %v2827
    %2861 = vmatprep.subr.bf16.mxu0 0
    %2862 = vmatpush1.bf16.msra.mxu0 %v2836
    %2863 = vmatprep.subr.bf16.mxu0 0
    %2864 = vmatpush1.bf16.msra.mxu0 %v2835
    %2865 = vmatprep.subr.bf16.mxu0 0
    %2866 = vmatpush1.bf16.msra.mxu0 %v2834
    %2867 = vmatprep.subr.bf16.mxu0 0
    %2868 = vmatpush1.bf16.msra.mxu0 %v2833
    %2869 = vmatprep.subr.bf16.mxu0 0
    %2870 = vmatpush1.bf16.msra.mxu0 %v2832
    %2871 = vmatprep.subr.bf16.mxu0 0
    %2872 = vmatpush1.bf16.msra.mxu0 %v2831
    %2873 = vmatprep.subr.bf16.mxu0 0
    %2874 = vmatpush1.bf16.msra.mxu0 %v2830
    %2875 = vmatprep.subr.bf16.mxu0 0
    %2876 = vmatpush1.bf16.msra.mxu0 %v2829
    %2877 = vmatprep.subr.bf16.mxu0 0
    %2878 = vmatpush2.bf16.msra.mxu0 %v2844
    %2879 = vmatprep.subr.bf16.mxu0 0
    %2880 = vmatpush2.bf16.msra.mxu0 %v2843
    %2881 = vmatprep.subr.bf16.mxu0 0
    %2882 = vmatpush2.bf16.msra.mxu0 %v2842
    %2883 = vmatprep.subr.bf16.mxu0 0
    %2884 = vmatpush2.bf16.msra.mxu0 %v2841
    %2885 = vmatprep.subr.bf16.mxu0 0
    %2886 = vmatpush2.bf16.msra.mxu0 %v2840
    %2887 = vmatprep.subr.bf16.mxu0 0
    %2888 = vmatpush2.bf16.msra.mxu0 %v2839
    %2889 = vmatprep.subr.bf16.mxu0 0
    %2890 = vmatpush2.bf16.msra.mxu0 %v2838
    %2891 = vmatprep.subr.bf16.mxu0 0
    %2892 = vmatpush2.bf16.msra.mxu0 %v2837
    %2893 = vmatprep.mubr.bf16.mxu0 %v379
    %2894 = vmatmul.mubr.bf16.gmra.mxu0 %v378
    %v2895 = vpop.f32.mrf.mxu0
    %v2896 = vadd.f32 %v2763, %v2895
    %v2897 = vpop.f32.mrf.mxu0
    %v2898 = vpop.f32.mrf.mxu0
    %v2899 = vadd.f32 %v2763, %v2898
    %v2900 = vpop.f32.mrf.mxu0
    %2901 = vmatprep.mubr.bf16.mxu0 %v381
    %2902 = vmatmul.mubr.bf16.gmra.mxu0 %v380
    %v2903 = vpop.f32.mrf.mxu0
    %v2904 = vadd.f32 %v2763, %v2903
    %v2905 = vpop.f32.mrf.mxu0
    %v2906 = vpop.f32.mrf.mxu0
    %v2907 = vadd.f32 %v2763, %v2906
    %v2908 = vpop.f32.mrf.mxu0
    %2909 = vdwg.mxu0
    %v2910 = vmax.f32 %v2896, 0.0
    %v2911 = vmax.f32 %v2899, 0.0
    %v2912 = vmax.f32 %v2904, 0.0
    %v2913 = vmax.f32 %v2907, 0.0
    %v2914 = vpack.c.bf16 %v2911, %v2910
    %v2915 = vpack.c.bf16 %v2913, %v2912
    %v2916 = vld [vmem:[#allocation17] sm:$0xf]
    %v2917 = vld [vmem:[#allocation17 + $0x4] sm:$0xf]
    %v2918 = vld [vmem:[#allocation17 + $0x8] sm:$0xf]
    %v2919 = vld [vmem:[#allocation17 + $0xc] sm:$0xf]
    %v2920 = vld [vmem:[#allocation17 + $0x10] sm:$0xf]
    %v2921 = vld [vmem:[#allocation17 + $0x14] sm:$0xf]
    %v2922 = vld [vmem:[#allocation17 + $0x18] sm:$0xf]
    %v2923 = vld [vmem:[#allocation17 + $0x1c] sm:$0xf]
    %v2924 = vld [vmem:[#allocation17 + $0x20] sm:$0xf]
    %v2925 = vld [vmem:[#allocation17 + $0x24] sm:$0xf]
    %v2926 = vld [vmem:[#allocation17 + $0x28] sm:$0xf]
    %v2927 = vld [vmem:[#allocation17 + $0x2c] sm:$0xf]
    %v2928 = vld [vmem:[#allocation17 + $0x30] sm:$0xf]
    %v2929 = vld [vmem:[#allocation17 + $0x34] sm:$0xf]
    %v2930 = vld [vmem:[#allocation17 + $0x38] sm:$0xf]
    %v2931 = vld [vmem:[#allocation17 + $0x3c] sm:$0xf]
    %v2932 = vld [vmem:[%s43] sm:$0x1]
    %v2934 = vlaneseq
    %v2935 = vshrl.u32 %v2934, 7
    %v2936 = vsub.s32 0, %v2935
    %v2937 = vrot.slane %v2932, %v2936
    %v2955 = vunpack.c.l.b16 %v2916
    %v2956 = vunpack.c.l.b16 %v2917
    %v2957 = vunpack.c.l.b16 %v2918
    %v2958 = vunpack.c.l.b16 %v2919
    %v2959 = vunpack.c.l.b16 %v2920
    %v2960 = vunpack.c.l.b16 %v2921
    %v2961 = vunpack.c.l.b16 %v2922
    %v2962 = vunpack.c.l.b16 %v2923
    %v2963 = vunpack.c.l.b16 %v2924
    %v2964 = vunpack.c.l.b16 %v2925
    %v2965 = vunpack.c.l.b16 %v2926
    %v2966 = vunpack.c.l.b16 %v2927
    %v2967 = vunpack.c.l.b16 %v2928
    %v2968 = vunpack.c.l.b16 %v2929
    %v2969 = vunpack.c.l.b16 %v2930
    %v2970 = vunpack.c.l.b16 %v2931
    %v2971 = vpack.c.b16 %v2956, %v2955
    %v2972 = vpack.c.b16 %v2958, %v2957
    %v2973 = vpack.c.b16 %v2960, %v2959
    %v2974 = vpack.c.b16 %v2962, %v2961
    %v2975 = vpack.c.b16 %v2964, %v2963
    %v2976 = vpack.c.b16 %v2966, %v2965
    %v2977 = vpack.c.b16 %v2968, %v2967
    %v2978 = vpack.c.b16 %v2970, %v2969
    %2987 = vmatprep.subr.bf16.mxu0 0
    %2988 = vmatpush1.bf16.msra.mxu0 %v2978
    %2989 = vmatprep.subr.bf16.mxu0 0
    %2990 = vmatpush1.bf16.msra.mxu0 %v2977
    %2991 = vmatprep.subr.bf16.mxu0 0
    %2992 = vmatpush1.bf16.msra.mxu0 %v2976
    %2993 = vmatprep.subr.bf16.mxu0 0
    %2994 = vmatpush1.bf16.msra.mxu0 %v2975
    %2995 = vmatprep.subr.bf16.mxu0 0
    %2996 = vmatpush1.bf16.msra.mxu0 %v2974
    %2997 = vmatprep.subr.bf16.mxu0 0
    %2998 = vmatpush1.bf16.msra.mxu0 %v2973
    %2999 = vmatprep.subr.bf16.mxu0 0
    %3000 = vmatpush1.bf16.msra.mxu0 %v2972
    %3001 = vmatprep.subr.bf16.mxu0 0
    %3002 = vmatpush1.bf16.msra.mxu0 %v2971
    %3003 = vmatprep.subr.bf16.mxu0 0
    %3004 = vmatpush2.bf16.msra.mxu0 0
    %3005 = vmatprep.subr.bf16.mxu0 0
    %3006 = vmatpush2.bf16.msra.mxu0 0
    %3007 = vmatprep.subr.bf16.mxu0 0
    %3008 = vmatpush2.bf16.msra.mxu0 0
    %3009 = vmatprep.subr.bf16.mxu0 0
    %3010 = vmatpush2.bf16.msra.mxu0 0
    %3011 = vmatprep.subr.bf16.mxu0 0
    %3012 = vmatpush2.bf16.msra.mxu0 0
    %3013 = vmatprep.subr.bf16.mxu0 0
    %3014 = vmatpush2.bf16.msra.mxu0 0
    %3015 = vmatprep.subr.bf16.mxu0 0
    %3016 = vmatpush2.bf16.msra.mxu0 0
    %3017 = vmatprep.subr.bf16.mxu0 0
    %3018 = vmatpush2.bf16.msra.mxu0 0
    %3019 = vmatprep.mubr.bf16.mxu0 0
    %3020 = vmatmul.mubr.bf16.gmra.mxu0 %v2914
    %v3021 = vpop.f32.mrf.mxu0
    %v3022 = vadd.f32 %v2937, %v3021
    %v3023 = vpop.f32.mrf.mxu0
    %v3024 = vpop.f32.mrf.mxu0
    %v3025 = vadd.f32 %v2937, %v3024
    %v3026 = vpop.f32.mrf.mxu0
    %3027 = vmatprep.mubr.bf16.mxu0 0
    %3028 = vmatmul.mubr.bf16.gmra.mxu0 %v2915
    %v3029 = vpop.f32.mrf.mxu0
    %v3030 = vadd.f32 %v2937, %v3029
    %v3031 = vpop.f32.mrf.mxu0
    %v3032 = vpop.f32.mrf.mxu0
    %v3033 = vadd.f32 %v2937, %v3032
    %v3034 = vpop.f32.mrf.mxu0
    %3035 = vdwg.mxu0
    %v3036 = vmax.f32 %v3022, 0.0
    %v3037 = vmax.f32 %v3025, 0.0
    %v3038 = vmax.f32 %v3030, 0.0
    %v3039 = vmax.f32 %v3033, 0.0
    %v3040 = vrot.slane %v3036, 7
    %v3041 = vrot.slane %v3037, 7
    %v3042 = vrot.slane %v3038, 7
    %v3043 = vrot.slane %v3039, 7
    %v3044 = vsel %vm576, %v3042, %v3043
    %v3045 = vsel %vm576, %v3041, %v3042
    %v3046 = vsel %vm576, %v3040, %v3041
    %v3047 = vsel %vm576, %v3043, %v3040
    %v3048 = vmul.f32 %v3047, %v589
    %v3049 = vmul.f32 %v3046, %v594
    %v3050 = vmul.f32 %v3045, %v599
    %v3051 = vmul.f32 %v3044, %v604
    %v3052 = vpack.c.bf16 %v3049, %v3048
    %v3053 = vpack.c.bf16 %v3051, %v3050
    %v3054 = vld [vmem:[#allocation19] sm:$0xf]
    %v3055 = vld [vmem:[#allocation19 + $0x4] sm:$0xf]
    %v3056 = vld [vmem:[#allocation19 + $0x8] sm:$0xf]
    %v3057 = vld [vmem:[#allocation19 + $0xc] sm:$0xf]
    %v3058 = vld [vmem:[#allocation19 + $0x10] sm:$0xf]
    %v3059 = vld [vmem:[#allocation19 + $0x14] sm:$0xf]
    %v3060 = vld [vmem:[#allocation19 + $0x18] sm:$0xf]
    %v3061 = vld [vmem:[#allocation19 + $0x1c] sm:$0xf]
    %v3062 = vld [vmem:[#allocation19 + $0x20] sm:$0xf]
    %v3063 = vld [vmem:[#allocation19 + $0x24] sm:$0xf]
    %v3064 = vld [vmem:[#allocation19 + $0x28] sm:$0xf]
    %v3065 = vld [vmem:[#allocation19 + $0x2c] sm:$0xf]
    %v3066 = vld [vmem:[#allocation19 + $0x30] sm:$0xf]
    %v3067 = vld [vmem:[#allocation19 + $0x34] sm:$0xf]
    %v3068 = vld [vmem:[#allocation19 + $0x38] sm:$0xf]
    %v3069 = vld [vmem:[#allocation19 + $0x3c] sm:$0xf]
    %v3070 = vpack.c.bf16 %v3037, %v3036
    %v3071 = vpack.c.bf16 %v3039, %v3038
    %s3072 = scalar_lea.vmem [#allocation19], 64
    %v3073 = vld [vmem:[%s3072] sm:$0xf]
    %v3074 = vld [vmem:[%s3072 + $0x4] sm:$0xf]
    %v3075 = vld [vmem:[%s3072 + $0x8] sm:$0xf]
    %v3076 = vld [vmem:[%s3072 + $0xc] sm:$0xf]
    %v3077 = vld [vmem:[%s3072 + $0x10] sm:$0xf]
    %v3078 = vld [vmem:[%s3072 + $0x14] sm:$0xf]
    %v3079 = vld [vmem:[%s3072 + $0x18] sm:$0xf]
    %v3080 = vld [vmem:[%s3072 + $0x1c] sm:$0xf]
    %v3081 = vld [vmem:[%s3072 + $0x20] sm:$0xf]
    %v3082 = vld [vmem:[%s3072 + $0x24] sm:$0xf]
    %v3083 = vld [vmem:[%s3072 + $0x28] sm:$0xf]
    %v3084 = vld [vmem:[%s3072 + $0x2c] sm:$0xf]
    %v3085 = vld [vmem:[%s3072 + $0x30] sm:$0xf]
    %v3086 = vld [vmem:[%s3072 + $0x34] sm:$0xf]
    %v3087 = vld [vmem:[%s3072 + $0x38] sm:$0xf]
    %v3088 = vld [vmem:[%s3072 + $0x3c] sm:$0xf]
    %v3105 = vunpack.c.l.b16 %v3073
    %v3106 = vunpack.c.l.b16 %v3074
    %v3107 = vunpack.c.l.b16 %v3075
    %v3108 = vunpack.c.l.b16 %v3076
    %v3109 = vunpack.c.l.b16 %v3077
    %v3110 = vunpack.c.l.b16 %v3078
    %v3111 = vunpack.c.l.b16 %v3079
    %v3112 = vunpack.c.l.b16 %v3080
    %v3113 = vunpack.c.l.b16 %v3081
    %v3114 = vunpack.c.l.b16 %v3082
    %v3115 = vunpack.c.l.b16 %v3083
    %v3116 = vunpack.c.l.b16 %v3084
    %v3117 = vunpack.c.l.b16 %v3085
    %v3118 = vunpack.c.l.b16 %v3086
    %v3119 = vunpack.c.l.b16 %v3087
    %v3120 = vunpack.c.l.b16 %v3088
    %v3121 = vpack.c.b16 %v3106, %v3105
    %v3122 = vpack.c.b16 %v3108, %v3107
    %v3123 = vpack.c.b16 %v3110, %v3109
    %v3124 = vpack.c.b16 %v3112, %v3111
    %v3125 = vpack.c.b16 %v3114, %v3113
    %v3126 = vpack.c.b16 %v3116, %v3115
    %v3127 = vpack.c.b16 %v3118, %v3117
    %v3128 = vpack.c.b16 %v3120, %v3119
    %3137 = vmatprep.subr.bf16.mxu0 0
    %3138 = vmatpush1.bf16.msra.mxu0 %v3128
    %3139 = vmatprep.subr.bf16.mxu0 0
    %3140 = vmatpush1.bf16.msra.mxu0 %v3127
    %3141 = vmatprep.subr.bf16.mxu0 0
    %3142 = vmatpush1.bf16.msra.mxu0 %v3126
    %3143 = vmatprep.subr.bf16.mxu0 0
    %3144 = vmatpush1.bf16.msra.mxu0 %v3125
    %3145 = vmatprep.subr.bf16.mxu0 0
    %3146 = vmatpush1.bf16.msra.mxu0 %v3124
    %3147 = vmatprep.subr.bf16.mxu0 0
    %3148 = vmatpush1.bf16.msra.mxu0 %v3123
    %3149 = vmatprep.subr.bf16.mxu0 0
    %3150 = vmatpush1.bf16.msra.mxu0 %v3122
    %3151 = vmatprep.subr.bf16.mxu0 0
    %3152 = vmatpush1.bf16.msra.mxu0 %v3121
    %3153 = vmatprep.subr.bf16.mxu0 0
    %3154 = vmatpush2.bf16.msra.mxu0 0
    %3155 = vmatprep.subr.bf16.mxu0 0
    %3156 = vmatpush2.bf16.msra.mxu0 0
    %3157 = vmatprep.subr.bf16.mxu0 0
    %3158 = vmatpush2.bf16.msra.mxu0 0
    %3159 = vmatprep.subr.bf16.mxu0 0
    %3160 = vmatpush2.bf16.msra.mxu0 0
    %3161 = vmatprep.subr.bf16.mxu0 0
    %3162 = vmatpush2.bf16.msra.mxu0 0
    %3163 = vmatprep.subr.bf16.mxu0 0
    %3164 = vmatpush2.bf16.msra.mxu0 0
    %3165 = vmatprep.subr.bf16.mxu0 0
    %3166 = vmatpush2.bf16.msra.mxu0 0
    %3167 = vmatprep.subr.bf16.mxu0 0
    %3168 = vmatpush2.bf16.msra.mxu0 0
    %3169 = vmatprep.mubr.bf16.mxu0 0
    %3170 = vmatmul.mubr.bf16.gmra.mxu0 %v3070
    %v3171 = vpop.f32.mrf.mxu0
    %v3172 = vadd.f32 0.0, %v3171
    %v3173 = vpop.f32.mrf.mxu0
    %v3174 = vpop.f32.mrf.mxu0
    %v3175 = vadd.f32 0.0, %v3174
    %v3176 = vpop.f32.mrf.mxu0
    %3177 = vmatprep.mubr.bf16.mxu0 0
    %3178 = vmatmul.mubr.bf16.gmra.mxu0 %v3071
    %v3179 = vpop.f32.mrf.mxu0
    %v3180 = vadd.f32 0.0, %v3179
    %v3181 = vpop.f32.mrf.mxu0
    %v3182 = vpop.f32.mrf.mxu0
    %v3183 = vadd.f32 0.0, %v3182
    %v3184 = vpop.f32.mrf.mxu0
    %3185 = vdwg.mxu0
    %v3202 = vunpack.c.l.b16 %v3054
    %v3203 = vunpack.c.l.b16 %v3055
    %v3204 = vunpack.c.l.b16 %v3056
    %v3205 = vunpack.c.l.b16 %v3057
    %v3206 = vunpack.c.l.b16 %v3058
    %v3207 = vunpack.c.l.b16 %v3059
    %v3208 = vunpack.c.l.b16 %v3060
    %v3209 = vunpack.c.l.b16 %v3061
    %v3210 = vunpack.c.l.b16 %v3062
    %v3211 = vunpack.c.l.b16 %v3063
    %v3212 = vunpack.c.l.b16 %v3064
    %v3213 = vunpack.c.l.b16 %v3065
    %v3214 = vunpack.c.l.b16 %v3066
    %v3215 = vunpack.c.l.b16 %v3067
    %v3216 = vunpack.c.l.b16 %v3068
    %v3217 = vunpack.c.l.b16 %v3069
    %v3218 = vpack.c.b16 %v3203, %v3202
    %v3219 = vpack.c.b16 %v3205, %v3204
    %v3220 = vpack.c.b16 %v3207, %v3206
    %v3221 = vpack.c.b16 %v3209, %v3208
    %v3222 = vpack.c.b16 %v3211, %v3210
    %v3223 = vpack.c.b16 %v3213, %v3212
    %v3224 = vpack.c.b16 %v3215, %v3214
    %v3225 = vpack.c.b16 %v3217, %v3216
    %3234 = vmatprep.subr.bf16.mxu0 0
    %3235 = vmatpush1.bf16.msra.mxu0 %v3225
    %3236 = vmatprep.subr.bf16.mxu0 0
    %3237 = vmatpush1.bf16.msra.mxu0 %v3224
    %3238 = vmatprep.subr.bf16.mxu0 0
    %3239 = vmatpush1.bf16.msra.mxu0 %v3223
    %3240 = vmatprep.subr.bf16.mxu0 0
    %3241 = vmatpush1.bf16.msra.mxu0 %v3222
    %3242 = vmatprep.subr.bf16.mxu0 0
    %3243 = vmatpush1.bf16.msra.mxu0 %v3221
    %3244 = vmatprep.subr.bf16.mxu0 0
    %3245 = vmatpush1.bf16.msra.mxu0 %v3220
    %3246 = vmatprep.subr.bf16.mxu0 0
    %3247 = vmatpush1.bf16.msra.mxu0 %v3219
    %3248 = vmatprep.subr.bf16.mxu0 0
    %3249 = vmatpush1.bf16.msra.mxu0 %v3218
    %3250 = vmatprep.subr.bf16.mxu0 0
    %3251 = vmatpush2.bf16.msra.mxu0 0
    %3252 = vmatprep.subr.bf16.mxu0 0
    %3253 = vmatpush2.bf16.msra.mxu0 0
    %3254 = vmatprep.subr.bf16.mxu0 0
    %3255 = vmatpush2.bf16.msra.mxu0 0
    %3256 = vmatprep.subr.bf16.mxu0 0
    %3257 = vmatpush2.bf16.msra.mxu0 0
    %3258 = vmatprep.subr.bf16.mxu0 0
    %3259 = vmatpush2.bf16.msra.mxu0 0
    %3260 = vmatprep.subr.bf16.mxu0 0
    %3261 = vmatpush2.bf16.msra.mxu0 0
    %3262 = vmatprep.subr.bf16.mxu0 0
    %3263 = vmatpush2.bf16.msra.mxu0 0
    %3264 = vmatprep.subr.bf16.mxu0 0
    %3265 = vmatpush2.bf16.msra.mxu0 0
    %3266 = vmatprep.mubr.bf16.mxu0 0
    %3267 = vmatmul.mubr.bf16.gmra.mxu0 %v3052
    %v3268 = vpop.f32.mrf.mxu0
    %v3269 = vadd.f32 %v3172, %v3268
    %v3270 = vpop.f32.mrf.mxu0
    %v3271 = vpop.f32.mrf.mxu0
    %v3272 = vadd.f32 %v3175, %v3271
    %v3273 = vpop.f32.mrf.mxu0
    %3274 = vmatprep.mubr.bf16.mxu0 0
    %3275 = vmatmul.mubr.bf16.gmra.mxu0 %v3053
    %v3276 = vpop.f32.mrf.mxu0
    %v3277 = vadd.f32 %v3180, %v3276
    %v3278 = vpop.f32.mrf.mxu0
    %v3279 = vpop.f32.mrf.mxu0
    %v3280 = vadd.f32 %v3183, %v3279
    %v3281 = vpop.f32.mrf.mxu0
    %3282 = vdwg.mxu0
    %v3283 = vrot.slane %v3036, 1
    %v3284 = vrot.slane %v3037, 1
    %v3285 = vrot.slane %v3038, 1
    %v3286 = vrot.slane %v3039, 1
    %v3287 = vsel %vm845, %v3285, %v3286
    %v3288 = vsel %vm845, %v3284, %v3285
    %v3289 = vsel %vm845, %v3283, %v3284
    %v3290 = vsel %vm845, %v3286, %v3283
    %v3291 = vmul.f32 %v3289, %v858
    %v3292 = vmul.f32 %v3288, %v863
    %v3293 = vmul.f32 %v3287, %v868
    %v3294 = vmul.f32 %v3290, %v873
    %v3295 = vpack.c.bf16 %v3292, %v3291
    %v3296 = vpack.c.bf16 %v3294, %v3293
    %s3297 = scalar_lea.vmem [#allocation19], 128
    %v3298 = vld [vmem:[%s3297] sm:$0xf]
    %v3299 = vld [vmem:[%s3297 + $0x4] sm:$0xf]
    %v3300 = vld [vmem:[%s3297 + $0x8] sm:$0xf]
    %v3301 = vld [vmem:[%s3297 + $0xc] sm:$0xf]
    %v3302 = vld [vmem:[%s3297 + $0x10] sm:$0xf]
    %v3303 = vld [vmem:[%s3297 + $0x14] sm:$0xf]
    %v3304 = vld [vmem:[%s3297 + $0x18] sm:$0xf]
    %v3305 = vld [vmem:[%s3297 + $0x1c] sm:$0xf]
    %v3306 = vld [vmem:[%s3297 + $0x20] sm:$0xf]
    %v3307 = vld [vmem:[%s3297 + $0x24] sm:$0xf]
    %v3308 = vld [vmem:[%s3297 + $0x28] sm:$0xf]
    %v3309 = vld [vmem:[%s3297 + $0x2c] sm:$0xf]
    %v3310 = vld [vmem:[%s3297 + $0x30] sm:$0xf]
    %v3311 = vld [vmem:[%s3297 + $0x34] sm:$0xf]
    %v3312 = vld [vmem:[%s3297 + $0x38] sm:$0xf]
    %v3313 = vld [vmem:[%s3297 + $0x3c] sm:$0xf]
    %v3330 = vunpack.c.l.b16 %v3298
    %v3331 = vunpack.c.l.b16 %v3299
    %v3332 = vunpack.c.l.b16 %v3300
    %v3333 = vunpack.c.l.b16 %v3301
    %v3334 = vunpack.c.l.b16 %v3302
    %v3335 = vunpack.c.l.b16 %v3303
    %v3336 = vunpack.c.l.b16 %v3304
    %v3337 = vunpack.c.l.b16 %v3305
    %v3338 = vunpack.c.l.b16 %v3306
    %v3339 = vunpack.c.l.b16 %v3307
    %v3340 = vunpack.c.l.b16 %v3308
    %v3341 = vunpack.c.l.b16 %v3309
    %v3342 = vunpack.c.l.b16 %v3310
    %v3343 = vunpack.c.l.b16 %v3311
    %v3344 = vunpack.c.l.b16 %v3312
    %v3345 = vunpack.c.l.b16 %v3313
    %v3346 = vpack.c.b16 %v3331, %v3330
    %v3347 = vpack.c.b16 %v3333, %v3332
    %v3348 = vpack.c.b16 %v3335, %v3334
    %v3349 = vpack.c.b16 %v3337, %v3336
    %v3350 = vpack.c.b16 %v3339, %v3338
    %v3351 = vpack.c.b16 %v3341, %v3340
    %v3352 = vpack.c.b16 %v3343, %v3342
    %v3353 = vpack.c.b16 %v3345, %v3344
    %3362 = vmatprep.subr.bf16.mxu0 0
    %3363 = vmatpush1.bf16.msra.mxu0 %v3353
    %3364 = vmatprep.subr.bf16.mxu0 0
    %3365 = vmatpush1.bf16.msra.mxu0 %v3352
    %3366 = vmatprep.subr.bf16.mxu0 0
    %3367 = vmatpush1.bf16.msra.mxu0 %v3351
    %3368 = vmatprep.subr.bf16.mxu0 0
    %3369 = vmatpush1.bf16.msra.mxu0 %v3350
    %3370 = vmatprep.subr.bf16.mxu0 0
    %3371 = vmatpush1.bf16.msra.mxu0 %v3349
    %3372 = vmatprep.subr.bf16.mxu0 0
    %3373 = vmatpush1.bf16.msra.mxu0 %v3348
    %3374 = vmatprep.subr.bf16.mxu0 0
    %3375 = vmatpush1.bf16.msra.mxu0 %v3347
    %3376 = vmatprep.subr.bf16.mxu0 0
    %3377 = vmatpush1.bf16.msra.mxu0 %v3346
    %3378 = vmatprep.subr.bf16.mxu0 0
    %3379 = vmatpush2.bf16.msra.mxu0 0
    %3380 = vmatprep.subr.bf16.mxu0 0
    %3381 = vmatpush2.bf16.msra.mxu0 0
    %3382 = vmatprep.subr.bf16.mxu0 0
    %3383 = vmatpush2.bf16.msra.mxu0 0
    %3384 = vmatprep.subr.bf16.mxu0 0
    %3385 = vmatpush2.bf16.msra.mxu0 0
    %3386 = vmatprep.subr.bf16.mxu0 0
    %3387 = vmatpush2.bf16.msra.mxu0 0
    %3388 = vmatprep.subr.bf16.mxu0 0
    %3389 = vmatpush2.bf16.msra.mxu0 0
    %3390 = vmatprep.subr.bf16.mxu0 0
    %3391 = vmatpush2.bf16.msra.mxu0 0
    %3392 = vmatprep.subr.bf16.mxu0 0
    %3393 = vmatpush2.bf16.msra.mxu0 0
    %3394 = vmatprep.mubr.bf16.mxu0 0
    %3395 = vmatmul.mubr.bf16.gmra.mxu0 %v3295
    %v3396 = vpop.f32.mrf.mxu0
    %v3397 = vadd.f32 0.0, %v3396
    %v3398 = vpop.f32.mrf.mxu0
    %v3399 = vpop.f32.mrf.mxu0
    %v3400 = vadd.f32 0.0, %v3399
    %v3401 = vpop.f32.mrf.mxu0
    %3402 = vmatprep.mubr.bf16.mxu0 0
    %3403 = vmatmul.mubr.bf16.gmra.mxu0 %v3296
    %v3404 = vpop.f32.mrf.mxu0
    %v3405 = vadd.f32 0.0, %v3404
    %v3406 = vpop.f32.mrf.mxu0
    %v3407 = vpop.f32.mrf.mxu0
    %v3408 = vadd.f32 0.0, %v3407
    %v3409 = vpop.f32.mrf.mxu0
    %3410 = vdwg.mxu0
    %v3411 = vadd.f32 %v3269, %v3397
    %v3412 = vadd.f32 %v3272, %v3400
    %v3413 = vadd.f32 %v3277, %v3405
    %v3414 = vadd.f32 %v3280, %v3408
    %v3415 = vld [vmem:[%s47] sm:$0x1]
    %v3417 = vlaneseq
    %v3418 = vshrl.u32 %v3417, 7
    %v3419 = vsub.s32 0, %v3418
    %v3420 = vrot.slane %v3415, %v3419
    %v3422 = vadd.f32 %v3411, %v3420
    %v3423 = vadd.f32 %v3412, %v3420
    %v3424 = vadd.f32 %v3413, %v3420
    %v3425 = vadd.f32 %v3414, %v3420
    %v3426 = vmax.f32 %v3422, 0.0
    %v3427 = vmax.f32 %v3423, 0.0
    %v3428 = vmax.f32 %v3424, 0.0
    %v3429 = vmax.f32 %v3425, 0.0
    %v3430 = vrot.slane %v3426, 3
    %v3431 = vrot.slane %v3427, 3
    %v3432 = vrot.slane %v3428, 3
    %v3433 = vrot.slane %v3429, 3
    %v3434 = vsel %vm1861, %v3432, %v3433
    %v3435 = vsel %vm1861, %v3431, %v3432
    %v3436 = vsel %vm1861, %v3430, %v3431
    %v3437 = vsel %vm1861, %v3433, %v3430
    %v3438 = vld [vmem:[%s3] sm:$0xff]
    %v3439 = vld [vmem:[%s3 + $0x8] sm:$0xff]
    %v3440 = vld [vmem:[%s3 + $0x10] sm:$0xff]
    %v3441 = vld [vmem:[%s3 + $0x18] sm:$0xff]
    %3443 = vset.pattern.permute.xlu0 0
    %3444 = vperm.xlu0 %3443, %v3438
    %v3445 = vpop.permute.xlu0 %3444
    %3448 = vset.pattern.permute.xlu0 0
    %3449 = vperm.xlu0 %3448, %v3439
    %v3450 = vpop.permute.xlu0 %3449
    %3453 = vset.pattern.permute.xlu0 0
    %3454 = vperm.xlu0 %3453, %v3440
    %v3455 = vpop.permute.xlu0 %3454
    %3458 = vset.pattern.permute.xlu0 0
    %3459 = vperm.xlu0 %3458, %v3441
    %v3460 = vpop.permute.xlu0 %3459
    %v3462 = vmul.f32 %v3437, %v3445
    %v3463 = vmul.f32 %v3436, %v3450
    %v3464 = vmul.f32 %v3435, %v3455
    %v3465 = vmul.f32 %v3434, %v3460
    %v3466 = vpack.c.bf16 %v3463, %v3462
    %v3467 = vpack.c.bf16 %v3465, %v3464
    %v3468 = vld [vmem:[#allocation20] sm:$0xf]
    %v3469 = vld [vmem:[#allocation20 + $0x4] sm:$0xf]
    %v3470 = vld [vmem:[#allocation20 + $0x8] sm:$0xf]
    %v3471 = vld [vmem:[#allocation20 + $0xc] sm:$0xf]
    %v3472 = vld [vmem:[#allocation20 + $0x10] sm:$0xf]
    %v3473 = vld [vmem:[#allocation20 + $0x14] sm:$0xf]
    %v3474 = vld [vmem:[#allocation20 + $0x18] sm:$0xf]
    %v3475 = vld [vmem:[#allocation20 + $0x1c] sm:$0xf]
    %v3476 = vld [vmem:[#allocation20 + $0x20] sm:$0xf]
    %v3477 = vld [vmem:[#allocation20 + $0x24] sm:$0xf]
    %v3478 = vld [vmem:[#allocation20 + $0x28] sm:$0xf]
    %v3479 = vld [vmem:[#allocation20 + $0x2c] sm:$0xf]
    %v3480 = vld [vmem:[#allocation20 + $0x30] sm:$0xf]
    %v3481 = vld [vmem:[#allocation20 + $0x34] sm:$0xf]
    %v3482 = vld [vmem:[#allocation20 + $0x38] sm:$0xf]
    %v3483 = vld [vmem:[#allocation20 + $0x3c] sm:$0xf]
    %v3484 = vpack.c.bf16 %v3427, %v3426
    %v3485 = vpack.c.bf16 %v3429, %v3428
    %s3486 = scalar_lea.vmem [#allocation20], 64
    %v3487 = vld [vmem:[%s3486] sm:$0xf]
    %v3488 = vld [vmem:[%s3486 + $0x4] sm:$0xf]
    %v3489 = vld [vmem:[%s3486 + $0x8] sm:$0xf]
    %v3490 = vld [vmem:[%s3486 + $0xc] sm:$0xf]
    %v3491 = vld [vmem:[%s3486 + $0x10] sm:$0xf]
    %v3492 = vld [vmem:[%s3486 + $0x14] sm:$0xf]
    %v3493 = vld [vmem:[%s3486 + $0x18] sm:$0xf]
    %v3494 = vld [vmem:[%s3486 + $0x1c] sm:$0xf]
    %v3495 = vld [vmem:[%s3486 + $0x20] sm:$0xf]
    %v3496 = vld [vmem:[%s3486 + $0x24] sm:$0xf]
    %v3497 = vld [vmem:[%s3486 + $0x28] sm:$0xf]
    %v3498 = vld [vmem:[%s3486 + $0x2c] sm:$0xf]
    %v3499 = vld [vmem:[%s3486 + $0x30] sm:$0xf]
    %v3500 = vld [vmem:[%s3486 + $0x34] sm:$0xf]
    %v3501 = vld [vmem:[%s3486 + $0x38] sm:$0xf]
    %v3502 = vld [vmem:[%s3486 + $0x3c] sm:$0xf]
    %v3519 = vunpack.c.l.b16 %v3487
    %v3520 = vunpack.c.l.b16 %v3488
    %v3521 = vunpack.c.l.b16 %v3489
    %v3522 = vunpack.c.l.b16 %v3490
    %v3523 = vunpack.c.l.b16 %v3491
    %v3524 = vunpack.c.l.b16 %v3492
    %v3525 = vunpack.c.l.b16 %v3493
    %v3526 = vunpack.c.l.b16 %v3494
    %v3527 = vunpack.c.l.b16 %v3495
    %v3528 = vunpack.c.l.b16 %v3496
    %v3529 = vunpack.c.l.b16 %v3497
    %v3530 = vunpack.c.l.b16 %v3498
    %v3531 = vunpack.c.l.b16 %v3499
    %v3532 = vunpack.c.l.b16 %v3500
    %v3533 = vunpack.c.l.b16 %v3501
    %v3534 = vunpack.c.l.b16 %v3502
    %v3535 = vpack.c.b16 %v3520, %v3519
    %v3536 = vpack.c.b16 %v3522, %v3521
    %v3537 = vpack.c.b16 %v3524, %v3523
    %v3538 = vpack.c.b16 %v3526, %v3525
    %v3539 = vpack.c.b16 %v3528, %v3527
    %v3540 = vpack.c.b16 %v3530, %v3529
    %v3541 = vpack.c.b16 %v3532, %v3531
    %v3542 = vpack.c.b16 %v3534, %v3533
    %3551 = vmatprep.subr.bf16.mxu0 0
    %3552 = vmatpush1.bf16.msra.mxu0 %v3542
    %3553 = vmatprep.subr.bf16.mxu0 0
    %3554 = vmatpush1.bf16.msra.mxu0 %v3541
    %3555 = vmatprep.subr.bf16.mxu0 0
    %3556 = vmatpush1.bf16.msra.mxu0 %v3540
    %3557 = vmatprep.subr.bf16.mxu0 0
    %3558 = vmatpush1.bf16.msra.mxu0 %v3539
    %3559 = vmatprep.subr.bf16.mxu0 0
    %3560 = vmatpush1.bf16.msra.mxu0 %v3538
    %3561 = vmatprep.subr.bf16.mxu0 0
    %3562 = vmatpush1.bf16.msra.mxu0 %v3537
    %3563 = vmatprep.subr.bf16.mxu0 0
    %3564 = vmatpush1.bf16.msra.mxu0 %v3536
    %3565 = vmatprep.subr.bf16.mxu0 0
    %3566 = vmatpush1.bf16.msra.mxu0 %v3535
    %3567 = vmatprep.subr.bf16.mxu0 0
    %3568 = vmatpush2.bf16.msra.mxu0 0
    %3569 = vmatprep.subr.bf16.mxu0 0
    %3570 = vmatpush2.bf16.msra.mxu0 0
    %3571 = vmatprep.subr.bf16.mxu0 0
    %3572 = vmatpush2.bf16.msra.mxu0 0
    %3573 = vmatprep.subr.bf16.mxu0 0
    %3574 = vmatpush2.bf16.msra.mxu0 0
    %3575 = vmatprep.subr.bf16.mxu0 0
    %3576 = vmatpush2.bf16.msra.mxu0 0
    %3577 = vmatprep.subr.bf16.mxu0 0
    %3578 = vmatpush2.bf16.msra.mxu0 0
    %3579 = vmatprep.subr.bf16.mxu0 0
    %3580 = vmatpush2.bf16.msra.mxu0 0
    %3581 = vmatprep.subr.bf16.mxu0 0
    %3582 = vmatpush2.bf16.msra.mxu0 0
    %3583 = vmatprep.mubr.bf16.mxu0 0
    %3584 = vmatmul.mubr.bf16.gmra.mxu0 %v3484
    %v3585 = vpop.f32.mrf.mxu0
    %v3586 = vadd.f32 0.0, %v3585
    %v3587 = vpop.f32.mrf.mxu0
    %v3588 = vpop.f32.mrf.mxu0
    %v3589 = vadd.f32 0.0, %v3588
    %v3590 = vpop.f32.mrf.mxu0
    %3591 = vmatprep.mubr.bf16.mxu0 0
    %3592 = vmatmul.mubr.bf16.gmra.mxu0 %v3485
    %v3593 = vpop.f32.mrf.mxu0
    %v3594 = vadd.f32 0.0, %v3593
    %v3595 = vpop.f32.mrf.mxu0
    %v3596 = vpop.f32.mrf.mxu0
    %v3597 = vadd.f32 0.0, %v3596
    %v3598 = vpop.f32.mrf.mxu0
    %3599 = vdwg.mxu0
    %v3616 = vunpack.c.l.b16 %v3468
    %v3617 = vunpack.c.l.b16 %v3469
    %v3618 = vunpack.c.l.b16 %v3470
    %v3619 = vunpack.c.l.b16 %v3471
    %v3620 = vunpack.c.l.b16 %v3472
    %v3621 = vunpack.c.l.b16 %v3473
    %v3622 = vunpack.c.l.b16 %v3474
    %v3623 = vunpack.c.l.b16 %v3475
    %v3624 = vunpack.c.l.b16 %v3476
    %v3625 = vunpack.c.l.b16 %v3477
    %v3626 = vunpack.c.l.b16 %v3478
    %v3627 = vunpack.c.l.b16 %v3479
    %v3628 = vunpack.c.l.b16 %v3480
    %v3629 = vunpack.c.l.b16 %v3481
    %v3630 = vunpack.c.l.b16 %v3482
    %v3631 = vunpack.c.l.b16 %v3483
    %v3632 = vpack.c.b16 %v3617, %v3616
    %v3633 = vpack.c.b16 %v3619, %v3618
    %v3634 = vpack.c.b16 %v3621, %v3620
    %v3635 = vpack.c.b16 %v3623, %v3622
    %v3636 = vpack.c.b16 %v3625, %v3624
    %v3637 = vpack.c.b16 %v3627, %v3626
    %v3638 = vpack.c.b16 %v3629, %v3628
    %v3639 = vpack.c.b16 %v3631, %v3630
    %3648 = vmatprep.subr.bf16.mxu0 0
    %3649 = vmatpush1.bf16.msra.mxu0 %v3639
    %3650 = vmatprep.subr.bf16.mxu0 0
    %3651 = vmatpush1.bf16.msra.mxu0 %v3638
    %3652 = vmatprep.subr.bf16.mxu0 0
    %3653 = vmatpush1.bf16.msra.mxu0 %v3637
    %3654 = vmatprep.subr.bf16.mxu0 0
    %3655 = vmatpush1.bf16.msra.mxu0 %v3636
    %3656 = vmatprep.subr.bf16.mxu0 0
    %3657 = vmatpush1.bf16.msra.mxu0 %v3635
    %3658 = vmatprep.subr.bf16.mxu0 0
    %3659 = vmatpush1.bf16.msra.mxu0 %v3634
    %3660 = vmatprep.subr.bf16.mxu0 0
    %3661 = vmatpush1.bf16.msra.mxu0 %v3633
    %3662 = vmatprep.subr.bf16.mxu0 0
    %3663 = vmatpush1.bf16.msra.mxu0 %v3632
    %3664 = vmatprep.subr.bf16.mxu0 0
    %3665 = vmatpush2.bf16.msra.mxu0 0
    %3666 = vmatprep.subr.bf16.mxu0 0
    %3667 = vmatpush2.bf16.msra.mxu0 0
    %3668 = vmatprep.subr.bf16.mxu0 0
    %3669 = vmatpush2.bf16.msra.mxu0 0
    %3670 = vmatprep.subr.bf16.mxu0 0
    %3671 = vmatpush2.bf16.msra.mxu0 0
    %3672 = vmatprep.subr.bf16.mxu0 0
    %3673 = vmatpush2.bf16.msra.mxu0 0
    %3674 = vmatprep.subr.bf16.mxu0 0
    %3675 = vmatpush2.bf16.msra.mxu0 0
    %3676 = vmatprep.subr.bf16.mxu0 0
    %3677 = vmatpush2.bf16.msra.mxu0 0
    %3678 = vmatprep.subr.bf16.mxu0 0
    %3679 = vmatpush2.bf16.msra.mxu0 0
    %3680 = vmatprep.mubr.bf16.mxu0 0
    %3681 = vmatmul.mubr.bf16.gmra.mxu0 %v3466
    %v3682 = vpop.f32.mrf.mxu0
    %v3683 = vadd.f32 %v3586, %v3682
    %v3684 = vpop.f32.mrf.mxu0
    %v3685 = vpop.f32.mrf.mxu0
    %v3686 = vadd.f32 %v3589, %v3685
    %v3687 = vpop.f32.mrf.mxu0
    %3688 = vmatprep.mubr.bf16.mxu0 0
    %3689 = vmatmul.mubr.bf16.gmra.mxu0 %v3467
    %v3690 = vpop.f32.mrf.mxu0
    %v3691 = vadd.f32 %v3594, %v3690
    %v3692 = vpop.f32.mrf.mxu0
    %v3693 = vpop.f32.mrf.mxu0
    %v3694 = vadd.f32 %v3597, %v3693
    %v3695 = vpop.f32.mrf.mxu0
    %3696 = vdwg.mxu0
    %v3697 = vrot.slane %v3426, 5
    %v3698 = vrot.slane %v3427, 5
    %v3699 = vrot.slane %v3428, 5
    %v3700 = vrot.slane %v3429, 5
    %v3701 = vsel %vm1592, %v3699, %v3700
    %v3702 = vsel %vm1592, %v3698, %v3699
    %v3703 = vsel %vm1592, %v3697, %v3698
    %v3704 = vsel %vm1592, %v3700, %v3697
    %s3705 = scalar_lea.vmem %s3, 160
    %v3706 = vld [vmem:[%s3705] sm:$0xff]
    %v3707 = vld [vmem:[%s3705 + $0x8] sm:$0xff]
    %v3708 = vld [vmem:[%s3705 + $0x10] sm:$0xff]
    %v3709 = vld [vmem:[%s3705 + $0x18] sm:$0xff]
    %3711 = vset.pattern.permute.xlu0 0
    %3712 = vperm.xlu0 %3711, %v3706
    %v3713 = vpop.permute.xlu0 %3712
    %3716 = vset.pattern.permute.xlu0 0
    %3717 = vperm.xlu0 %3716, %v3707
    %v3718 = vpop.permute.xlu0 %3717
    %3721 = vset.pattern.permute.xlu0 0
    %3722 = vperm.xlu0 %3721, %v3708
    %v3723 = vpop.permute.xlu0 %3722
    %3726 = vset.pattern.permute.xlu0 0
    %3727 = vperm.xlu0 %3726, %v3709
    %v3728 = vpop.permute.xlu0 %3727
    %v3730 = vmul.f32 %v3703, %v3713
    %v3731 = vmul.f32 %v3702, %v3718
    %v3732 = vmul.f32 %v3701, %v3723
    %v3733 = vmul.f32 %v3704, %v3728
    %v3734 = vpack.c.bf16 %v3731, %v3730
    %v3735 = vpack.c.bf16 %v3733, %v3732
    %s3736 = scalar_lea.vmem [#allocation20], 128
    %v3737 = vld [vmem:[%s3736] sm:$0xf]
    %v3738 = vld [vmem:[%s3736 + $0x4] sm:$0xf]
    %v3739 = vld [vmem:[%s3736 + $0x8] sm:$0xf]
    %v3740 = vld [vmem:[%s3736 + $0xc] sm:$0xf]
    %v3741 = vld [vmem:[%s3736 + $0x10] sm:$0xf]
    %v3742 = vld [vmem:[%s3736 + $0x14] sm:$0xf]
    %v3743 = vld [vmem:[%s3736 + $0x18] sm:$0xf]
    %v3744 = vld [vmem:[%s3736 + $0x1c] sm:$0xf]
    %v3745 = vld [vmem:[%s3736 + $0x20] sm:$0xf]
    %v3746 = vld [vmem:[%s3736 + $0x24] sm:$0xf]
    %v3747 = vld [vmem:[%s3736 + $0x28] sm:$0xf]
    %v3748 = vld [vmem:[%s3736 + $0x2c] sm:$0xf]
    %v3749 = vld [vmem:[%s3736 + $0x30] sm:$0xf]
    %v3750 = vld [vmem:[%s3736 + $0x34] sm:$0xf]
    %v3751 = vld [vmem:[%s3736 + $0x38] sm:$0xf]
    %v3752 = vld [vmem:[%s3736 + $0x3c] sm:$0xf]
    %v3769 = vunpack.c.l.b16 %v3737
    %v3770 = vunpack.c.l.b16 %v3738
    %v3771 = vunpack.c.l.b16 %v3739
    %v3772 = vunpack.c.l.b16 %v3740
    %v3773 = vunpack.c.l.b16 %v3741
    %v3774 = vunpack.c.l.b16 %v3742
    %v3775 = vunpack.c.l.b16 %v3743
    %v3776 = vunpack.c.l.b16 %v3744
    %v3777 = vunpack.c.l.b16 %v3745
    %v3778 = vunpack.c.l.b16 %v3746
    %v3779 = vunpack.c.l.b16 %v3747
    %v3780 = vunpack.c.l.b16 %v3748
    %v3781 = vunpack.c.l.b16 %v3749
    %v3782 = vunpack.c.l.b16 %v3750
    %v3783 = vunpack.c.l.b16 %v3751
    %v3784 = vunpack.c.l.b16 %v3752
    %v3785 = vpack.c.b16 %v3770, %v3769
    %v3786 = vpack.c.b16 %v3772, %v3771
    %v3787 = vpack.c.b16 %v3774, %v3773
    %v3788 = vpack.c.b16 %v3776, %v3775
    %v3789 = vpack.c.b16 %v3778, %v3777
    %v3790 = vpack.c.b16 %v3780, %v3779
    %v3791 = vpack.c.b16 %v3782, %v3781
    %v3792 = vpack.c.b16 %v3784, %v3783
    %3801 = vmatprep.subr.bf16.mxu0 0
    %3802 = vmatpush1.bf16.msra.mxu0 %v3792
    %3803 = vmatprep.subr.bf16.mxu0 0
    %3804 = vmatpush1.bf16.msra.mxu0 %v3791
    %3805 = vmatprep.subr.bf16.mxu0 0
    %3806 = vmatpush1.bf16.msra.mxu0 %v3790
    %3807 = vmatprep.subr.bf16.mxu0 0
    %3808 = vmatpush1.bf16.msra.mxu0 %v3789
    %3809 = vmatprep.subr.bf16.mxu0 0
    %3810 = vmatpush1.bf16.msra.mxu0 %v3788
    %3811 = vmatprep.subr.bf16.mxu0 0
    %3812 = vmatpush1.bf16.msra.mxu0 %v3787
    %3813 = vmatprep.subr.bf16.mxu0 0
    %3814 = vmatpush1.bf16.msra.mxu0 %v3786
    %3815 = vmatprep.subr.bf16.mxu0 0
    %3816 = vmatpush1.bf16.msra.mxu0 %v3785
    %3817 = vmatprep.subr.bf16.mxu0 0
    %3818 = vmatpush2.bf16.msra.mxu0 0
    %3819 = vmatprep.subr.bf16.mxu0 0
    %3820 = vmatpush2.bf16.msra.mxu0 0
    %3821 = vmatprep.subr.bf16.mxu0 0
    %3822 = vmatpush2.bf16.msra.mxu0 0
    %3823 = vmatprep.subr.bf16.mxu0 0
    %3824 = vmatpush2.bf16.msra.mxu0 0
    %3825 = vmatprep.subr.bf16.mxu0 0
    %3826 = vmatpush2.bf16.msra.mxu0 0
    %3827 = vmatprep.subr.bf16.mxu0 0
    %3828 = vmatpush2.bf16.msra.mxu0 0
    %3829 = vmatprep.subr.bf16.mxu0 0
    %3830 = vmatpush2.bf16.msra.mxu0 0
    %3831 = vmatprep.subr.bf16.mxu0 0
    %3832 = vmatpush2.bf16.msra.mxu0 0
    %3833 = vmatprep.mubr.bf16.mxu0 0
    %3834 = vmatmul.mubr.bf16.gmra.mxu0 %v3734
    %v3835 = vpop.f32.mrf.mxu0
    %v3836 = vadd.f32 0.0, %v3835
    %v3837 = vpop.f32.mrf.mxu0
    %v3838 = vpop.f32.mrf.mxu0
    %v3839 = vadd.f32 0.0, %v3838
    %v3840 = vpop.f32.mrf.mxu0
    %3841 = vmatprep.mubr.bf16.mxu0 0
    %3842 = vmatmul.mubr.bf16.gmra.mxu0 %v3735
    %v3843 = vpop.f32.mrf.mxu0
    %v3844 = vadd.f32 0.0, %v3843
    %v3845 = vpop.f32.mrf.mxu0
    %v3846 = vpop.f32.mrf.mxu0
    %v3847 = vadd.f32 0.0, %v3846
    %v3848 = vpop.f32.mrf.mxu0
    %3849 = vdwg.mxu0
    %v3850 = vadd.f32 %v3683, %v3836
    %v3851 = vadd.f32 %v3686, %v3839
    %v3852 = vadd.f32 %v3691, %v3844
    %v3853 = vadd.f32 %v3694, %v3847
    %v3854 = vld [vmem:[%s51] sm:$0x1]
    %v3856 = vlaneseq
    %v3857 = vshrl.u32 %v3856, 7
    %v3858 = vsub.s32 0, %v3857
    %v3859 = vrot.slane %v3854, %v3858
    %v3861 = vadd.f32 %v3850, %v3859
    %v3862 = vadd.f32 %v3851, %v3859
    %v3863 = vadd.f32 %v3852, %v3859
    %v3864 = vadd.f32 %v3853, %v3859
    %v3865 = vpack.c.bf16 %v1007, %v1006
    %v3866 = vpack.c.bf16 %v1009, %v1008
    %v3867 = vld [vmem:[#allocation22] sm:$0xff]
    %v3868 = vld [vmem:[#allocation22 + $0x8] sm:$0xff]
    %v3869 = vld [vmem:[#allocation22 + $0x10] sm:$0xff]
    %v3870 = vld [vmem:[#allocation22 + $0x18] sm:$0xff]
    %v3871 = vld [vmem:[#allocation22 + $0x20] sm:$0xff]
    %v3872 = vld [vmem:[#allocation22 + $0x28] sm:$0xff]
    %v3873 = vld [vmem:[#allocation22 + $0x30] sm:$0xff]
    %v3874 = vld [vmem:[#allocation22 + $0x38] sm:$0xff]
    %v3875 = vld [vmem:[#allocation22 + $0x40] sm:$0xff]
    %v3876 = vld [vmem:[#allocation22 + $0x48] sm:$0xff]
    %v3877 = vld [vmem:[#allocation22 + $0x50] sm:$0xff]
    %v3878 = vld [vmem:[#allocation22 + $0x58] sm:$0xff]
    %v3879 = vld [vmem:[#allocation22 + $0x60] sm:$0xff]
    %v3880 = vld [vmem:[#allocation22 + $0x68] sm:$0xff]
    %v3881 = vld [vmem:[#allocation22 + $0x70] sm:$0xff]
    %v3882 = vld [vmem:[#allocation22 + $0x78] sm:$0xff]
    %v3883 = vpack.c.bf16 %v2023, %v2022
    %v3884 = vpack.c.bf16 %v2025, %v2024
    %v3885 = vld [vmem:[#allocation23] sm:$0xff]
    %v3886 = vld [vmem:[#allocation23 + $0x8] sm:$0xff]
    %v3887 = vld [vmem:[#allocation23 + $0x10] sm:$0xff]
    %v3888 = vld [vmem:[#allocation23 + $0x18] sm:$0xff]
    %v3889 = vld [vmem:[#allocation23 + $0x20] sm:$0xff]
    %v3890 = vld [vmem:[#allocation23 + $0x28] sm:$0xff]
    %v3891 = vld [vmem:[#allocation23 + $0x30] sm:$0xff]
    %v3892 = vld [vmem:[#allocation23 + $0x38] sm:$0xff]
    %v3893 = vld [vmem:[#allocation23 + $0x40] sm:$0xff]
    %v3894 = vld [vmem:[#allocation23 + $0x48] sm:$0xff]
    %v3895 = vld [vmem:[#allocation23 + $0x50] sm:$0xff]
    %v3896 = vld [vmem:[#allocation23 + $0x58] sm:$0xff]
    %v3897 = vld [vmem:[#allocation23 + $0x60] sm:$0xff]
    %v3898 = vld [vmem:[#allocation23 + $0x68] sm:$0xff]
    %v3899 = vld [vmem:[#allocation23 + $0x70] sm:$0xff]
    %v3900 = vld [vmem:[#allocation23 + $0x78] sm:$0xff]
    %v3917 = vunpack.c.l.b16 %v3885
    %v3918 = vunpack.c.h.b16 %v3885
    %v3919 = vunpack.c.l.b16 %v3886
    %v3920 = vunpack.c.h.b16 %v3886
    %v3921 = vunpack.c.l.b16 %v3887
    %v3922 = vunpack.c.h.b16 %v3887
    %v3923 = vunpack.c.l.b16 %v3888
    %v3924 = vunpack.c.h.b16 %v3888
    %v3925 = vunpack.c.l.b16 %v3889
    %v3926 = vunpack.c.h.b16 %v3889
    %v3927 = vunpack.c.l.b16 %v3890
    %v3928 = vunpack.c.h.b16 %v3890
    %v3929 = vunpack.c.l.b16 %v3891
    %v3930 = vunpack.c.h.b16 %v3891
    %v3931 = vunpack.c.l.b16 %v3892
    %v3932 = vunpack.c.h.b16 %v3892
    %v3933 = vunpack.c.l.b16 %v3893
    %v3934 = vunpack.c.h.b16 %v3893
    %v3935 = vunpack.c.l.b16 %v3894
    %v3936 = vunpack.c.h.b16 %v3894
    %v3937 = vunpack.c.l.b16 %v3895
    %v3938 = vunpack.c.h.b16 %v3895
    %v3939 = vunpack.c.l.b16 %v3896
    %v3940 = vunpack.c.h.b16 %v3896
    %v3941 = vunpack.c.l.b16 %v3897
    %v3942 = vunpack.c.h.b16 %v3897
    %v3943 = vunpack.c.l.b16 %v3898
    %v3944 = vunpack.c.h.b16 %v3898
    %v3945 = vunpack.c.l.b16 %v3899
    %v3946 = vunpack.c.h.b16 %v3899
    %v3947 = vunpack.c.l.b16 %v3900
    %v3948 = vunpack.c.h.b16 %v3900
    %v3949 = vpack.c.b16 %v3919, %v3917
    %v3950 = vpack.c.b16 %v3920, %v3918
    %v3951 = vpack.c.b16 %v3923, %v3921
    %v3952 = vpack.c.b16 %v3924, %v3922
    %v3953 = vpack.c.b16 %v3927, %v3925
    %v3954 = vpack.c.b16 %v3928, %v3926
    %v3955 = vpack.c.b16 %v3931, %v3929
    %v3956 = vpack.c.b16 %v3932, %v3930
    %v3957 = vpack.c.b16 %v3935, %v3933
    %v3958 = vpack.c.b16 %v3936, %v3934
    %v3959 = vpack.c.b16 %v3939, %v3937
    %v3960 = vpack.c.b16 %v3940, %v3938
    %v3961 = vpack.c.b16 %v3943, %v3941
    %v3962 = vpack.c.b16 %v3944, %v3942
    %v3963 = vpack.c.b16 %v3947, %v3945
    %v3964 = vpack.c.b16 %v3948, %v3946
    %3981 = vmatprep.subr.bf16.mxu0 %v3964
    %3982 = vmatpush1.bf16.msra.mxu0 %v3963
    %3983 = vmatprep.subr.bf16.mxu0 %v3962
    %3984 = vmatpush1.bf16.msra.mxu0 %v3961
    %3985 = vmatprep.subr.bf16.mxu0 %v3960
    %3986 = vmatpush1.bf16.msra.mxu0 %v3959
    %3987 = vmatprep.subr.bf16.mxu0 %v3958
    %3988 = vmatpush1.bf16.msra.mxu0 %v3957
    %3989 = vmatprep.subr.bf16.mxu0 %v3956
    %3990 = vmatpush1.bf16.msra.mxu0 %v3955
    %3991 = vmatprep.subr.bf16.mxu0 %v3954
    %3992 = vmatpush1.bf16.msra.mxu0 %v3953
    %3993 = vmatprep.subr.bf16.mxu0 %v3952
    %3994 = vmatpush1.bf16.msra.mxu0 %v3951
    %3995 = vmatprep.subr.bf16.mxu0 %v3950
    %3996 = vmatpush1.bf16.msra.mxu0 %v3949
    %3997 = vmatprep.subr.bf16.mxu0 0
    %3998 = vmatpush2.bf16.msra.mxu0 0
    %3999 = vmatprep.subr.bf16.mxu0 0
    %4000 = vmatpush2.bf16.msra.mxu0 0
    %4001 = vmatprep.subr.bf16.mxu0 0
    %4002 = vmatpush2.bf16.msra.mxu0 0
    %4003 = vmatprep.subr.bf16.mxu0 0
    %4004 = vmatpush2.bf16.msra.mxu0 0
    %4005 = vmatprep.subr.bf16.mxu0 0
    %4006 = vmatpush2.bf16.msra.mxu0 0
    %4007 = vmatprep.subr.bf16.mxu0 0
    %4008 = vmatpush2.bf16.msra.mxu0 0
    %4009 = vmatprep.subr.bf16.mxu0 0
    %4010 = vmatpush2.bf16.msra.mxu0 0
    %4011 = vmatprep.subr.bf16.mxu0 0
    %4012 = vmatpush2.bf16.msra.mxu0 0
    %4013 = vmatprep.mubr.bf16.mxu0 0
    %4014 = vmatmul.mubr.bf16.gmra.mxu0 %v3883
    %v4015 = vpop.f32.mrf.mxu0
    %v4016 = vadd.f32 0.0, %v4015
    %v4017 = vpop.f32.mrf.mxu0
    %v4018 = vadd.f32 0.0, %v4017
    %v4019 = vpop.f32.mrf.mxu0
    %v4020 = vadd.f32 0.0, %v4019
    %v4021 = vpop.f32.mrf.mxu0
    %v4022 = vadd.f32 0.0, %v4021
    %4023 = vmatprep.mubr.bf16.mxu0 0
    %4024 = vmatmul.mubr.bf16.gmra.mxu0 %v3884
    %v4025 = vpop.f32.mrf.mxu0
    %v4026 = vadd.f32 0.0, %v4025
    %v4027 = vpop.f32.mrf.mxu0
    %v4028 = vadd.f32 0.0, %v4027
    %v4029 = vpop.f32.mrf.mxu0
    %v4030 = vadd.f32 0.0, %v4029
    %v4031 = vpop.f32.mrf.mxu0
    %v4032 = vadd.f32 0.0, %v4031
    %4033 = vdwg.mxu0
    %v4050 = vunpack.c.l.b16 %v3867
    %v4051 = vunpack.c.h.b16 %v3867
    %v4052 = vunpack.c.l.b16 %v3868
    %v4053 = vunpack.c.h.b16 %v3868
    %v4054 = vunpack.c.l.b16 %v3869
    %v4055 = vunpack.c.h.b16 %v3869
    %v4056 = vunpack.c.l.b16 %v3870
    %v4057 = vunpack.c.h.b16 %v3870
    %v4058 = vunpack.c.l.b16 %v3871
    %v4059 = vunpack.c.h.b16 %v3871
    %v4060 = vunpack.c.l.b16 %v3872
    %v4061 = vunpack.c.h.b16 %v3872
    %v4062 = vunpack.c.l.b16 %v3873
    %v4063 = vunpack.c.h.b16 %v3873
    %v4064 = vunpack.c.l.b16 %v3874
    %v4065 = vunpack.c.h.b16 %v3874
    %v4066 = vunpack.c.l.b16 %v3875
    %v4067 = vunpack.c.h.b16 %v3875
    %v4068 = vunpack.c.l.b16 %v3876
    %v4069 = vunpack.c.h.b16 %v3876
    %v4070 = vunpack.c.l.b16 %v3877
    %v4071 = vunpack.c.h.b16 %v3877
    %v4072 = vunpack.c.l.b16 %v3878
    %v4073 = vunpack.c.h.b16 %v3878
    %v4074 = vunpack.c.l.b16 %v3879
    %v4075 = vunpack.c.h.b16 %v3879
    %v4076 = vunpack.c.l.b16 %v3880
    %v4077 = vunpack.c.h.b16 %v3880
    %v4078 = vunpack.c.l.b16 %v3881
    %v4079 = vunpack.c.h.b16 %v3881
    %v4080 = vunpack.c.l.b16 %v3882
    %v4081 = vunpack.c.h.b16 %v3882
    %v4082 = vpack.c.b16 %v4052, %v4050
    %v4083 = vpack.c.b16 %v4053, %v4051
    %v4084 = vpack.c.b16 %v4056, %v4054
    %v4085 = vpack.c.b16 %v4057, %v4055
    %v4086 = vpack.c.b16 %v4060, %v4058
    %v4087 = vpack.c.b16 %v4061, %v4059
    %v4088 = vpack.c.b16 %v4064, %v4062
    %v4089 = vpack.c.b16 %v4065, %v4063
    %v4090 = vpack.c.b16 %v4068, %v4066
    %v4091 = vpack.c.b16 %v4069, %v4067
    %v4092 = vpack.c.b16 %v4072, %v4070
    %v4093 = vpack.c.b16 %v4073, %v4071
    %v4094 = vpack.c.b16 %v4076, %v4074
    %v4095 = vpack.c.b16 %v4077, %v4075
    %v4096 = vpack.c.b16 %v4080, %v4078
    %v4097 = vpack.c.b16 %v4081, %v4079
    %4114 = vmatprep.subr.bf16.mxu0 %v4097
    %4115 = vmatpush1.bf16.msra.mxu0 %v4096
    %4116 = vmatprep.subr.bf16.mxu0 %v4095
    %4117 = vmatpush1.bf16.msra.mxu0 %v4094
    %4118 = vmatprep.subr.bf16.mxu0 %v4093
    %4119 = vmatpush1.bf16.msra.mxu0 %v4092
    %4120 = vmatprep.subr.bf16.mxu0 %v4091
    %4121 = vmatpush1.bf16.msra.mxu0 %v4090
    %4122 = vmatprep.subr.bf16.mxu0 %v4089
    %4123 = vmatpush1.bf16.msra.mxu0 %v4088
    %4124 = vmatprep.subr.bf16.mxu0 %v4087
    %4125 = vmatpush1.bf16.msra.mxu0 %v4086
    %4126 = vmatprep.subr.bf16.mxu0 %v4085
    %4127 = vmatpush1.bf16.msra.mxu0 %v4084
    %4128 = vmatprep.subr.bf16.mxu0 %v4083
    %4129 = vmatpush1.bf16.msra.mxu0 %v4082
    %4130 = vmatprep.subr.bf16.mxu0 0
    %4131 = vmatpush2.bf16.msra.mxu0 0
    %4132 = vmatprep.subr.bf16.mxu0 0
    %4133 = vmatpush2.bf16.msra.mxu0 0
    %4134 = vmatprep.subr.bf16.mxu0 0
    %4135 = vmatpush2.bf16.msra.mxu0 0
    %4136 = vmatprep.subr.bf16.mxu0 0
    %4137 = vmatpush2.bf16.msra.mxu0 0
    %4138 = vmatprep.subr.bf16.mxu0 0
    %4139 = vmatpush2.bf16.msra.mxu0 0
    %4140 = vmatprep.subr.bf16.mxu0 0
    %4141 = vmatpush2.bf16.msra.mxu0 0
    %4142 = vmatprep.subr.bf16.mxu0 0
    %4143 = vmatpush2.bf16.msra.mxu0 0
    %4144 = vmatprep.subr.bf16.mxu0 0
    %4145 = vmatpush2.bf16.msra.mxu0 0
    %4146 = vmatprep.mubr.bf16.mxu0 0
    %4147 = vmatmul.mubr.bf16.gmra.mxu0 %v3865
    %v4148 = vpop.f32.mrf.mxu0
    %v4149 = vadd.f32 %v4016, %v4148
    %v4150 = vpop.f32.mrf.mxu0
    %v4151 = vadd.f32 %v4018, %v4150
    %v4152 = vpop.f32.mrf.mxu0
    %v4153 = vadd.f32 %v4020, %v4152
    %v4154 = vpop.f32.mrf.mxu0
    %v4155 = vadd.f32 %v4022, %v4154
    %4156 = vmatprep.mubr.bf16.mxu0 0
    %4157 = vmatmul.mubr.bf16.gmra.mxu0 %v3866
    %v4158 = vpop.f32.mrf.mxu0
    %v4159 = vadd.f32 %v4026, %v4158
    %v4160 = vpop.f32.mrf.mxu0
    %v4161 = vadd.f32 %v4028, %v4160
    %v4162 = vpop.f32.mrf.mxu0
    %v4163 = vadd.f32 %v4030, %v4162
    %v4164 = vpop.f32.mrf.mxu0
    %v4165 = vadd.f32 %v4032, %v4164
    %4166 = vdwg.mxu0
    %v4167 = vpack.c.bf16 %v2723, %v2722
    %v4168 = vpack.c.bf16 %v2725, %v2724
    %v4169 = vld [vmem:[#allocation25] sm:$0xff]
    %v4170 = vld [vmem:[#allocation25 + $0x8] sm:$0xff]
    %v4171 = vld [vmem:[#allocation25 + $0x10] sm:$0xff]
    %v4172 = vld [vmem:[#allocation25 + $0x18] sm:$0xff]
    %v4173 = vld [vmem:[#allocation25 + $0x20] sm:$0xff]
    %v4174 = vld [vmem:[#allocation25 + $0x28] sm:$0xff]
    %v4175 = vld [vmem:[#allocation25 + $0x30] sm:$0xff]
    %v4176 = vld [vmem:[#allocation25 + $0x38] sm:$0xff]
    %v4177 = vld [vmem:[#allocation25 + $0x40] sm:$0xff]
    %v4178 = vld [vmem:[#allocation25 + $0x48] sm:$0xff]
    %v4179 = vld [vmem:[#allocation25 + $0x50] sm:$0xff]
    %v4180 = vld [vmem:[#allocation25 + $0x58] sm:$0xff]
    %v4181 = vld [vmem:[#allocation25 + $0x60] sm:$0xff]
    %v4182 = vld [vmem:[#allocation25 + $0x68] sm:$0xff]
    %v4183 = vld [vmem:[#allocation25 + $0x70] sm:$0xff]
    %v4184 = vld [vmem:[#allocation25 + $0x78] sm:$0xff]
    %v4201 = vunpack.c.l.b16 %v4169
    %v4202 = vunpack.c.h.b16 %v4169
    %v4203 = vunpack.c.l.b16 %v4170
    %v4204 = vunpack.c.h.b16 %v4170
    %v4205 = vunpack.c.l.b16 %v4171
    %v4206 = vunpack.c.h.b16 %v4171
    %v4207 = vunpack.c.l.b16 %v4172
    %v4208 = vunpack.c.h.b16 %v4172
    %v4209 = vunpack.c.l.b16 %v4173
    %v4210 = vunpack.c.h.b16 %v4173
    %v4211 = vunpack.c.l.b16 %v4174
    %v4212 = vunpack.c.h.b16 %v4174
    %v4213 = vunpack.c.l.b16 %v4175
    %v4214 = vunpack.c.h.b16 %v4175
    %v4215 = vunpack.c.l.b16 %v4176
    %v4216 = vunpack.c.h.b16 %v4176
    %v4217 = vunpack.c.l.b16 %v4177
    %v4218 = vunpack.c.h.b16 %v4177
    %v4219 = vunpack.c.l.b16 %v4178
    %v4220 = vunpack.c.h.b16 %v4178
    %v4221 = vunpack.c.l.b16 %v4179
    %v4222 = vunpack.c.h.b16 %v4179
    %v4223 = vunpack.c.l.b16 %v4180
    %v4224 = vunpack.c.h.b16 %v4180
    %v4225 = vunpack.c.l.b16 %v4181
    %v4226 = vunpack.c.h.b16 %v4181
    %v4227 = vunpack.c.l.b16 %v4182
    %v4228 = vunpack.c.h.b16 %v4182
    %v4229 = vunpack.c.l.b16 %v4183
    %v4230 = vunpack.c.h.b16 %v4183
    %v4231 = vunpack.c.l.b16 %v4184
    %v4232 = vunpack.c.h.b16 %v4184
    %v4233 = vpack.c.b16 %v4203, %v4201
    %v4234 = vpack.c.b16 %v4204, %v4202
    %v4235 = vpack.c.b16 %v4207, %v4205
    %v4236 = vpack.c.b16 %v4208, %v4206
    %v4237 = vpack.c.b16 %v4211, %v4209
    %v4238 = vpack.c.b16 %v4212, %v4210
    %v4239 = vpack.c.b16 %v4215, %v4213
    %v4240 = vpack.c.b16 %v4216, %v4214
    %v4241 = vpack.c.b16 %v4219, %v4217
    %v4242 = vpack.c.b16 %v4220, %v4218
    %v4243 = vpack.c.b16 %v4223, %v4221
    %v4244 = vpack.c.b16 %v4224, %v4222
    %v4245 = vpack.c.b16 %v4227, %v4225
    %v4246 = vpack.c.b16 %v4228, %v4226
    %v4247 = vpack.c.b16 %v4231, %v4229
    %v4248 = vpack.c.b16 %v4232, %v4230
    %4265 = vmatprep.subr.bf16.mxu0 %v4248
    %4266 = vmatpush1.bf16.msra.mxu0 %v4247
    %4267 = vmatprep.subr.bf16.mxu0 %v4246
    %4268 = vmatpush1.bf16.msra.mxu0 %v4245
    %4269 = vmatprep.subr.bf16.mxu0 %v4244
    %4270 = vmatpush1.bf16.msra.mxu0 %v4243
    %4271 = vmatprep.subr.bf16.mxu0 %v4242
    %4272 = vmatpush1.bf16.msra.mxu0 %v4241
    %4273 = vmatprep.subr.bf16.mxu0 %v4240
    %4274 = vmatpush1.bf16.msra.mxu0 %v4239
    %4275 = vmatprep.subr.bf16.mxu0 %v4238
    %4276 = vmatpush1.bf16.msra.mxu0 %v4237
    %4277 = vmatprep.subr.bf16.mxu0 %v4236
    %4278 = vmatpush1.bf16.msra.mxu0 %v4235
    %4279 = vmatprep.subr.bf16.mxu0 %v4234
    %4280 = vmatpush1.bf16.msra.mxu0 %v4233
    %4281 = vmatprep.subr.bf16.mxu0 0
    %4282 = vmatpush2.bf16.msra.mxu0 0
    %4283 = vmatprep.subr.bf16.mxu0 0
    %4284 = vmatpush2.bf16.msra.mxu0 0
    %4285 = vmatprep.subr.bf16.mxu0 0
    %4286 = vmatpush2.bf16.msra.mxu0 0
    %4287 = vmatprep.subr.bf16.mxu0 0
    %4288 = vmatpush2.bf16.msra.mxu0 0
    %4289 = vmatprep.subr.bf16.mxu0 0
    %4290 = vmatpush2.bf16.msra.mxu0 0
    %4291 = vmatprep.subr.bf16.mxu0 0
    %4292 = vmatpush2.bf16.msra.mxu0 0
    %4293 = vmatprep.subr.bf16.mxu0 0
    %4294 = vmatpush2.bf16.msra.mxu0 0
    %4295 = vmatprep.subr.bf16.mxu0 0
    %4296 = vmatpush2.bf16.msra.mxu0 0
    %4297 = vmatprep.mubr.bf16.mxu0 0
    %4298 = vmatmul.mubr.bf16.gmra.mxu0 %v4167
    %v4299 = vpop.f32.mrf.mxu0
    %v4300 = vadd.f32 0.0, %v4299
    %v4301 = vpop.f32.mrf.mxu0
    %v4302 = vadd.f32 0.0, %v4301
    %v4303 = vpop.f32.mrf.mxu0
    %v4304 = vadd.f32 0.0, %v4303
    %v4305 = vpop.f32.mrf.mxu0
    %v4306 = vadd.f32 0.0, %v4305
    %4307 = vmatprep.mubr.bf16.mxu0 0
    %4308 = vmatmul.mubr.bf16.gmra.mxu0 %v4168
    %v4309 = vpop.f32.mrf.mxu0
    %v4310 = vadd.f32 0.0, %v4309
    %v4311 = vpop.f32.mrf.mxu0
    %v4312 = vadd.f32 0.0, %v4311
    %v4313 = vpop.f32.mrf.mxu0
    %v4314 = vadd.f32 0.0, %v4313
    %v4315 = vpop.f32.mrf.mxu0
    %v4316 = vadd.f32 0.0, %v4315
    %4317 = vdwg.mxu0
    %v4318 = vadd.f32 %v4149, %v4300
    %v4319 = vadd.f32 %v4151, %v4302
    %v4320 = vadd.f32 %v4153, %v4304
    %v4321 = vadd.f32 %v4155, %v4306
    %v4322 = vadd.f32 %v4159, %v4310
    %v4323 = vadd.f32 %v4161, %v4312
    %v4324 = vadd.f32 %v4163, %v4314
    %v4325 = vadd.f32 %v4165, %v4316
    %v4326 = vpack.c.bf16 %v3862, %v3861
    %v4327 = vpack.c.bf16 %v3864, %v3863
    %v4328 = vld [vmem:[#allocation26] sm:$0xff]
    %v4329 = vld [vmem:[#allocation26 + $0x8] sm:$0xff]
    %v4330 = vld [vmem:[#allocation26 + $0x10] sm:$0xff]
    %v4331 = vld [vmem:[#allocation26 + $0x18] sm:$0xff]
    %v4332 = vld [vmem:[#allocation26 + $0x20] sm:$0xff]
    %v4333 = vld [vmem:[#allocation26 + $0x28] sm:$0xff]
    %v4334 = vld [vmem:[#allocation26 + $0x30] sm:$0xff]
    %v4335 = vld [vmem:[#allocation26 + $0x38] sm:$0xff]
    %v4336 = vld [vmem:[#allocation26 + $0x40] sm:$0xff]
    %v4337 = vld [vmem:[#allocation26 + $0x48] sm:$0xff]
    %v4338 = vld [vmem:[#allocation26 + $0x50] sm:$0xff]
    %v4339 = vld [vmem:[#allocation26 + $0x58] sm:$0xff]
    %v4340 = vld [vmem:[#allocation26 + $0x60] sm:$0xff]
    %v4341 = vld [vmem:[#allocation26 + $0x68] sm:$0xff]
    %v4342 = vld [vmem:[#allocation26 + $0x70] sm:$0xff]
    %v4343 = vld [vmem:[#allocation26 + $0x78] sm:$0xff]
    %v4360 = vunpack.c.l.b16 %v4328
    %v4361 = vunpack.c.h.b16 %v4328
    %v4362 = vunpack.c.l.b16 %v4329
    %v4363 = vunpack.c.h.b16 %v4329
    %v4364 = vunpack.c.l.b16 %v4330
    %v4365 = vunpack.c.h.b16 %v4330
    %v4366 = vunpack.c.l.b16 %v4331
    %v4367 = vunpack.c.h.b16 %v4331
    %v4368 = vunpack.c.l.b16 %v4332
    %v4369 = vunpack.c.h.b16 %v4332
    %v4370 = vunpack.c.l.b16 %v4333
    %v4371 = vunpack.c.h.b16 %v4333
    %v4372 = vunpack.c.l.b16 %v4334
    %v4373 = vunpack.c.h.b16 %v4334
    %v4374 = vunpack.c.l.b16 %v4335
    %v4375 = vunpack.c.h.b16 %v4335
    %v4376 = vunpack.c.l.b16 %v4336
    %v4377 = vunpack.c.h.b16 %v4336
    %v4378 = vunpack.c.l.b16 %v4337
    %v4379 = vunpack.c.h.b16 %v4337
    %v4380 = vunpack.c.l.b16 %v4338
    %v4381 = vunpack.c.h.b16 %v4338
    %v4382 = vunpack.c.l.b16 %v4339
    %v4383 = vunpack.c.h.b16 %v4339
    %v4384 = vunpack.c.l.b16 %v4340
    %v4385 = vunpack.c.h.b16 %v4340
    %v4386 = vunpack.c.l.b16 %v4341
    %v4387 = vunpack.c.h.b16 %v4341
    %v4388 = vunpack.c.l.b16 %v4342
    %v4389 = vunpack.c.h.b16 %v4342
    %v4390 = vunpack.c.l.b16 %v4343
    %v4391 = vunpack.c.h.b16 %v4343
    %v4392 = vpack.c.b16 %v4362, %v4360
    %v4393 = vpack.c.b16 %v4363, %v4361
    %v4394 = vpack.c.b16 %v4366, %v4364
    %v4395 = vpack.c.b16 %v4367, %v4365
    %v4396 = vpack.c.b16 %v4370, %v4368
    %v4397 = vpack.c.b16 %v4371, %v4369
    %v4398 = vpack.c.b16 %v4374, %v4372
    %v4399 = vpack.c.b16 %v4375, %v4373
    %v4400 = vpack.c.b16 %v4378, %v4376
    %v4401 = vpack.c.b16 %v4379, %v4377
    %v4402 = vpack.c.b16 %v4382, %v4380
    %v4403 = vpack.c.b16 %v4383, %v4381
    %v4404 = vpack.c.b16 %v4386, %v4384
    %v4405 = vpack.c.b16 %v4387, %v4385
    %v4406 = vpack.c.b16 %v4390, %v4388
    %v4407 = vpack.c.b16 %v4391, %v4389
    %4424 = vmatprep.subr.bf16.mxu0 %v4407
    %4425 = vmatpush1.bf16.msra.mxu0 %v4406
    %4426 = vmatprep.subr.bf16.mxu0 %v4405
    %4427 = vmatpush1.bf16.msra.mxu0 %v4404
    %4428 = vmatprep.subr.bf16.mxu0 %v4403
    %4429 = vmatpush1.bf16.msra.mxu0 %v4402
    %4430 = vmatprep.subr.bf16.mxu0 %v4401
    %4431 = vmatpush1.bf16.msra.mxu0 %v4400
    %4432 = vmatprep.subr.bf16.mxu0 %v4399
    %4433 = vmatpush1.bf16.msra.mxu0 %v4398
    %4434 = vmatprep.subr.bf16.mxu0 %v4397
    %4435 = vmatpush1.bf16.msra.mxu0 %v4396
    %4436 = vmatprep.subr.bf16.mxu0 %v4395
    %4437 = vmatpush1.bf16.msra.mxu0 %v4394
    %4438 = vmatprep.subr.bf16.mxu0 %v4393
    %4439 = vmatpush1.bf16.msra.mxu0 %v4392
    %4440 = vmatprep.subr.bf16.mxu0 0
    %4441 = vmatpush2.bf16.msra.mxu0 0
    %4442 = vmatprep.subr.bf16.mxu0 0
    %4443 = vmatpush2.bf16.msra.mxu0 0
    %4444 = vmatprep.subr.bf16.mxu0 0
    %4445 = vmatpush2.bf16.msra.mxu0 0
    %4446 = vmatprep.subr.bf16.mxu0 0
    %4447 = vmatpush2.bf16.msra.mxu0 0
    %4448 = vmatprep.subr.bf16.mxu0 0
    %4449 = vmatpush2.bf16.msra.mxu0 0
    %4450 = vmatprep.subr.bf16.mxu0 0
    %4451 = vmatpush2.bf16.msra.mxu0 0
    %4452 = vmatprep.subr.bf16.mxu0 0
    %4453 = vmatpush2.bf16.msra.mxu0 0
    %4454 = vmatprep.subr.bf16.mxu0 0
    %4455 = vmatpush2.bf16.msra.mxu0 0
    %4456 = vmatprep.mubr.bf16.mxu0 0
    %4457 = vmatmul.mubr.bf16.gmra.mxu0 %v4326
    %v4458 = vpop.f32.mrf.mxu0
    %v4459 = vadd.f32 0.0, %v4458
    %v4460 = vpop.f32.mrf.mxu0
    %v4461 = vadd.f32 0.0, %v4460
    %v4462 = vpop.f32.mrf.mxu0
    %v4463 = vadd.f32 0.0, %v4462
    %v4464 = vpop.f32.mrf.mxu0
    %v4465 = vadd.f32 0.0, %v4464
    %4466 = vmatprep.mubr.bf16.mxu0 0
    %4467 = vmatmul.mubr.bf16.gmra.mxu0 %v4327
    %v4468 = vpop.f32.mrf.mxu0
    %v4469 = vadd.f32 0.0, %v4468
    %v4470 = vpop.f32.mrf.mxu0
    %v4471 = vadd.f32 0.0, %v4470
    %v4472 = vpop.f32.mrf.mxu0
    %v4473 = vadd.f32 0.0, %v4472
    %v4474 = vpop.f32.mrf.mxu0
    %v4475 = vadd.f32 0.0, %v4474
    %4476 = vdwg.mxu0
    %v4477 = vadd.f32 %v4318, %v4459
    %v4478 = vadd.f32 %v4319, %v4461
    %v4479 = vadd.f32 %v4320, %v4463
    %v4480 = vadd.f32 %v4321, %v4465
    %v4481 = vadd.f32 %v4322, %v4469
    %v4482 = vadd.f32 %v4323, %v4471
    %v4483 = vadd.f32 %v4324, %v4473
    %v4484 = vadd.f32 %v4325, %v4475
    %v4485 = vld [vmem:[%s61] sm:$0x3]
    %v4487 = vlaneseq
    %v4488 = vshrl.u32 %v4487, 7
    %v4489 = vsub.s32 0, %v4488
    %v4490 = vrot.slane %v4485, %v4489
    %v4491 = vlaneseq
    %v4492 = vshrl.u32 %v4491, 7
    %v4493 = vsub.s32 1, %v4492
    %v4494 = vrot.slane %v4485, %v4493
    %v4497 = vadd.f32 %v4477, %v4490
    %v4498 = vadd.f32 %v4478, %v4494
    %v4499 = vadd.f32 %v4479, %v4490
    %v4500 = vadd.f32 %v4480, %v4494
    %v4501 = vadd.f32 %v4481, %v4490
    %v4502 = vadd.f32 %v4482, %v4494
    %v4503 = vadd.f32 %v4483, %v4490
    %v4504 = vadd.f32 %v4484, %v4494
    %v4505 = vld [vmem:[#allocation28] sm:$0xff]
    %v4506 = vld [vmem:[#allocation28 + $0x8] sm:$0xff]
    %v4507 = vld [vmem:[#allocation28 + $0x10] sm:$0xff]
    %v4508 = vld [vmem:[#allocation28 + $0x18] sm:$0xff]
    %v4509 = vld [vmem:[#allocation28 + $0x20] sm:$0xff]
    %v4510 = vld [vmem:[#allocation28 + $0x28] sm:$0xff]
    %v4511 = vld [vmem:[#allocation28 + $0x30] sm:$0xff]
    %v4512 = vld [vmem:[#allocation28 + $0x38] sm:$0xff]
    %v4513 = vld [vmem:[#allocation28 + $0x40] sm:$0xff]
    %v4514 = vld [vmem:[#allocation28 + $0x48] sm:$0xff]
    %v4515 = vld [vmem:[#allocation28 + $0x50] sm:$0xff]
    %v4516 = vld [vmem:[#allocation28 + $0x58] sm:$0xff]
    %v4517 = vld [vmem:[#allocation28 + $0x60] sm:$0xff]
    %v4518 = vld [vmem:[#allocation28 + $0x68] sm:$0xff]
    %v4519 = vld [vmem:[#allocation28 + $0x70] sm:$0xff]
    %v4520 = vld [vmem:[#allocation28 + $0x78] sm:$0xff]
    %v4521 = vld [vmem:[#allocation28 + $0x80] sm:$0xff]
    %v4522 = vld [vmem:[#allocation28 + $0x88] sm:$0xff]
    %v4523 = vld [vmem:[#allocation28 + $0x90] sm:$0xff]
    %v4524 = vld [vmem:[#allocation28 + $0x98] sm:$0xff]
    %v4525 = vld [vmem:[#allocation28 + $0xa0] sm:$0xff]
    %v4526 = vld [vmem:[#allocation28 + $0xa8] sm:$0xff]
    %v4527 = vld [vmem:[#allocation28 + $0xb0] sm:$0xff]
    %v4528 = vld [vmem:[#allocation28 + $0xb8] sm:$0xff]
    %v4529 = vld [vmem:[#allocation28 + $0xc0] sm:$0xff]
    %v4530 = vld [vmem:[#allocation28 + $0xc8] sm:$0xff]
    %v4531 = vld [vmem:[#allocation28 + $0xd0] sm:$0xff]
    %v4532 = vld [vmem:[#allocation28 + $0xd8] sm:$0xff]
    %v4533 = vld [vmem:[#allocation28 + $0xe0] sm:$0xff]
    %v4534 = vld [vmem:[#allocation28 + $0xe8] sm:$0xff]
    %v4535 = vld [vmem:[#allocation28 + $0xf0] sm:$0xff]
    %v4536 = vld [vmem:[#allocation28 + $0xf8] sm:$0xff]
    %v4537 = vld [vmem:[#allocation28 + $0x100] sm:$0xff]
    %v4538 = vld [vmem:[#allocation28 + $0x108] sm:$0xff]
    %v4539 = vld [vmem:[#allocation28 + $0x110] sm:$0xff]
    %v4540 = vld [vmem:[#allocation28 + $0x118] sm:$0xff]
    %v4541 = vld [vmem:[#allocation28 + $0x120] sm:$0xff]
    %v4542 = vld [vmem:[#allocation28 + $0x128] sm:$0xff]
    %v4543 = vld [vmem:[#allocation28 + $0x130] sm:$0xff]
    %v4544 = vld [vmem:[#allocation28 + $0x138] sm:$0xff]
    %v4545 = vld [vmem:[#allocation28 + $0x140] sm:$0xff]
    %v4546 = vld [vmem:[#allocation28 + $0x148] sm:$0xff]
    %v4547 = vld [vmem:[#allocation28 + $0x150] sm:$0xff]
    %v4548 = vld [vmem:[#allocation28 + $0x158] sm:$0xff]
    %v4549 = vld [vmem:[#allocation28 + $0x160] sm:$0xff]
    %v4550 = vld [vmem:[#allocation28 + $0x168] sm:$0xff]
    %v4551 = vld [vmem:[#allocation28 + $0x170] sm:$0xff]
    %v4552 = vld [vmem:[#allocation28 + $0x178] sm:$0xff]
    %v4553 = vld [vmem:[#allocation28 + $0x180] sm:$0xff]
    %v4554 = vld [vmem:[#allocation28 + $0x188] sm:$0xff]
    %v4555 = vld [vmem:[#allocation28 + $0x190] sm:$0xff]
    %v4556 = vld [vmem:[#allocation28 + $0x198] sm:$0xff]
    %v4557 = vld [vmem:[#allocation28 + $0x1a0] sm:$0xff]
    %v4558 = vld [vmem:[#allocation28 + $0x1a8] sm:$0xff]
    %v4559 = vld [vmem:[#allocation28 + $0x1b0] sm:$0xff]
    %v4560 = vld [vmem:[#allocation28 + $0x1b8] sm:$0xff]
    %v4561 = vld [vmem:[#allocation28 + $0x1c0] sm:$0xff]
    %v4562 = vld [vmem:[#allocation28 + $0x1c8] sm:$0xff]
    %v4563 = vld [vmem:[#allocation28 + $0x1d0] sm:$0xff]
    %v4564 = vld [vmem:[#allocation28 + $0x1d8] sm:$0xff]
    %v4565 = vld [vmem:[#allocation28 + $0x1e0] sm:$0xff]
    %v4566 = vld [vmem:[#allocation28 + $0x1e8] sm:$0xff]
    %v4567 = vld [vmem:[#allocation28 + $0x1f0] sm:$0xff]
    %v4568 = vld [vmem:[#allocation28 + $0x1f8] sm:$0xff]
    %v4569 = vld [vmem:[%s65] sm:$0x3]
    %v4571 = vlaneseq
    %v4572 = vshrl.u32 %v4571, 7
    %v4573 = vsub.s32 0, %v4572
    %v4574 = vrot.slane %v4569, %v4573
    %v4575 = vlaneseq
    %v4576 = vshrl.u32 %v4575, 7
    %v4577 = vsub.s32 1, %v4576
    %v4578 = vrot.slane %v4569, %v4577
    %4581 = vmatprep.subr.mxu0 %v4536
    %4582 = vmatpush1.msra.mxu0 %v4535
    %4583 = vmatprep.subr.mxu0 %v4534
    %4584 = vmatpush1.msra.mxu0 %v4533
    %4585 = vmatprep.subr.mxu0 %v4532
    %4586 = vmatpush1.msra.mxu0 %v4531
    %4587 = vmatprep.subr.mxu0 %v4530
    %4588 = vmatpush1.msra.mxu0 %v4529
    %4589 = vmatprep.subr.mxu0 %v4528
    %4590 = vmatpush1.msra.mxu0 %v4527
    %4591 = vmatprep.subr.mxu0 %v4526
    %4592 = vmatpush1.msra.mxu0 %v4525
    %4593 = vmatprep.subr.mxu0 %v4524
    %4594 = vmatpush1.msra.mxu0 %v4523
    %4595 = vmatprep.subr.mxu0 %v4522
    %4596 = vmatpush1.msra.mxu0 %v4521
    %4597 = vmatprep.subr.mxu0 %v4520
    %4598 = vmatpush1.msra.mxu0 %v4519
    %4599 = vmatprep.subr.mxu0 %v4518
    %4600 = vmatpush1.msra.mxu0 %v4517
    %4601 = vmatprep.subr.mxu0 %v4516
    %4602 = vmatpush1.msra.mxu0 %v4515
    %4603 = vmatprep.subr.mxu0 %v4514
    %4604 = vmatpush1.msra.mxu0 %v4513
    %4605 = vmatprep.subr.mxu0 %v4512
    %4606 = vmatpush1.msra.mxu0 %v4511
    %4607 = vmatprep.subr.mxu0 %v4510
    %4608 = vmatpush1.msra.mxu0 %v4509
    %4609 = vmatprep.subr.mxu0 %v4508
    %4610 = vmatpush1.msra.mxu0 %v4507
    %4611 = vmatprep.subr.mxu0 %v4506
    %4612 = vmatpush1.msra.mxu0 %v4505
    %4613 = vmatprep.subr.mxu0 %v4568
    %4614 = vmatpush2.msra.mxu0 %v4567
    %4615 = vmatprep.subr.mxu0 %v4566
    %4616 = vmatpush2.msra.mxu0 %v4565
    %4617 = vmatprep.subr.mxu0 %v4564
    %4618 = vmatpush2.msra.mxu0 %v4563
    %4619 = vmatprep.subr.mxu0 %v4562
    %4620 = vmatpush2.msra.mxu0 %v4561
    %4621 = vmatprep.subr.mxu0 %v4560
    %4622 = vmatpush2.msra.mxu0 %v4559
    %4623 = vmatprep.subr.mxu0 %v4558
    %4624 = vmatpush2.msra.mxu0 %v4557
    %4625 = vmatprep.subr.mxu0 %v4556
    %4626 = vmatpush2.msra.mxu0 %v4555
    %4627 = vmatprep.subr.mxu0 %v4554
    %4628 = vmatpush2.msra.mxu0 %v4553
    %4629 = vmatprep.subr.mxu0 %v4552
    %4630 = vmatpush2.msra.mxu0 %v4551
    %4631 = vmatprep.subr.mxu0 %v4550
    %4632 = vmatpush2.msra.mxu0 %v4549
    %4633 = vmatprep.subr.mxu0 %v4548
    %4634 = vmatpush2.msra.mxu0 %v4547
    %4635 = vmatprep.subr.mxu0 %v4546
    %4636 = vmatpush2.msra.mxu0 %v4545
    %4637 = vmatprep.subr.mxu0 %v4544
    %4638 = vmatpush2.msra.mxu0 %v4543
    %4639 = vmatprep.subr.mxu0 %v4542
    %4640 = vmatpush2.msra.mxu0 %v4541
    %4641 = vmatprep.subr.mxu0 %v4540
    %4642 = vmatpush2.msra.mxu0 %v4539
    %4643 = vmatprep.subr.mxu0 %v4538
    %4644 = vmatpush2.msra.mxu0 %v4537
    %4645 = vmatprep.mubr.f32.mxu0 %v371
    %4646 = vmatmul.mubr.f32.gmra.mxu0 %v370
    %v4647 = vpop.f32.mrf.mxu0
    %v4648 = vadd.f32 %v4574, %v4647
    %v4649 = vpop.f32.mrf.mxu0
    %v4650 = vadd.f32 %v4578, %v4649
    %4651 = vmatprep.mubr.f32.mxu0 %v373
    %4652 = vmatmul.mubr.f32.gmra.mxu0 %v372
    %v4653 = vpop.f32.mrf.mxu0
    %v4654 = vadd.f32 %v4574, %v4653
    %v4655 = vpop.f32.mrf.mxu0
    %v4656 = vadd.f32 %v4578, %v4655
    %4657 = vmatprep.mubr.f32.mxu0 %v375
    %4658 = vmatmul.mubr.f32.gmra.mxu0 %v374
    %v4659 = vpop.f32.mrf.mxu0
    %v4660 = vadd.f32 %v4574, %v4659
    %v4661 = vpop.f32.mrf.mxu0
    %v4662 = vadd.f32 %v4578, %v4661
    %4663 = vmatprep.mubr.f32.mxu0 %v377
    %4664 = vmatmul.mubr.f32.gmra.mxu0 %v376
    %v4665 = vpop.f32.mrf.mxu0
    %v4666 = vadd.f32 %v4574, %v4665
    %v4667 = vpop.f32.mrf.mxu0
    %v4668 = vadd.f32 %v4578, %v4667
    %4669 = vdwg.mxu0
    %v4670 = vadd.f32 %v4497, %v4648
    %v4671 = vadd.f32 %v4498, %v4650
    %v4672 = vadd.f32 %v4499, %v4654
    %v4673 = vadd.f32 %v4500, %v4656
    %v4674 = vadd.f32 %v4501, %v4660
    %v4675 = vadd.f32 %v4502, %v4662
    %v4676 = vadd.f32 %v4503, %v4666
    %v4677 = vadd.f32 %v4504, %v4668
    %v4678 = vmax.f32 %v4670, 0.0
    %v4679 = vmax.f32 %v4671, 0.0
    %v4680 = vmax.f32 %v4672, 0.0
    %v4681 = vmax.f32 %v4673, 0.0
    %v4682 = vmax.f32 %v4674, 0.0
    %v4683 = vmax.f32 %v4675, 0.0
    %v4684 = vmax.f32 %v4676, 0.0
    %v4685 = vmax.f32 %v4677, 0.0
    %4686 = vst [vmem:[#allocation29] sm:$0xff] %v4678
    %4687 = vst [vmem:[#allocation29 + $0x8] sm:$0xff] %v4679
    %4688 = vst [vmem:[#allocation29 + $0x10] sm:$0xff] %v4680
    %4689 = vst [vmem:[#allocation29 + $0x18] sm:$0xff] %v4681
    %4690 = vst [vmem:[#allocation29 + $0x20] sm:$0xff] %v4682
    %4691 = vst [vmem:[#allocation29 + $0x28] sm:$0xff] %v4683
    %4692 = vst [vmem:[#allocation29 + $0x30] sm:$0xff] %v4684
    %4693 = vst [vmem:[#allocation29 + $0x38] sm:$0xff] %v4685
    // Predicated region
    $region202: #{tpu_custom_call.1} parent=1 // pred_check
      _
    $region203: #{tpu_custom_call.1} parent=1 // pred_check_branch
      %4695 = sbr.rel (0) target = $region205
    $region204: #{tpu_custom_call.1} parent=1 // pred_region
      %s4697 = ssub.s32 1024, 1024
      %4698 = vsyncadd [#allocation4], %s4697
      %s4699 = sshll.u32 [#allocation29], 4
      %s4700 = int_to_ptr.vmem [resolvable:$true] %s4699
      %4705 = dma.vmem_to_hbm [thread:$0]  %s4700, 1024, %s67, [#allocation4], 256, 256, 16
    $region205: #{tpu_custom_call.1} parent=1 // pred_fallthru
      _
    // Predicated region
    $region206: #{tpu_custom_call.1} parent=1 // pred_check
      _
    $region207: #{tpu_custom_call.1} parent=1 // pred_check_branch
      %4707 = sbr.rel (0) target = $region209
    $region208: #{tpu_custom_call.1} parent=1 // pred_region
      %4708 = dma.done [#allocation4], 1024
    $region209: #{tpu_custom_call.1} parent=1 // pred_fallthru
      _
    %4709 = vsyncpa [#allocation3], 1
    %4710 = vsyncpa [#allocation6], 1
    %4711 = vsyncpa [#allocation9], 1
    %4712 = vsyncpa [#allocation12], 1
    %4713 = vsyncpa [#allocation15], 1
    %4714 = vsyncpa [#allocation18], 1
    %4715 = vsyncpa [#allocation21], 1
    %4716 = vsyncpa [#allocation24], 1
    %4717 = vsyncpa [#allocation27], 1
    %4718 = vsyncpa [#allocation4], 1

</llo_original>
